<compile_context>
chip_gen: v7x
topology: tpu7x:2x2x1
jax: 0.10.0
libtpu: 0.0.40
codegen_flags: <defaults>
</compile_context>

<pallas_src>
import functools

import jax
import jax.numpy as jnp
import numpy as np
from jax.experimental import pallas as pl
from jax.experimental.pallas import tpu as pltpu


def _round_up(x, m):
    return ((x + m - 1) // m) * m


def _nbytes(shape, dtype):
    return int(np.prod(shape)) * jnp.dtype(dtype).itemsize


_STATIC_UNROLL_MAX_T = 16
_FORI_UNROLL = 4


def _make_decoder_kernel(T, Bp, Hp):
    """Kernel closure over the static (padded) problem dimensions."""

    def kernel(x_ref,      # (T*Bp, Ep)   time-major, flattened, padded
               h0_ref,     # (Bp, Hp)     f32
               c0_ref,     # (Bp, Hp)     f32
               wih_ref,    # (Ep, 4*Hp)   W_ih^T, per-gate padded
               whh_ref,    # (Hp, 4*Hp)   W_hh^T, per-gate padded
               b_ref,      # (1, 4*Hp)    b_ih + b_hh, f32
               wfc_ref,    # (Hp, Op)     W_fc^T
               bfc_ref,    # (1, Op)      b_fc, f32
               pred_ref,   # (T*Bp, Op)   out: per-step fc_out
               hout_ref,   # (Bp, Hp)     out: final hidden
               cout_ref,   # (Bp, Hp)     out: final cell
               xbuf_sc,    # VMEM (2, Bp, 4*Hp) f32 : 2-slot x-projection buf
               hseq_sc):   # VMEM (T*Bp, Hp)         : per-step hidden states
        f32 = jnp.float32
        bias = b_ref[...]                               # (1, 4Hp) f32, hoisted

        def xproj(rows, wih):
            # Non-recurrent input projection for one timestep row-block.
            return (jnp.dot(x_ref[rows, :], wih,
                            preferred_element_type=f32) + bias)

        def lstm_cell(gates, c):
            # sigmoid(x) = 0.5*(1 + tanh(0.5*x)); keeps the serial path on the
            # EUP tanh unit only (no exp + reciprocal).
            sig = lambda v: 0.5 * (1.0 + jnp.tanh(0.5 * v))
            i_g = sig(gates[:, 0 * Hp:1 * Hp])
            f_g = sig(gates[:, 1 * Hp:2 * Hp])
            g_g = jnp.tanh(gates[:, 2 * Hp:3 * Hp])
            o_g = sig(gates[:, 3 * Hp:4 * Hp])
            c_new = f_g * c + i_g * g_g
            h_new = o_g * jnp.tanh(c_new)
            return h_new, c_new

        h = h0_ref[...]
        c = c0_ref[...]

        if T <= _STATIC_UNROLL_MAX_T:
            # ---- small T: fully unrolled, weights hoisted (stationary) -----
            wih = wih_ref[...]
            whh = whh_ref[...]
            mmdt = whh.dtype
            xbuf_sc[0] = xproj(pl.ds(0, Bp), wih)        # prime slot 0 (t=0)
            for t in range(T):
                slot = t % 2
                gates = xbuf_sc[slot] + jnp.dot(
                    h.astype(mmdt), whh, preferred_element_type=f32)
                if t + 1 < T:                            # x-proj one step ahead
                    xbuf_sc[1 - slot] = xproj(pl.ds((t + 1) * Bp, Bp), wih)
                h, c = lstm_cell(gates, c)
                hseq_sc[pl.ds(t * Bp, Bp), :] = h.astype(hseq_sc.dtype)
        else:
            # ---- large T: fori_loop keeps live ranges / code size bounded.
            # Weight refs are read inside the body on purpose: forcing 64+
            # vregs of W_hh live across a carried loop would only spill.
            xbuf_sc[0] = xproj(pl.ds(0, Bp), wih_ref[...])

            def body(t, carry):
                h, c = carry
                slot = t % 2
                gates = xbuf_sc[slot] + jnp.dot(
                    h.astype(whh_ref.dtype), whh_ref[...],
                    preferred_element_type=f32)

                @pl.when(t + 1 < T)
                def _():
                    rows_next = pl.ds(pl.multiple_of((t + 1) * Bp, Bp), Bp)
                    xbuf_sc[1 - slot] = xproj(rows_next, wih_ref[...])

                h, c = lstm_cell(gates, c)
                rows = pl.ds(pl.multiple_of(t * Bp, Bp), Bp)
                hseq_sc[rows, :] = h.astype(hseq_sc.dtype)
                return h, c

            h, c = jax.lax.fori_loop(0, T, body, (h, c),
                                     unroll=min(T, _FORI_UNROLL))

        # Final LSTM state, written exactly once.
        hout_ref[...] = h
        cout_ref[...] = c

        # Hoisted fc_out: one lane-dense matmul + bias over all timesteps.
        pred_ref[...] = (
            jnp.dot(hseq_sc[...], wfc_ref[...], preferred_element_type=f32)
            + bfc_ref[...]).astype(pred_ref.dtype)

    return kernel


def pad_params(params, emb_dim, hidden_dim, output_dim, *, use_bf16=False):
    """Pad / transpose weights ONCE to the (8, 128) TPU grain.

    Done at parameter-load time so the per-call forward has no weight
    pad/reshape prologue (perf review item).  `use_bf16=True` casts only the
    matmul operands (gate math stays f32) and may exceed 1e-5 tolerance.
    """
    E, H, O = emb_dim, hidden_dim, output_dim
    Ep, Hp, Op = _round_up(E, 128), _round_up(H, 128), _round_up(O, 128)
    f32 = jnp.float32
    mm_dtype = jnp.bfloat16 if use_bf16 else f32

    def pad_gate_cols(w):                 # (r, 4H) -> (r, 4Hp), per-gate aligned
        r = w.shape[0]
        w4 = w.reshape(r, 4, H)
        return jnp.pad(w4, ((0, 0), (0, 0), (0, Hp - H))).reshape(r, 4 * Hp)

    w_ih = jnp.pad(pad_gate_cols(params["w_ih_t"].astype(f32)),
                   ((0, Ep - E), (0, 0)))                    # (Ep, 4Hp)
    w_hh = jnp.pad(pad_gate_cols(params["w_hh_t"].astype(f32)),
                   ((0, Hp - H), (0, 0)))                    # (Hp, 4Hp)
    b_g = pad_gate_cols(params["b_gates"].astype(f32))       # (1, 4Hp)
    w_fc = jnp.pad(params["w_fc_t"].astype(f32),
                   ((0, Hp - H), (0, Op - O)))               # (Hp, Op)
    b_fc = jnp.pad(params["b_fc"].astype(f32), ((0, 0), (0, Op - O)))
    return {
        "w_ih": w_ih.astype(mm_dtype),
        "w_hh": w_hh.astype(mm_dtype),
        "b_gates": b_g,                   # bias + gate math always f32
        "w_fc": w_fc.astype(mm_dtype),
        "b_fc": b_fc,
    }


def decoder_forward(tgt, hidden, cell, padded, *, out_dim):
    """tgt: (B, T, E)  hidden/cell: (1, B, H)  -> (prediction, hidden, cell)."""
    B, T, E = tgt.shape
    H = hidden.shape[-1]
    f32 = jnp.float32

    w_ih, w_hh = padded["w_ih"], padded["w_hh"]
    b_g, w_fc, b_fc = padded["b_gates"], padded["w_fc"], padded["b_fc"]
    Ep = w_ih.shape[0]
    Hp = w_hh.shape[0]
    Op = w_fc.shape[1]
    mm_dtype = w_hh.dtype
    Bp = _round_up(max(B, 1), 8)

    # Activations: pad + time-major + flatten (small fused XLA prologue).
    x_tm = jnp.transpose(tgt.astype(mm_dtype), (1, 0, 2))            # (T, B, E)
    x_tm = jnp.pad(x_tm, ((0, 0), (0, Bp - B), (0, Ep - E)))
    x2 = x_tm.reshape(T * Bp, Ep)
    # Zero padding of h0/c0 keeps padded lanes exactly zero through the
    # recurrence (padded gate cols -> f=0.5 acting on c_pad=0).
    h0 = jnp.pad(hidden[0].astype(f32), ((0, Bp - B), (0, Hp - H)))
    c0 = jnp.pad(cell[0].astype(f32), ((0, Bp - B), (0, Hp - H)))

    kernel = _make_decoder_kernel(T=T, Bp=Bp, Hp=Hp)

    # Explicit VMEM budget (everything is resident; no grid pipelining).
    needed = (
        _nbytes((T * Bp, Ep), mm_dtype)            # x2
        + 2 * _nbytes((Bp, Hp), f32)               # h0, c0
        + _nbytes((Ep, 4 * Hp), mm_dtype)          # W_ih
        + _nbytes((Hp, 4 * Hp), mm_dtype)          # W_hh
        + _nbytes((1, 4 * Hp), f32)                # bias
        + _nbytes((Hp, Op), mm_dtype)              # W_fc
        + _nbytes((1, Op), f32)                    # b_fc
        + _nbytes((T * Bp, Op), f32)               # pred out
        + 2 * _nbytes((Bp, Hp), f32)               # h/c out
        + _nbytes((2, Bp, 4 * Hp), f32)            # x-projection 2-slot buffer
        + _nbytes((T * Bp, Hp), mm_dtype))         # hidden-state sequence
    vmem_limit = int(min(max(2 * needed, 16 << 20), 64 << 20))

    vmem = lambda: pl.BlockSpec(memory_space=pltpu.MemorySpace.VMEM)

    pred2, h_out, c_out = pl.pallas_call(
        kernel,
        out_shape=(
            jax.ShapeDtypeStruct((T * Bp, Op), f32),
            jax.ShapeDtypeStruct((Bp, Hp), f32),
            jax.ShapeDtypeStruct((Bp, Hp), f32),
        ),
        in_specs=[vmem() for _ in range(8)],
        out_specs=(vmem(), vmem(), vmem()),
        scratch_shapes=[
            pltpu.VMEM((2, Bp, 4 * Hp), f32),      # x-proj, one step ahead
            pltpu.VMEM((T * Bp, Hp), mm_dtype),    # per-step hidden states
        ],
        compiler_params=pltpu.CompilerParams(vmem_limit_bytes=vmem_limit),
    )(x2, h0, c0, w_ih, w_hh, b_g, w_fc, b_fc)

    # Un-pad / restore batch-first layout (tiny epilogue).
    pred = pred2.reshape(T, Bp, Op)[:, :B, :out_dim]                 # (T, B, O)
    prediction = jnp.transpose(pred, (1, 0, 2))                      # (B, T, O)
    # PyTorch: fc_out(output.squeeze(0)) — squeeze(0) only drops dim 0 if B==1.
    if prediction.shape[0] == 1:
        prediction = prediction[0]
    hidden_out = h_out[:B, :H][None]                                 # (1, B, H)
    cell_out = c_out[:B, :H][None]                                   # (1, B, H)
    return prediction, hidden_out, cell_out


def make_params(key, emb_dim, hidden_dim, output_dim):
    """Deterministic synthetic parameters (PyTorch-style uniform init)."""
    ks = jax.random.split(key, 7)
    bound = 1.0 / np.sqrt(hidden_dim)
    u = lambda k, shape: jax.random.uniform(k, shape, jnp.float32, -bound, bound)
    w_ih = u(ks[0], (4 * hidden_dim, emb_dim))     # PyTorch weight_ih_l0
    w_hh = u(ks[1], (4 * hidden_dim, hidden_dim))  # PyTorch weight_hh_l0
    b_ih = u(ks[2], (4 * hidden_dim,))
    b_hh = u(ks[3], (4 * hidden_dim,))
    w_fc = u(ks[4], (output_dim, hidden_dim))      # nn.Linear weight
    b_fc = u(ks[5], (output_dim,))
    return {
        "w_ih_t": w_ih.T,                                  # (E, 4H)
        "w_hh_t": w_hh.T,                                  # (H, 4H)
        "b_gates": (b_ih + b_hh).reshape(1, 4 * hidden_dim),
        "w_fc_t": w_fc.T,                                  # (H, O)
        "b_fc": b_fc.reshape(1, output_dim),
    }


def _reference(tgt, hidden, cell, params):
    """Pure-JAX reference (same math as torch.nn.LSTM + Linear, eval mode)."""
    H = hidden.shape[-1]

    def step(carry, x_t):
        h, c = carry
        gates = x_t @ params["w_ih_t"] + h @ params["w_hh_t"] + params["b_gates"]
        i = jax.nn.sigmoid(gates[:, :H])
        f = jax.nn.sigmoid(gates[:, H:2 * H])
        g = jnp.tanh(gates[:, 2 * H:3 * H])
        o = jax.nn.sigmoid(gates[:, 3 * H:])
        c = f * c + i * g
        h = o * jnp.tanh(c)
        return (h, c), h

    (h, c), ys = jax.lax.scan(step, (hidden[0], cell[0]),
                              jnp.transpose(tgt, (1, 0, 2)))
    out = jnp.transpose(ys, (1, 0, 2))
    pred = out @ params["w_fc_t"] + params["b_fc"]
    if pred.shape[0] == 1:
        pred = pred[0]
    return pred, h[None], c[None]


if __name__ == "__main__":
    # Small, forward-consistent shapes.
    B, T = 2, 8
    emb_dim, hidden_dim, output_dim = 32, 32, 16

    key = jax.random.PRNGKey(0)
    k_tgt, k_h, k_c, k_p = jax.random.split(key, 4)

    tgt = jax.random.normal(k_tgt, (B, T, emb_dim), jnp.float32)
    hidden = jax.random.normal(k_h, (1, B, hidden_dim), jnp.float32)
    cell = jax.random.normal(k_c, (1, B, hidden_dim), jnp.float32)

    params = make_params(k_p, emb_dim, hidden_dim, output_dim)
    # Weights are padded/transposed ONCE here (not per forward call).
    padded = pad_params(params, emb_dim, hidden_dim, output_dim, use_bf16=False)

    fwd = jax.jit(functools.partial(decoder_forward, out_dim=output_dim))
    pred, h_out, c_out = fwd(tgt, hidden, cell, padded)
    jax.block_until_ready((pred, h_out, c_out))

    # Sanity-check against a pure-JAX reference.
    pred_r, h_r, c_r = _reference(tgt, hidden, cell, params)
    np.testing.assert_allclose(np.asarray(pred), np.asarray(pred_r),
                               rtol=1e-5, atol=1e-5)
    np.testing.assert_allclose(np.asarray(h_out), np.asarray(h_r),
                               rtol=1e-5, atol=1e-5)
    np.testing.assert_allclose(np.asarray(c_out), np.asarray(c_r),
                               rtol=1e-5, atol=1e-5)

    print("KERNEL_OK")
</pallas_src>

<mosaic_0001>
module attributes {stable_mosaic.version = 11 : i64} {
  func.func @kernel(%arg0: memref<64x128xf32, #tpu.memory_space<vmem>>, %arg1: memref<8x128xf32, #tpu.memory_space<vmem>>, %arg2: memref<8x128xf32, #tpu.memory_space<vmem>>, %arg3: memref<128x512xf32, #tpu.memory_space<vmem>>, %arg4: memref<128x512xf32, #tpu.memory_space<vmem>>, %arg5: memref<1x512xf32, #tpu.memory_space<vmem>>, %arg6: memref<128x128xf32, #tpu.memory_space<vmem>>, %arg7: memref<1x128xf32, #tpu.memory_space<vmem>>, %arg8: memref<64x128xf32, #tpu.memory_space<vmem>>, %arg9: memref<8x128xf32, #tpu.memory_space<vmem>>, %arg10: memref<8x128xf32, #tpu.memory_space<vmem>>, %arg11: memref<2x8x512xf32, #tpu.memory_space<vmem>>, %arg12: memref<64x128xf32, #tpu.memory_space<vmem>>) attributes {dimension_semantics = [], scalar_prefetch = 0 : i64, scratch_operands = 2 : i64, tpu.core_type = #tpu.core_type<tc>} {
    %c0 = arith.constant 0 : index
    %c0_0 = arith.constant 0 : index
    %0 = vector.load %arg5[%c0, %c0_0] : memref<1x512xf32, #tpu.memory_space<vmem>>, vector<1x512xf32>
    %c0_1 = arith.constant 0 : index
    %c0_2 = arith.constant 0 : index
    %1 = vector.load %arg1[%c0_1, %c0_2] : memref<8x128xf32, #tpu.memory_space<vmem>>, vector<8x128xf32>
    %c0_3 = arith.constant 0 : index
    %c0_4 = arith.constant 0 : index
    %2 = vector.load %arg2[%c0_3, %c0_4] : memref<8x128xf32, #tpu.memory_space<vmem>>, vector<8x128xf32>
    %c0_5 = arith.constant 0 : index
    %c0_6 = arith.constant 0 : index
    %3 = vector.load %arg3[%c0_5, %c0_6] : memref<128x512xf32, #tpu.memory_space<vmem>>, vector<128x512xf32>
    %c0_7 = arith.constant 0 : index
    %c0_8 = arith.constant 0 : index
    %4 = vector.load %arg4[%c0_7, %c0_8] : memref<128x512xf32, #tpu.memory_space<vmem>>, vector<128x512xf32>
    %c0_9 = arith.constant 0 : index
    %c0_10 = arith.constant 0 : index
    %5 = vector.load %arg0[%c0_9, %c0_10] : memref<64x128xf32, #tpu.memory_space<vmem>>, vector<8x128xf32>
    %cst = arith.constant dense<0.000000e+00> : vector<8x512xf32>
    %6 = tpu.matmul %5, %3, %cst {dimension_numbers = #tpu.dot_dimension_numbers<[1], [0], [0], [1], [0, 0, 1, 1], [], []>} : vector<8x128xf32>, vector<128x512xf32>, vector<8x512xf32> -> vector<8x512xf32>
    %7 = vector.broadcast %0 : vector<1x512xf32> to vector<8x512xf32>
    %8 = arith.addf %6, %7 : vector<8x512xf32>
    %c0_11 = arith.constant 0 : index
    %c0_12 = arith.constant 0 : index
    %c0_13 = arith.constant 0 : index
    %9 = vector.load %arg11[%c0_11, %c0_12, %c0_13] : memref<2x8x512xf32, #tpu.memory_space<vmem>>, vector<1x8x512xf32>
    %10 = vector.shape_cast %9 : vector<1x8x512xf32> to vector<8x512xf32>
    %11 = vector.shape_cast %8 : vector<8x512xf32> to vector<1x8x512xf32>
    tpu.vector_store %arg11[%c0_11, %c0_12, %c0_13], %11 {strides = array<i32>} : memref<2x8x512xf32, #tpu.memory_space<vmem>>, vector<1x8x512xf32>,
    %c0_14 = arith.constant 0 : index
    %c0_15 = arith.constant 0 : index
    %c0_16 = arith.constant 0 : index
    %12 = vector.load %arg11[%c0_14, %c0_15, %c0_16] : memref<2x8x512xf32, #tpu.memory_space<vmem>>, vector<1x8x512xf32>
    %13 = vector.shape_cast %12 : vector<1x8x512xf32> to vector<8x512xf32>
    %cst_17 = arith.constant dense<0.000000e+00> : vector<8x512xf32>
    %14 = tpu.matmul %1, %4, %cst_17 {dimension_numbers = #tpu.dot_dimension_numbers<[1], [0], [0], [1], [0, 0, 1, 1], [], []>} : vector<8x128xf32>, vector<128x512xf32>, vector<8x512xf32> -> vector<8x512xf32>
    %15 = arith.addf %13, %14 : vector<8x512xf32>
    %c8 = arith.constant 8 : index
    %c0_18 = arith.constant 0 : index
    %16 = vector.load %arg0[%c8, %c0_18] : memref<64x128xf32, #tpu.memory_space<vmem>>, vector<8x128xf32>
    %cst_19 = arith.constant dense<0.000000e+00> : vector<8x512xf32>
    %17 = tpu.matmul %16, %3, %cst_19 {dimension_numbers = #tpu.dot_dimension_numbers<[1], [0], [0], [1], [0, 0, 1, 1], [], []>} : vector<8x128xf32>, vector<128x512xf32>, vector<8x512xf32> -> vector<8x512xf32>
    %18 = vector.broadcast %0 : vector<1x512xf32> to vector<8x512xf32>
    %19 = arith.addf %17, %18 : vector<8x512xf32>
    %c1 = arith.constant 1 : index
    %c0_20 = arith.constant 0 : index
    %c0_21 = arith.constant 0 : index
    %20 = vector.load %arg11[%c1, %c0_20, %c0_21] : memref<2x8x512xf32, #tpu.memory_space<vmem>>, vector<1x8x512xf32>
    %21 = vector.shape_cast %20 : vector<1x8x512xf32> to vector<8x512xf32>
    %22 = vector.shape_cast %19 : vector<8x512xf32> to vector<1x8x512xf32>
    tpu.vector_store %arg11[%c1, %c0_20, %c0_21], %22 {strides = array<i32>} : memref<2x8x512xf32, #tpu.memory_space<vmem>>, vector<1x8x512xf32>,
    %23 = vector.extract_strided_slice %15 {offsets = [0, 0], sizes = [8, 128], strides = [1, 1]} : vector<8x512xf32> to vector<8x128xf32>
    %cst_22 = arith.constant 5.000000e-01 : f32
    %24 = vector.broadcast %cst_22 : f32 to vector<8x128xf32>
    %25 = arith.mulf %24, %23 : vector<8x128xf32>
    %26 = math.tanh %25 : vector<8x128xf32>
    %cst_23 = arith.constant 1.000000e+00 : f32
    %27 = vector.broadcast %cst_23 : f32 to vector<8x128xf32>
    %28 = arith.addf %27, %26 : vector<8x128xf32>
    %cst_24 = arith.constant 5.000000e-01 : f32
    %29 = vector.broadcast %cst_24 : f32 to vector<8x128xf32>
    %30 = arith.mulf %29, %28 : vector<8x128xf32>
    %31 = vector.extract_strided_slice %15 {offsets = [0, 128], sizes = [8, 128], strides = [1, 1]} : vector<8x512xf32> to vector<8x128xf32>
    %cst_25 = arith.constant 5.000000e-01 : f32
    %32 = vector.broadcast %cst_25 : f32 to vector<8x128xf32>
    %33 = arith.mulf %32, %31 : vector<8x128xf32>
    %34 = math.tanh %33 : vector<8x128xf32>
    %cst_26 = arith.constant 1.000000e+00 : f32
    %35 = vector.broadcast %cst_26 : f32 to vector<8x128xf32>
    %36 = arith.addf %35, %34 : vector<8x128xf32>
    %cst_27 = arith.constant 5.000000e-01 : f32
    %37 = vector.broadcast %cst_27 : f32 to vector<8x128xf32>
    %38 = arith.mulf %37, %36 : vector<8x128xf32>
    %39 = vector.extract_strided_slice %15 {offsets = [0, 256], sizes = [8, 128], strides = [1, 1]} : vector<8x512xf32> to vector<8x128xf32>
    %40 = math.tanh %39 : vector<8x128xf32>
    %41 = vector.extract_strided_slice %15 {offsets = [0, 384], sizes = [8, 128], strides = [1, 1]} : vector<8x512xf32> to vector<8x128xf32>
    %cst_28 = arith.constant 5.000000e-01 : f32
    %42 = vector.broadcast %cst_28 : f32 to vector<8x128xf32>
    %43 = arith.mulf %42, %41 : vector<8x128xf32>
    %44 = math.tanh %43 : vector<8x128xf32>
    %cst_29 = arith.constant 1.000000e+00 : f32
    %45 = vector.broadcast %cst_29 : f32 to vector<8x128xf32>
    %46 = arith.addf %45, %44 : vector<8x128xf32>
    %cst_30 = arith.constant 5.000000e-01 : f32
    %47 = vector.broadcast %cst_30 : f32 to vector<8x128xf32>
    %48 = arith.mulf %47, %46 : vector<8x128xf32>
    %49 = arith.mulf %38, %2 : vector<8x128xf32>
    %50 = arith.mulf %30, %40 : vector<8x128xf32>
    %51 = arith.addf %49, %50 : vector<8x128xf32>
    %52 = math.tanh %51 : vector<8x128xf32>
    %53 = arith.mulf %48, %52 : vector<8x128xf32>
    %c0_31 = arith.constant 0 : index
    %c0_32 = arith.constant 0 : index
    %54 = vector.load %arg12[%c0_31, %c0_32] : memref<64x128xf32, #tpu.memory_space<vmem>>, vector<8x128xf32>
    tpu.vector_store %arg12[%c0_31, %c0_32], %53 {strides = array<i32>} : memref<64x128xf32, #tpu.memory_space<vmem>>, vector<8x128xf32>,
    %c1_33 = arith.constant 1 : index
    %c0_34 = arith.constant 0 : index
    %c0_35 = arith.constant 0 : index
    %55 = vector.load %arg11[%c1_33, %c0_34, %c0_35] : memref<2x8x512xf32, #tpu.memory_space<vmem>>, vector<1x8x512xf32>
    %56 = vector.shape_cast %55 : vector<1x8x512xf32> to vector<8x512xf32>
    %cst_36 = arith.constant dense<0.000000e+00> : vector<8x512xf32>
    %57 = tpu.matmul %53, %4, %cst_36 {dimension_numbers = #tpu.dot_dimension_numbers<[1], [0], [0], [1], [0, 0, 1, 1], [], []>} : vector<8x128xf32>, vector<128x512xf32>, vector<8x512xf32> -> vector<8x512xf32>
    %58 = arith.addf %56, %57 : vector<8x512xf32>
    %c16 = arith.constant 16 : index
    %c0_37 = arith.constant 0 : index
    %59 = vector.load %arg0[%c16, %c0_37] : memref<64x128xf32, #tpu.memory_space<vmem>>, vector<8x128xf32>
    %cst_38 = arith.constant dense<0.000000e+00> : vector<8x512xf32>
    %60 = tpu.matmul %59, %3, %cst_38 {dimension_numbers = #tpu.dot_dimension_numbers<[1], [0], [0], [1], [0, 0, 1, 1], [], []>} : vector<8x128xf32>, vector<128x512xf32>, vector<8x512xf32> -> vector<8x512xf32>
    %61 = vector.broadcast %0 : vector<1x512xf32> to vector<8x512xf32>
    %62 = arith.addf %60, %61 : vector<8x512xf32>
    %c0_39 = arith.constant 0 : index
    %c0_40 = arith.constant 0 : index
    %c0_41 = arith.constant 0 : index
    %63 = vector.load %arg11[%c0_39, %c0_40, %c0_41] : memref<2x8x512xf32, #tpu.memory_space<vmem>>, vector<1x8x512xf32>
    %64 = vector.shape_cast %63 : vector<1x8x512xf32> to vector<8x512xf32>
    %65 = vector.shape_cast %62 : vector<8x512xf32> to vector<1x8x512xf32>
    tpu.vector_store %arg11[%c0_39, %c0_40, %c0_41], %65 {strides = array<i32>} : memref<2x8x512xf32, #tpu.memory_space<vmem>>, vector<1x8x512xf32>,
    %66 = vector.extract_strided_slice %58 {offsets = [0, 0], sizes = [8, 128], strides = [1, 1]} : vector<8x512xf32> to vector<8x128xf32>
    %cst_42 = arith.constant 5.000000e-01 : f32
    %67 = vector.broadcast %cst_42 : f32 to vector<8x128xf32>
    %68 = arith.mulf %67, %66 : vector<8x128xf32>
    %69 = math.tanh %68 : vector<8x128xf32>
    %cst_43 = arith.constant 1.000000e+00 : f32
    %70 = vector.broadcast %cst_43 : f32 to vector<8x128xf32>
    %71 = arith.addf %70, %69 : vector<8x128xf32>
    %cst_44 = arith.constant 5.000000e-01 : f32
    %72 = vector.broadcast %cst_44 : f32 to vector<8x128xf32>
    %73 = arith.mulf %72, %71 : vector<8x128xf32>
    %74 = vector.extract_strided_slice %58 {offsets = [0, 128], sizes = [8, 128], strides = [1, 1]} : vector<8x512xf32> to vector<8x128xf32>
    %cst_45 = arith.constant 5.000000e-01 : f32
    %75 = vector.broadcast %cst_45 : f32 to vector<8x128xf32>
    %76 = arith.mulf %75, %74 : vector<8x128xf32>
    %77 = math.tanh %76 : vector<8x128xf32>
    %cst_46 = arith.constant 1.000000e+00 : f32
    %78 = vector.broadcast %cst_46 : f32 to vector<8x128xf32>
    %79 = arith.addf %78, %77 : vector<8x128xf32>
    %cst_47 = arith.constant 5.000000e-01 : f32
    %80 = vector.broadcast %cst_47 : f32 to vector<8x128xf32>
    %81 = arith.mulf %80, %79 : vector<8x128xf32>
    %82 = vector.extract_strided_slice %58 {offsets = [0, 256], sizes = [8, 128], strides = [1, 1]} : vector<8x512xf32> to vector<8x128xf32>
    %83 = math.tanh %82 : vector<8x128xf32>
    %84 = vector.extract_strided_slice %58 {offsets = [0, 384], sizes = [8, 128], strides = [1, 1]} : vector<8x512xf32> to vector<8x128xf32>
    %cst_48 = arith.constant 5.000000e-01 : f32
    %85 = vector.broadcast %cst_48 : f32 to vector<8x128xf32>
    %86 = arith.mulf %85, %84 : vector<8x128xf32>
    %87 = math.tanh %86 : vector<8x128xf32>
    %cst_49 = arith.constant 1.000000e+00 : f32
    %88 = vector.broadcast %cst_49 : f32 to vector<8x128xf32>
    %89 = arith.addf %88, %87 : vector<8x128xf32>
    %cst_50 = arith.constant 5.000000e-01 : f32
    %90 = vector.broadcast %cst_50 : f32 to vector<8x128xf32>
    %91 = arith.mulf %90, %89 : vector<8x128xf32>
    %92 = arith.mulf %81, %51 : vector<8x128xf32>
    %93 = arith.mulf %73, %83 : vector<8x128xf32>
    %94 = arith.addf %92, %93 : vector<8x128xf32>
    %95 = math.tanh %94 : vector<8x128xf32>
    %96 = arith.mulf %91, %95 : vector<8x128xf32>
    %c8_51 = arith.constant 8 : index
    %c0_52 = arith.constant 0 : index
    %97 = vector.load %arg12[%c8_51, %c0_52] : memref<64x128xf32, #tpu.memory_space<vmem>>, vector<8x128xf32>
    tpu.vector_store %arg12[%c8_51, %c0_52], %96 {strides = array<i32>} : memref<64x128xf32, #tpu.memory_space<vmem>>, vector<8x128xf32>,
    %c0_53 = arith.constant 0 : index
    %c0_54 = arith.constant 0 : index
    %c0_55 = arith.constant 0 : index
    %98 = vector.load %arg11[%c0_53, %c0_54, %c0_55] : memref<2x8x512xf32, #tpu.memory_space<vmem>>, vector<1x8x512xf32>
    %99 = vector.shape_cast %98 : vector<1x8x512xf32> to vector<8x512xf32>
    %cst_56 = arith.constant dense<0.000000e+00> : vector<8x512xf32>
    %100 = tpu.matmul %96, %4, %cst_56 {dimension_numbers = #tpu.dot_dimension_numbers<[1], [0], [0], [1], [0, 0, 1, 1], [], []>} : vector<8x128xf32>, vector<128x512xf32>, vector<8x512xf32> -> vector<8x512xf32>
    %101 = arith.addf %99, %100 : vector<8x512xf32>
    %c24 = arith.constant 24 : index
    %c0_57 = arith.constant 0 : index
    %102 = vector.load %arg0[%c24, %c0_57] : memref<64x128xf32, #tpu.memory_space<vmem>>, vector<8x128xf32>
    %cst_58 = arith.constant dense<0.000000e+00> : vector<8x512xf32>
    %103 = tpu.matmul %102, %3, %cst_58 {dimension_numbers = #tpu.dot_dimension_numbers<[1], [0], [0], [1], [0, 0, 1, 1], [], []>} : vector<8x128xf32>, vector<128x512xf32>, vector<8x512xf32> -> vector<8x512xf32>
    %104 = vector.broadcast %0 : vector<1x512xf32> to vector<8x512xf32>
    %105 = arith.addf %103, %104 : vector<8x512xf32>
    %c1_59 = arith.constant 1 : index
    %c0_60 = arith.constant 0 : index
    %c0_61 = arith.constant 0 : index
    %106 = vector.load %arg11[%c1_59, %c0_60, %c0_61] : memref<2x8x512xf32, #tpu.memory_space<vmem>>, vector<1x8x512xf32>
    %107 = vector.shape_cast %106 : vector<1x8x512xf32> to vector<8x512xf32>
    %108 = vector.shape_cast %105 : vector<8x512xf32> to vector<1x8x512xf32>
    tpu.vector_store %arg11[%c1_59, %c0_60, %c0_61], %108 {strides = array<i32>} : memref<2x8x512xf32, #tpu.memory_space<vmem>>, vector<1x8x512xf32>,
    %109 = vector.extract_strided_slice %101 {offsets = [0, 0], sizes = [8, 128], strides = [1, 1]} : vector<8x512xf32> to vector<8x128xf32>
    %cst_62 = arith.constant 5.000000e-01 : f32
    %110 = vector.broadcast %cst_62 : f32 to vector<8x128xf32>
    %111 = arith.mulf %110, %109 : vector<8x128xf32>
    %112 = math.tanh %111 : vector<8x128xf32>
    %cst_63 = arith.constant 1.000000e+00 : f32
    %113 = vector.broadcast %cst_63 : f32 to vector<8x128xf32>
    %114 = arith.addf %113, %112 : vector<8x128xf32>
    %cst_64 = arith.constant 5.000000e-01 : f32
    %115 = vector.broadcast %cst_64 : f32 to vector<8x128xf32>
    %116 = arith.mulf %115, %114 : vector<8x128xf32>
    %117 = vector.extract_strided_slice %101 {offsets = [0, 128], sizes = [8, 128], strides = [1, 1]} : vector<8x512xf32> to vector<8x128xf32>
    %cst_65 = arith.constant 5.000000e-01 : f32
    %118 = vector.broadcast %cst_65 : f32 to vector<8x128xf32>
    %119 = arith.mulf %118, %117 : vector<8x128xf32>
    %120 = math.tanh %119 : vector<8x128xf32>
    %cst_66 = arith.constant 1.000000e+00 : f32
    %121 = vector.broadcast %cst_66 : f32 to vector<8x128xf32>
    %122 = arith.addf %121, %120 : vector<8x128xf32>
    %cst_67 = arith.constant 5.000000e-01 : f32
    %123 = vector.broadcast %cst_67 : f32 to vector<8x128xf32>
    %124 = arith.mulf %123, %122 : vector<8x128xf32>
    %125 = vector.extract_strided_slice %101 {offsets = [0, 256], sizes = [8, 128], strides = [1, 1]} : vector<8x512xf32> to vector<8x128xf32>
    %126 = math.tanh %125 : vector<8x128xf32>
    %127 = vector.extract_strided_slice %101 {offsets = [0, 384], sizes = [8, 128], strides = [1, 1]} : vector<8x512xf32> to vector<8x128xf32>
    %cst_68 = arith.constant 5.000000e-01 : f32
    %128 = vector.broadcast %cst_68 : f32 to vector<8x128xf32>
    %129 = arith.mulf %128, %127 : vector<8x128xf32>
    %130 = math.tanh %129 : vector<8x128xf32>
    %cst_69 = arith.constant 1.000000e+00 : f32
    %131 = vector.broadcast %cst_69 : f32 to vector<8x128xf32>
    %132 = arith.addf %131, %130 : vector<8x128xf32>
    %cst_70 = arith.constant 5.000000e-01 : f32
    %133 = vector.broadcast %cst_70 : f32 to vector<8x128xf32>
    %134 = arith.mulf %133, %132 : vector<8x128xf32>
    %135 = arith.mulf %124, %94 : vector<8x128xf32>
    %136 = arith.mulf %116, %126 : vector<8x128xf32>
    %137 = arith.addf %135, %136 : vector<8x128xf32>
    %138 = math.tanh %137 : vector<8x128xf32>
    %139 = arith.mulf %134, %138 : vector<8x128xf32>
    %c16_71 = arith.constant 16 : index
    %c0_72 = arith.constant 0 : index
    %140 = vector.load %arg12[%c16_71, %c0_72] : memref<64x128xf32, #tpu.memory_space<vmem>>, vector<8x128xf32>
    tpu.vector_store %arg12[%c16_71, %c0_72], %139 {strides = array<i32>} : memref<64x128xf32, #tpu.memory_space<vmem>>, vector<8x128xf32>,
    %c1_73 = arith.constant 1 : index
    %c0_74 = arith.constant 0 : index
    %c0_75 = arith.constant 0 : index
    %141 = vector.load %arg11[%c1_73, %c0_74, %c0_75] : memref<2x8x512xf32, #tpu.memory_space<vmem>>, vector<1x8x512xf32>
    %142 = vector.shape_cast %141 : vector<1x8x512xf32> to vector<8x512xf32>
    %cst_76 = arith.constant dense<0.000000e+00> : vector<8x512xf32>
    %143 = tpu.matmul %139, %4, %cst_76 {dimension_numbers = #tpu.dot_dimension_numbers<[1], [0], [0], [1], [0, 0, 1, 1], [], []>} : vector<8x128xf32>, vector<128x512xf32>, vector<8x512xf32> -> vector<8x512xf32>
    %144 = arith.addf %142, %143 : vector<8x512xf32>
    %c32 = arith.constant 32 : index
    %c0_77 = arith.constant 0 : index
    %145 = vector.load %arg0[%c32, %c0_77] : memref<64x128xf32, #tpu.memory_space<vmem>>, vector<8x128xf32>
    %cst_78 = arith.constant dense<0.000000e+00> : vector<8x512xf32>
    %146 = tpu.matmul %145, %3, %cst_78 {dimension_numbers = #tpu.dot_dimension_numbers<[1], [0], [0], [1], [0, 0, 1, 1], [], []>} : vector<8x128xf32>, vector<128x512xf32>, vector<8x512xf32> -> vector<8x512xf32>
    %147 = vector.broadcast %0 : vector<1x512xf32> to vector<8x512xf32>
    %148 = arith.addf %146, %147 : vector<8x512xf32>
    %c0_79 = arith.constant 0 : index
    %c0_80 = arith.constant 0 : index
    %c0_81 = arith.constant 0 : index
    %149 = vector.load %arg11[%c0_79, %c0_80, %c0_81] : memref<2x8x512xf32, #tpu.memory_space<vmem>>, vector<1x8x512xf32>
    %150 = vector.shape_cast %149 : vector<1x8x512xf32> to vector<8x512xf32>
    %151 = vector.shape_cast %148 : vector<8x512xf32> to vector<1x8x512xf32>
    tpu.vector_store %arg11[%c0_79, %c0_80, %c0_81], %151 {strides = array<i32>} : memref<2x8x512xf32, #tpu.memory_space<vmem>>, vector<1x8x512xf32>,
    %152 = vector.extract_strided_slice %144 {offsets = [0, 0], sizes = [8, 128], strides = [1, 1]} : vector<8x512xf32> to vector<8x128xf32>
    %cst_82 = arith.constant 5.000000e-01 : f32
    %153 = vector.broadcast %cst_82 : f32 to vector<8x128xf32>
    %154 = arith.mulf %153, %152 : vector<8x128xf32>
    %155 = math.tanh %154 : vector<8x128xf32>
    %cst_83 = arith.constant 1.000000e+00 : f32
    %156 = vector.broadcast %cst_83 : f32 to vector<8x128xf32>
    %157 = arith.addf %156, %155 : vector<8x128xf32>
    %cst_84 = arith.constant 5.000000e-01 : f32
    %158 = vector.broadcast %cst_84 : f32 to vector<8x128xf32>
    %159 = arith.mulf %158, %157 : vector<8x128xf32>
    %160 = vector.extract_strided_slice %144 {offsets = [0, 128], sizes = [8, 128], strides = [1, 1]} : vector<8x512xf32> to vector<8x128xf32>
    %cst_85 = arith.constant 5.000000e-01 : f32
    %161 = vector.broadcast %cst_85 : f32 to vector<8x128xf32>
    %162 = arith.mulf %161, %160 : vector<8x128xf32>
    %163 = math.tanh %162 : vector<8x128xf32>
    %cst_86 = arith.constant 1.000000e+00 : f32
    %164 = vector.broadcast %cst_86 : f32 to vector<8x128xf32>
    %165 = arith.addf %164, %163 : vector<8x128xf32>
    %cst_87 = arith.constant 5.000000e-01 : f32
    %166 = vector.broadcast %cst_87 : f32 to vector<8x128xf32>
    %167 = arith.mulf %166, %165 : vector<8x128xf32>
    %168 = vector.extract_strided_slice %144 {offsets = [0, 256], sizes = [8, 128], strides = [1, 1]} : vector<8x512xf32> to vector<8x128xf32>
    %169 = math.tanh %168 : vector<8x128xf32>
    %170 = vector.extract_strided_slice %144 {offsets = [0, 384], sizes = [8, 128], strides = [1, 1]} : vector<8x512xf32> to vector<8x128xf32>
    %cst_88 = arith.constant 5.000000e-01 : f32
    %171 = vector.broadcast %cst_88 : f32 to vector<8x128xf32>
    %172 = arith.mulf %171, %170 : vector<8x128xf32>
    %173 = math.tanh %172 : vector<8x128xf32>
    %cst_89 = arith.constant 1.000000e+00 : f32
    %174 = vector.broadcast %cst_89 : f32 to vector<8x128xf32>
    %175 = arith.addf %174, %173 : vector<8x128xf32>
    %cst_90 = arith.constant 5.000000e-01 : f32
    %176 = vector.broadcast %cst_90 : f32 to vector<8x128xf32>
    %177 = arith.mulf %176, %175 : vector<8x128xf32>
    %178 = arith.mulf %167, %137 : vector<8x128xf32>
    %179 = arith.mulf %159, %169 : vector<8x128xf32>
    %180 = arith.addf %178, %179 : vector<8x128xf32>
    %181 = math.tanh %180 : vector<8x128xf32>
    %182 = arith.mulf %177, %181 : vector<8x128xf32>
    %c24_91 = arith.constant 24 : index
    %c0_92 = arith.constant 0 : index
    %183 = vector.load %arg12[%c24_91, %c0_92] : memref<64x128xf32, #tpu.memory_space<vmem>>, vector<8x128xf32>
    tpu.vector_store %arg12[%c24_91, %c0_92], %182 {strides = array<i32>} : memref<64x128xf32, #tpu.memory_space<vmem>>, vector<8x128xf32>,
    %c0_93 = arith.constant 0 : index
    %c0_94 = arith.constant 0 : index
    %c0_95 = arith.constant 0 : index
    %184 = vector.load %arg11[%c0_93, %c0_94, %c0_95] : memref<2x8x512xf32, #tpu.memory_space<vmem>>, vector<1x8x512xf32>
    %185 = vector.shape_cast %184 : vector<1x8x512xf32> to vector<8x512xf32>
    %cst_96 = arith.constant dense<0.000000e+00> : vector<8x512xf32>
    %186 = tpu.matmul %182, %4, %cst_96 {dimension_numbers = #tpu.dot_dimension_numbers<[1], [0], [0], [1], [0, 0, 1, 1], [], []>} : vector<8x128xf32>, vector<128x512xf32>, vector<8x512xf32> -> vector<8x512xf32>
    %187 = arith.addf %185, %186 : vector<8x512xf32>
    %c40 = arith.constant 40 : index
    %c0_97 = arith.constant 0 : index
    %188 = vector.load %arg0[%c40, %c0_97] : memref<64x128xf32, #tpu.memory_space<vmem>>, vector<8x128xf32>
    %cst_98 = arith.constant dense<0.000000e+00> : vector<8x512xf32>
    %189 = tpu.matmul %188, %3, %cst_98 {dimension_numbers = #tpu.dot_dimension_numbers<[1], [0], [0], [1], [0, 0, 1, 1], [], []>} : vector<8x128xf32>, vector<128x512xf32>, vector<8x512xf32> -> vector<8x512xf32>
    %190 = vector.broadcast %0 : vector<1x512xf32> to vector<8x512xf32>
    %191 = arith.addf %189, %190 : vector<8x512xf32>
    %c1_99 = arith.constant 1 : index
    %c0_100 = arith.constant 0 : index
    %c0_101 = arith.constant 0 : index
    %192 = vector.load %arg11[%c1_99, %c0_100, %c0_101] : memref<2x8x512xf32, #tpu.memory_space<vmem>>, vector<1x8x512xf32>
    %193 = vector.shape_cast %192 : vector<1x8x512xf32> to vector<8x512xf32>
    %194 = vector.shape_cast %191 : vector<8x512xf32> to vector<1x8x512xf32>
    tpu.vector_store %arg11[%c1_99, %c0_100, %c0_101], %194 {strides = array<i32>} : memref<2x8x512xf32, #tpu.memory_space<vmem>>, vector<1x8x512xf32>,
    %195 = vector.extract_strided_slice %187 {offsets = [0, 0], sizes = [8, 128], strides = [1, 1]} : vector<8x512xf32> to vector<8x128xf32>
    %cst_102 = arith.constant 5.000000e-01 : f32
    %196 = vector.broadcast %cst_102 : f32 to vector<8x128xf32>
    %197 = arith.mulf %196, %195 : vector<8x128xf32>
    %198 = math.tanh %197 : vector<8x128xf32>
    %cst_103 = arith.constant 1.000000e+00 : f32
    %199 = vector.broadcast %cst_103 : f32 to vector<8x128xf32>
    %200 = arith.addf %199, %198 : vector<8x128xf32>
    %cst_104 = arith.constant 5.000000e-01 : f32
    %201 = vector.broadcast %cst_104 : f32 to vector<8x128xf32>
    %202 = arith.mulf %201, %200 : vector<8x128xf32>
    %203 = vector.extract_strided_slice %187 {offsets = [0, 128], sizes = [8, 128], strides = [1, 1]} : vector<8x512xf32> to vector<8x128xf32>
    %cst_105 = arith.constant 5.000000e-01 : f32
    %204 = vector.broadcast %cst_105 : f32 to vector<8x128xf32>
    %205 = arith.mulf %204, %203 : vector<8x128xf32>
    %206 = math.tanh %205 : vector<8x128xf32>
    %cst_106 = arith.constant 1.000000e+00 : f32
    %207 = vector.broadcast %cst_106 : f32 to vector<8x128xf32>
    %208 = arith.addf %207, %206 : vector<8x128xf32>
    %cst_107 = arith.constant 5.000000e-01 : f32
    %209 = vector.broadcast %cst_107 : f32 to vector<8x128xf32>
    %210 = arith.mulf %209, %208 : vector<8x128xf32>
    %211 = vector.extract_strided_slice %187 {offsets = [0, 256], sizes = [8, 128], strides = [1, 1]} : vector<8x512xf32> to vector<8x128xf32>
    %212 = math.tanh %211 : vector<8x128xf32>
    %213 = vector.extract_strided_slice %187 {offsets = [0, 384], sizes = [8, 128], strides = [1, 1]} : vector<8x512xf32> to vector<8x128xf32>
    %cst_108 = arith.constant 5.000000e-01 : f32
    %214 = vector.broadcast %cst_108 : f32 to vector<8x128xf32>
    %215 = arith.mulf %214, %213 : vector<8x128xf32>
    %216 = math.tanh %215 : vector<8x128xf32>
    %cst_109 = arith.constant 1.000000e+00 : f32
    %217 = vector.broadcast %cst_109 : f32 to vector<8x128xf32>
    %218 = arith.addf %217, %216 : vector<8x128xf32>
    %cst_110 = arith.constant 5.000000e-01 : f32
    %219 = vector.broadcast %cst_110 : f32 to vector<8x128xf32>
    %220 = arith.mulf %219, %218 : vector<8x128xf32>
    %221 = arith.mulf %210, %180 : vector<8x128xf32>
    %222 = arith.mulf %202, %212 : vector<8x128xf32>
    %223 = arith.addf %221, %222 : vector<8x128xf32>
    %224 = math.tanh %223 : vector<8x128xf32>
    %225 = arith.mulf %220, %224 : vector<8x128xf32>
    %c32_111 = arith.constant 32 : index
    %c0_112 = arith.constant 0 : index
    %226 = vector.load %arg12[%c32_111, %c0_112] : memref<64x128xf32, #tpu.memory_space<vmem>>, vector<8x128xf32>
    tpu.vector_store %arg12[%c32_111, %c0_112], %225 {strides = array<i32>} : memref<64x128xf32, #tpu.memory_space<vmem>>, vector<8x128xf32>,
    %c1_113 = arith.constant 1 : index
    %c0_114 = arith.constant 0 : index
    %c0_115 = arith.constant 0 : index
    %227 = vector.load %arg11[%c1_113, %c0_114, %c0_115] : memref<2x8x512xf32, #tpu.memory_space<vmem>>, vector<1x8x512xf32>
    %228 = vector.shape_cast %227 : vector<1x8x512xf32> to vector<8x512xf32>
    %cst_116 = arith.constant dense<0.000000e+00> : vector<8x512xf32>
    %229 = tpu.matmul %225, %4, %cst_116 {dimension_numbers = #tpu.dot_dimension_numbers<[1], [0], [0], [1], [0, 0, 1, 1], [], []>} : vector<8x128xf32>, vector<128x512xf32>, vector<8x512xf32> -> vector<8x512xf32>
    %230 = arith.addf %228, %229 : vector<8x512xf32>
    %c48 = arith.constant 48 : index
    %c0_117 = arith.constant 0 : index
    %231 = vector.load %arg0[%c48, %c0_117] : memref<64x128xf32, #tpu.memory_space<vmem>>, vector<8x128xf32>
    %cst_118 = arith.constant dense<0.000000e+00> : vector<8x512xf32>
    %232 = tpu.matmul %231, %3, %cst_118 {dimension_numbers = #tpu.dot_dimension_numbers<[1], [0], [0], [1], [0, 0, 1, 1], [], []>} : vector<8x128xf32>, vector<128x512xf32>, vector<8x512xf32> -> vector<8x512xf32>
    %233 = vector.broadcast %0 : vector<1x512xf32> to vector<8x512xf32>
    %234 = arith.addf %232, %233 : vector<8x512xf32>
    %c0_119 = arith.constant 0 : index
    %c0_120 = arith.constant 0 : index
    %c0_121 = arith.constant 0 : index
    %235 = vector.load %arg11[%c0_119, %c0_120, %c0_121] : memref<2x8x512xf32, #tpu.memory_space<vmem>>, vector<1x8x512xf32>
    %236 = vector.shape_cast %235 : vector<1x8x512xf32> to vector<8x512xf32>
    %237 = vector.shape_cast %234 : vector<8x512xf32> to vector<1x8x512xf32>
    tpu.vector_store %arg11[%c0_119, %c0_120, %c0_121], %237 {strides = array<i32>} : memref<2x8x512xf32, #tpu.memory_space<vmem>>, vector<1x8x512xf32>,
    %238 = vector.extract_strided_slice %230 {offsets = [0, 0], sizes = [8, 128], strides = [1, 1]} : vector<8x512xf32> to vector<8x128xf32>
    %cst_122 = arith.constant 5.000000e-01 : f32
    %239 = vector.broadcast %cst_122 : f32 to vector<8x128xf32>
    %240 = arith.mulf %239, %238 : vector<8x128xf32>
    %241 = math.tanh %240 : vector<8x128xf32>
    %cst_123 = arith.constant 1.000000e+00 : f32
    %242 = vector.broadcast %cst_123 : f32 to vector<8x128xf32>
    %243 = arith.addf %242, %241 : vector<8x128xf32>
    %cst_124 = arith.constant 5.000000e-01 : f32
    %244 = vector.broadcast %cst_124 : f32 to vector<8x128xf32>
    %245 = arith.mulf %244, %243 : vector<8x128xf32>
    %246 = vector.extract_strided_slice %230 {offsets = [0, 128], sizes = [8, 128], strides = [1, 1]} : vector<8x512xf32> to vector<8x128xf32>
    %cst_125 = arith.constant 5.000000e-01 : f32
    %247 = vector.broadcast %cst_125 : f32 to vector<8x128xf32>
    %248 = arith.mulf %247, %246 : vector<8x128xf32>
    %249 = math.tanh %248 : vector<8x128xf32>
    %cst_126 = arith.constant 1.000000e+00 : f32
    %250 = vector.broadcast %cst_126 : f32 to vector<8x128xf32>
    %251 = arith.addf %250, %249 : vector<8x128xf32>
    %cst_127 = arith.constant 5.000000e-01 : f32
    %252 = vector.broadcast %cst_127 : f32 to vector<8x128xf32>
    %253 = arith.mulf %252, %251 : vector<8x128xf32>
    %254 = vector.extract_strided_slice %230 {offsets = [0, 256], sizes = [8, 128], strides = [1, 1]} : vector<8x512xf32> to vector<8x128xf32>
    %255 = math.tanh %254 : vector<8x128xf32>
    %256 = vector.extract_strided_slice %230 {offsets = [0, 384], sizes = [8, 128], strides = [1, 1]} : vector<8x512xf32> to vector<8x128xf32>
    %cst_128 = arith.constant 5.000000e-01 : f32
    %257 = vector.broadcast %cst_128 : f32 to vector<8x128xf32>
    %258 = arith.mulf %257, %256 : vector<8x128xf32>
    %259 = math.tanh %258 : vector<8x128xf32>
    %cst_129 = arith.constant 1.000000e+00 : f32
    %260 = vector.broadcast %cst_129 : f32 to vector<8x128xf32>
    %261 = arith.addf %260, %259 : vector<8x128xf32>
    %cst_130 = arith.constant 5.000000e-01 : f32
    %262 = vector.broadcast %cst_130 : f32 to vector<8x128xf32>
    %263 = arith.mulf %262, %261 : vector<8x128xf32>
    %264 = arith.mulf %253, %223 : vector<8x128xf32>
    %265 = arith.mulf %245, %255 : vector<8x128xf32>
    %266 = arith.addf %264, %265 : vector<8x128xf32>
    %267 = math.tanh %266 : vector<8x128xf32>
    %268 = arith.mulf %263, %267 : vector<8x128xf32>
    %c40_131 = arith.constant 40 : index
    %c0_132 = arith.constant 0 : index
    %269 = vector.load %arg12[%c40_131, %c0_132] : memref<64x128xf32, #tpu.memory_space<vmem>>, vector<8x128xf32>
    tpu.vector_store %arg12[%c40_131, %c0_132], %268 {strides = array<i32>} : memref<64x128xf32, #tpu.memory_space<vmem>>, vector<8x128xf32>,
    %c0_133 = arith.constant 0 : index
    %c0_134 = arith.constant 0 : index
    %c0_135 = arith.constant 0 : index
    %270 = vector.load %arg11[%c0_133, %c0_134, %c0_135] : memref<2x8x512xf32, #tpu.memory_space<vmem>>, vector<1x8x512xf32>
    %271 = vector.shape_cast %270 : vector<1x8x512xf32> to vector<8x512xf32>
    %cst_136 = arith.constant dense<0.000000e+00> : vector<8x512xf32>
    %272 = tpu.matmul %268, %4, %cst_136 {dimension_numbers = #tpu.dot_dimension_numbers<[1], [0], [0], [1], [0, 0, 1, 1], [], []>} : vector<8x128xf32>, vector<128x512xf32>, vector<8x512xf32> -> vector<8x512xf32>
    %273 = arith.addf %271, %272 : vector<8x512xf32>
    %c56 = arith.constant 56 : index
    %c0_137 = arith.constant 0 : index
    %274 = vector.load %arg0[%c56, %c0_137] : memref<64x128xf32, #tpu.memory_space<vmem>>, vector<8x128xf32>
    %cst_138 = arith.constant dense<0.000000e+00> : vector<8x512xf32>
    %275 = tpu.matmul %274, %3, %cst_138 {dimension_numbers = #tpu.dot_dimension_numbers<[1], [0], [0], [1], [0, 0, 1, 1], [], []>} : vector<8x128xf32>, vector<128x512xf32>, vector<8x512xf32> -> vector<8x512xf32>
    %276 = vector.broadcast %0 : vector<1x512xf32> to vector<8x512xf32>
    %277 = arith.addf %275, %276 : vector<8x512xf32>
    %c1_139 = arith.constant 1 : index
    %c0_140 = arith.constant 0 : index
    %c0_141 = arith.constant 0 : index
    %278 = vector.load %arg11[%c1_139, %c0_140, %c0_141] : memref<2x8x512xf32, #tpu.memory_space<vmem>>, vector<1x8x512xf32>
    %279 = vector.shape_cast %278 : vector<1x8x512xf32> to vector<8x512xf32>
    %280 = vector.shape_cast %277 : vector<8x512xf32> to vector<1x8x512xf32>
    tpu.vector_store %arg11[%c1_139, %c0_140, %c0_141], %280 {strides = array<i32>} : memref<2x8x512xf32, #tpu.memory_space<vmem>>, vector<1x8x512xf32>,
    %281 = vector.extract_strided_slice %273 {offsets = [0, 0], sizes = [8, 128], strides = [1, 1]} : vector<8x512xf32> to vector<8x128xf32>
    %cst_142 = arith.constant 5.000000e-01 : f32
    %282 = vector.broadcast %cst_142 : f32 to vector<8x128xf32>
    %283 = arith.mulf %282, %281 : vector<8x128xf32>
    %284 = math.tanh %283 : vector<8x128xf32>
    %cst_143 = arith.constant 1.000000e+00 : f32
    %285 = vector.broadcast %cst_143 : f32 to vector<8x128xf32>
    %286 = arith.addf %285, %284 : vector<8x128xf32>
    %cst_144 = arith.constant 5.000000e-01 : f32
    %287 = vector.broadcast %cst_144 : f32 to vector<8x128xf32>
    %288 = arith.mulf %287, %286 : vector<8x128xf32>
    %289 = vector.extract_strided_slice %273 {offsets = [0, 128], sizes = [8, 128], strides = [1, 1]} : vector<8x512xf32> to vector<8x128xf32>
    %cst_145 = arith.constant 5.000000e-01 : f32
    %290 = vector.broadcast %cst_145 : f32 to vector<8x128xf32>
    %291 = arith.mulf %290, %289 : vector<8x128xf32>
    %292 = math.tanh %291 : vector<8x128xf32>
    %cst_146 = arith.constant 1.000000e+00 : f32
    %293 = vector.broadcast %cst_146 : f32 to vector<8x128xf32>
    %294 = arith.addf %293, %292 : vector<8x128xf32>
    %cst_147 = arith.constant 5.000000e-01 : f32
    %295 = vector.broadcast %cst_147 : f32 to vector<8x128xf32>
    %296 = arith.mulf %295, %294 : vector<8x128xf32>
    %297 = vector.extract_strided_slice %273 {offsets = [0, 256], sizes = [8, 128], strides = [1, 1]} : vector<8x512xf32> to vector<8x128xf32>
    %298 = math.tanh %297 : vector<8x128xf32>
    %299 = vector.extract_strided_slice %273 {offsets = [0, 384], sizes = [8, 128], strides = [1, 1]} : vector<8x512xf32> to vector<8x128xf32>
    %cst_148 = arith.constant 5.000000e-01 : f32
    %300 = vector.broadcast %cst_148 : f32 to vector<8x128xf32>
    %301 = arith.mulf %300, %299 : vector<8x128xf32>
    %302 = math.tanh %301 : vector<8x128xf32>
    %cst_149 = arith.constant 1.000000e+00 : f32
    %303 = vector.broadcast %cst_149 : f32 to vector<8x128xf32>
    %304 = arith.addf %303, %302 : vector<8x128xf32>
    %cst_150 = arith.constant 5.000000e-01 : f32
    %305 = vector.broadcast %cst_150 : f32 to vector<8x128xf32>
    %306 = arith.mulf %305, %304 : vector<8x128xf32>
    %307 = arith.mulf %296, %266 : vector<8x128xf32>
    %308 = arith.mulf %288, %298 : vector<8x128xf32>
    %309 = arith.addf %307, %308 : vector<8x128xf32>
    %310 = math.tanh %309 : vector<8x128xf32>
    %311 = arith.mulf %306, %310 : vector<8x128xf32>
    %c48_151 = arith.constant 48 : index
    %c0_152 = arith.constant 0 : index
    %312 = vector.load %arg12[%c48_151, %c0_152] : memref<64x128xf32, #tpu.memory_space<vmem>>, vector<8x128xf32>
    tpu.vector_store %arg12[%c48_151, %c0_152], %311 {strides = array<i32>} : memref<64x128xf32, #tpu.memory_space<vmem>>, vector<8x128xf32>,
    %c1_153 = arith.constant 1 : index
    %c0_154 = arith.constant 0 : index
    %c0_155 = arith.constant 0 : index
    %313 = vector.load %arg11[%c1_153, %c0_154, %c0_155] : memref<2x8x512xf32, #tpu.memory_space<vmem>>, vector<1x8x512xf32>
    %314 = vector.shape_cast %313 : vector<1x8x512xf32> to vector<8x512xf32>
    %cst_156 = arith.constant dense<0.000000e+00> : vector<8x512xf32>
    %315 = tpu.matmul %311, %4, %cst_156 {dimension_numbers = #tpu.dot_dimension_numbers<[1], [0], [0], [1], [0, 0, 1, 1], [], []>} : vector<8x128xf32>, vector<128x512xf32>, vector<8x512xf32> -> vector<8x512xf32>
    %316 = arith.addf %314, %315 : vector<8x512xf32>
    %317 = vector.extract_strided_slice %316 {offsets = [0, 0], sizes = [8, 128], strides = [1, 1]} : vector<8x512xf32> to vector<8x128xf32>
    %cst_157 = arith.constant 5.000000e-01 : f32
    %318 = vector.broadcast %cst_157 : f32 to vector<8x128xf32>
    %319 = arith.mulf %318, %317 : vector<8x128xf32>
    %320 = math.tanh %319 : vector<8x128xf32>
    %cst_158 = arith.constant 1.000000e+00 : f32
    %321 = vector.broadcast %cst_158 : f32 to vector<8x128xf32>
    %322 = arith.addf %321, %320 : vector<8x128xf32>
    %cst_159 = arith.constant 5.000000e-01 : f32
    %323 = vector.broadcast %cst_159 : f32 to vector<8x128xf32>
    %324 = arith.mulf %323, %322 : vector<8x128xf32>
    %325 = vector.extract_strided_slice %316 {offsets = [0, 128], sizes = [8, 128], strides = [1, 1]} : vector<8x512xf32> to vector<8x128xf32>
    %cst_160 = arith.constant 5.000000e-01 : f32
    %326 = vector.broadcast %cst_160 : f32 to vector<8x128xf32>
    %327 = arith.mulf %326, %325 : vector<8x128xf32>
    %328 = math.tanh %327 : vector<8x128xf32>
    %cst_161 = arith.constant 1.000000e+00 : f32
    %329 = vector.broadcast %cst_161 : f32 to vector<8x128xf32>
    %330 = arith.addf %329, %328 : vector<8x128xf32>
    %cst_162 = arith.constant 5.000000e-01 : f32
    %331 = vector.broadcast %cst_162 : f32 to vector<8x128xf32>
    %332 = arith.mulf %331, %330 : vector<8x128xf32>
    %333 = vector.extract_strided_slice %316 {offsets = [0, 256], sizes = [8, 128], strides = [1, 1]} : vector<8x512xf32> to vector<8x128xf32>
    %334 = math.tanh %333 : vector<8x128xf32>
    %335 = vector.extract_strided_slice %316 {offsets = [0, 384], sizes = [8, 128], strides = [1, 1]} : vector<8x512xf32> to vector<8x128xf32>
    %cst_163 = arith.constant 5.000000e-01 : f32
    %336 = vector.broadcast %cst_163 : f32 to vector<8x128xf32>
    %337 = arith.mulf %336, %335 : vector<8x128xf32>
    %338 = math.tanh %337 : vector<8x128xf32>
    %cst_164 = arith.constant 1.000000e+00 : f32
    %339 = vector.broadcast %cst_164 : f32 to vector<8x128xf32>
    %340 = arith.addf %339, %338 : vector<8x128xf32>
    %cst_165 = arith.constant 5.000000e-01 : f32
    %341 = vector.broadcast %cst_165 : f32 to vector<8x128xf32>
    %342 = arith.mulf %341, %340 : vector<8x128xf32>
    %343 = arith.mulf %332, %309 : vector<8x128xf32>
    %344 = arith.mulf %324, %334 : vector<8x128xf32>
    %345 = arith.addf %343, %344 : vector<8x128xf32>
    %346 = math.tanh %345 : vector<8x128xf32>
    %347 = arith.mulf %342, %346 : vector<8x128xf32>
    %c56_166 = arith.constant 56 : index
    %c0_167 = arith.constant 0 : index
    %348 = vector.load %arg12[%c56_166, %c0_167] : memref<64x128xf32, #tpu.memory_space<vmem>>, vector<8x128xf32>
    tpu.vector_store %arg12[%c56_166, %c0_167], %347 {strides = array<i32>} : memref<64x128xf32, #tpu.memory_space<vmem>>, vector<8x128xf32>,
    %c0_168 = arith.constant 0 : index
    %c0_169 = arith.constant 0 : index
    %349 = vector.load %arg9[%c0_168, %c0_169] : memref<8x128xf32, #tpu.memory_space<vmem>>, vector<8x128xf32>
    tpu.vector_store %arg9[%c0_168, %c0_169], %347 {strides = array<i32>} : memref<8x128xf32, #tpu.memory_space<vmem>>, vector<8x128xf32>,
    %c0_170 = arith.constant 0 : index
    %c0_171 = arith.constant 0 : index
    %350 = vector.load %arg10[%c0_170, %c0_171] : memref<8x128xf32, #tpu.memory_space<vmem>>, vector<8x128xf32>
    tpu.vector_store %arg10[%c0_170, %c0_171], %345 {strides = array<i32>} : memref<8x128xf32, #tpu.memory_space<vmem>>, vector<8x128xf32>,
    %c0_172 = arith.constant 0 : index
    %c0_173 = arith.constant 0 : index
    %351 = vector.load %arg12[%c0_172, %c0_173] : memref<64x128xf32, #tpu.memory_space<vmem>>, vector<64x128xf32>
    %c0_174 = arith.constant 0 : index
    %c0_175 = arith.constant 0 : index
    %352 = vector.load %arg6[%c0_174, %c0_175] : memref<128x128xf32, #tpu.memory_space<vmem>>, vector<128x128xf32>
    %cst_176 = arith.constant dense<0.000000e+00> : vector<64x128xf32>
    %353 = tpu.matmul %351, %352, %cst_176 {dimension_numbers = #tpu.dot_dimension_numbers<[1], [0], [0], [1], [0, 0, 1, 1], [], []>} : vector<64x128xf32>, vector<128x128xf32>, vector<64x128xf32> -> vector<64x128xf32>
    %c0_177 = arith.constant 0 : index
    %c0_178 = arith.constant 0 : index
    %354 = vector.load %arg7[%c0_177, %c0_178] : memref<1x128xf32, #tpu.memory_space<vmem>>, vector<1x128xf32>
    %355 = vector.broadcast %354 : vector<1x128xf32> to vector<64x128xf32>
    %356 = arith.addf %353, %355 : vector<64x128xf32>
    %c0_179 = arith.constant 0 : index
    %c0_180 = arith.constant 0 : index
    %357 = vector.load %arg8[%c0_179, %c0_180] : memref<64x128xf32, #tpu.memory_space<vmem>>, vector<64x128xf32>
    tpu.vector_store %arg8[%c0_179, %c0_180], %356 {strides = array<i32>} : memref<64x128xf32, #tpu.memory_space<vmem>>, vector<64x128xf32>,
    return
  }
}

</mosaic_0001>

<llo_original>
// kernel: decoder_forward.1
$region0: #{decoder_forward.1}
  #allocation0 [shape = 'u32[]', space=smem, size = 0x4, offset = 0x4, fixed_abs, tag = 'smem constant byte address 0x4 - core index']
  #allocation1 [shape = 'u32[144,128]{1,0:T(1,128)}', space=vmem, size = 0x12000, scoped, tag = 'internal scratch']
  #allocation2 [shape = 'f32[2,8,512]{2,1,0:T(8,128)}', space=vmem, size = 0x8000, scoped, tag = 'scratch operand']
  #allocation3 [shape = 'f32[64,128]{1,0:T(8,128)}', space=vmem, size = 0x8000, scoped, tag = 'scratch operand']
  %s0 = inlined_call_operand.vmem [shape: f32[64,128], index: 0, kind: input, shape index: {}]
  %s1 = inlined_call_operand.vmem [shape: f32[8,128], index: 1, kind: input, shape index: {}]
  %s2 = inlined_call_operand.vmem [shape: f32[8,128], index: 2, kind: input, shape index: {}]
  %s3 = inlined_call_operand.hbm [shape: f32[128,512], index: 3, kind: input, shape index: {}]
  %s4 = inlined_call_operand.hbm [shape: f32[128,512], index: 4, kind: input, shape index: {}]
  %s5 = inlined_call_operand.vmem [shape: f32[1,512], index: 5, kind: input, shape index: {}]
  %s6 = inlined_call_operand.vmem [shape: f32[128,128], index: 6, kind: input, shape index: {}]
  %s7 = inlined_call_operand.vmem [shape: f32[1,128], index: 7, kind: input, shape index: {}]
  %s8 = inlined_call_operand.vmem [shape: f32[64,128], index: 8, kind: output, shape index: {0}]
  %s9 = inlined_call_operand.vmem [shape: f32[8,128], index: 9, kind: output, shape index: {1}]
  %s10 = inlined_call_operand.vmem [shape: f32[8,128], index: 10, kind: output, shape index: {2}]
  %11 = xla_tuple %s8, %s9, %s10
  %s12 = sld [smem:[#allocation0]]
  $region66: #{decoder_forward.1} parent=0
    _
  %s14 = ssub.s32 1, %s12
  %s15 = scalar_select 0, %s14, %s12
  $region1: #{decoder_forward.1} parent=0
    #allocation4 [shape = 'u8[262144]{0}', space=vmem, size = 0x40000, scoped, tag = 'input window, operand 3, single buffered']
    #allocation5 [shape = 's32[1]{0}', space=sflag, size = 0x4, scoped, tag = 'scoped memory for decoder_forward.1']
    #allocation6 [shape = 'u8[262144]{0}', space=vmem, size = 0x40000, scoped, tag = 'input window, operand 4, single buffered']
    #allocation7 [shape = 's32[1]{0}', space=sflag, size = 0x4, scoped, tag = 'scoped memory for decoder_forward.1']
    %16 = vsyncpa [#allocation5], 0
    %17 = vsyncpa [#allocation7], 0
    // Predicated region
    $region2: #{decoder_forward.1} parent=1 // pred_check
      _
    $region3: #{decoder_forward.1} parent=1 // pred_check_branch
      %19 = sbr.rel (0) target = $region5
    $region4: #{decoder_forward.1} parent=1 // pred_region
      _
    $region5: #{decoder_forward.1} parent=1 // pred_fallthru
      _
    // Predicated region
    $region6: #{decoder_forward.1} parent=1 // pred_check
      _
    $region7: #{decoder_forward.1} parent=1 // pred_check_branch
      %21 = sbr.rel (0) target = $region9
    $region8: #{decoder_forward.1} parent=1 // pred_region
      _
    $region9: #{decoder_forward.1} parent=1 // pred_fallthru
      _
    // Predicated region
    $region10: #{decoder_forward.1} parent=1 // pred_check
      _
    $region11: #{decoder_forward.1} parent=1 // pred_check_branch
      %23 = sbr.rel (0) target = $region13
    $region12: #{decoder_forward.1} parent=1 // pred_region
      _
    $region13: #{decoder_forward.1} parent=1 // pred_fallthru
      _
    // Predicated region
    $region14: #{decoder_forward.1} parent=1 // pred_check
      _
    $region15: #{decoder_forward.1} parent=1 // pred_check_branch
      %25 = sbr.rel (0) target = $region17
    $region16: #{decoder_forward.1} parent=1 // pred_region
      %s27 = ssub.s32 8192, 8192
      %28 = vsyncadd [#allocation5], %s27
      %s29 = sshll.u32 [#allocation4], 4
      %s30 = int_to_ptr.vmem [resolvable:$true] %s29
      %35 = dma.hbm_to_vmem [thread:$0]  %s3, 8192, %s30, [#allocation5], 512, 512, 32
    $region17: #{decoder_forward.1} parent=1 // pred_fallthru
      _
    // Predicated region
    $region18: #{decoder_forward.1} parent=1 // pred_check
      _
    $region19: #{decoder_forward.1} parent=1 // pred_check_branch
      %37 = sbr.rel (0) target = $region21
    $region20: #{decoder_forward.1} parent=1 // pred_region
      %s39 = ssub.s32 8192, 8192
      %40 = vsyncadd [#allocation7], %s39
      %s41 = sshll.u32 [#allocation6], 4
      %s42 = int_to_ptr.vmem [resolvable:$true] %s41
      %47 = dma.hbm_to_vmem [thread:$0]  %s4, 8192, %s42, [#allocation7], 512, 512, 32
    $region21: #{decoder_forward.1} parent=1 // pred_fallthru
      _
    // Predicated region
    $region22: #{decoder_forward.1} parent=1 // pred_check
      _
    $region23: #{decoder_forward.1} parent=1 // pred_check_branch
      %49 = sbr.rel (0) target = $region25
    $region24: #{decoder_forward.1} parent=1 // pred_region
      _
    $region25: #{decoder_forward.1} parent=1 // pred_fallthru
      _
    // Predicated region
    $region26: #{decoder_forward.1} parent=1 // pred_check
      _
    $region27: #{decoder_forward.1} parent=1 // pred_check_branch
      %51 = sbr.rel (0) target = $region29
    $region28: #{decoder_forward.1} parent=1 // pred_region
      _
    $region29: #{decoder_forward.1} parent=1 // pred_fallthru
      _
    // Predicated region
    $region30: #{decoder_forward.1} parent=1 // pred_check
      _
    $region31: #{decoder_forward.1} parent=1 // pred_check_branch
      %53 = sbr.rel (0) target = $region33
    $region32: #{decoder_forward.1} parent=1 // pred_region
      _
    $region33: #{decoder_forward.1} parent=1 // pred_fallthru
      _
    // Predicated region
    $region34: #{decoder_forward.1} parent=1 // pred_check
      _
    $region35: #{decoder_forward.1} parent=1 // pred_check_branch
      %55 = sbr.rel (0) target = $region37
    $region36: #{decoder_forward.1} parent=1 // pred_region
      %56 = dma.done [#allocation5], 8192
    $region37: #{decoder_forward.1} parent=1 // pred_fallthru
      _
    // Predicated region
    $region38: #{decoder_forward.1} parent=1 // pred_check
      _
    $region39: #{decoder_forward.1} parent=1 // pred_check_branch
      %58 = sbr.rel (0) target = $region41
    $region40: #{decoder_forward.1} parent=1 // pred_region
      %59 = dma.done [#allocation7], 8192
    $region41: #{decoder_forward.1} parent=1 // pred_fallthru
      _
    %v60 = vld [vmem:[%s5] sm:$0xf]
    %v61 = vld [vmem:[%s1] sm:$0xff]
    %v62 = vld [vmem:[%s2] sm:$0xff]
    %v63 = vld [vmem:[#allocation4] sm:$0xff]
    %v64 = vld [vmem:[#allocation4 + $0x8] sm:$0xff]
    %v65 = vld [vmem:[#allocation4 + $0x10] sm:$0xff]
    %v66 = vld [vmem:[#allocation4 + $0x18] sm:$0xff]
    %v67 = vld [vmem:[#allocation4 + $0x20] sm:$0xff]
    %v68 = vld [vmem:[#allocation4 + $0x28] sm:$0xff]
    %v69 = vld [vmem:[#allocation4 + $0x30] sm:$0xff]
    %v70 = vld [vmem:[#allocation4 + $0x38] sm:$0xff]
    %v71 = vld [vmem:[#allocation4 + $0x40] sm:$0xff]
    %v72 = vld [vmem:[#allocation4 + $0x48] sm:$0xff]
    %v73 = vld [vmem:[#allocation4 + $0x50] sm:$0xff]
    %v74 = vld [vmem:[#allocation4 + $0x58] sm:$0xff]
    %v75 = vld [vmem:[#allocation4 + $0x60] sm:$0xff]
    %v76 = vld [vmem:[#allocation4 + $0x68] sm:$0xff]
    %v77 = vld [vmem:[#allocation4 + $0x70] sm:$0xff]
    %v78 = vld [vmem:[#allocation4 + $0x78] sm:$0xff]
    %v79 = vld [vmem:[#allocation4 + $0x80] sm:$0xff]
    %v80 = vld [vmem:[#allocation4 + $0x88] sm:$0xff]
    %v81 = vld [vmem:[#allocation4 + $0x90] sm:$0xff]
    %v82 = vld [vmem:[#allocation4 + $0x98] sm:$0xff]
    %v83 = vld [vmem:[#allocation4 + $0xa0] sm:$0xff]
    %v84 = vld [vmem:[#allocation4 + $0xa8] sm:$0xff]
    %v85 = vld [vmem:[#allocation4 + $0xb0] sm:$0xff]
    %v86 = vld [vmem:[#allocation4 + $0xb8] sm:$0xff]
    %v87 = vld [vmem:[#allocation4 + $0xc0] sm:$0xff]
    %v88 = vld [vmem:[#allocation4 + $0xc8] sm:$0xff]
    %v89 = vld [vmem:[#allocation4 + $0xd0] sm:$0xff]
    %v90 = vld [vmem:[#allocation4 + $0xd8] sm:$0xff]
    %v91 = vld [vmem:[#allocation4 + $0xe0] sm:$0xff]
    %v92 = vld [vmem:[#allocation4 + $0xe8] sm:$0xff]
    %v93 = vld [vmem:[#allocation4 + $0xf0] sm:$0xff]
    %v94 = vld [vmem:[#allocation4 + $0xf8] sm:$0xff]
    %v95 = vld [vmem:[#allocation4 + $0x100] sm:$0xff]
    %v96 = vld [vmem:[#allocation4 + $0x108] sm:$0xff]
    %v97 = vld [vmem:[#allocation4 + $0x110] sm:$0xff]
    %v98 = vld [vmem:[#allocation4 + $0x118] sm:$0xff]
    %v99 = vld [vmem:[#allocation4 + $0x120] sm:$0xff]
    %v100 = vld [vmem:[#allocation4 + $0x128] sm:$0xff]
    %v101 = vld [vmem:[#allocation4 + $0x130] sm:$0xff]
    %v102 = vld [vmem:[#allocation4 + $0x138] sm:$0xff]
    %v103 = vld [vmem:[#allocation4 + $0x140] sm:$0xff]
    %v104 = vld [vmem:[#allocation4 + $0x148] sm:$0xff]
    %v105 = vld [vmem:[#allocation4 + $0x150] sm:$0xff]
    %v106 = vld [vmem:[#allocation4 + $0x158] sm:$0xff]
    %v107 = vld [vmem:[#allocation4 + $0x160] sm:$0xff]
    %v108 = vld [vmem:[#allocation4 + $0x168] sm:$0xff]
    %v109 = vld [vmem:[#allocation4 + $0x170] sm:$0xff]
    %v110 = vld [vmem:[#allocation4 + $0x178] sm:$0xff]
    %v111 = vld [vmem:[#allocation4 + $0x180] sm:$0xff]
    %v112 = vld [vmem:[#allocation4 + $0x188] sm:$0xff]
    %v113 = vld [vmem:[#allocation4 + $0x190] sm:$0xff]
    %v114 = vld [vmem:[#allocation4 + $0x198] sm:$0xff]
    %v115 = vld [vmem:[#allocation4 + $0x1a0] sm:$0xff]
    %v116 = vld [vmem:[#allocation4 + $0x1a8] sm:$0xff]
    %v117 = vld [vmem:[#allocation4 + $0x1b0] sm:$0xff]
    %v118 = vld [vmem:[#allocation4 + $0x1b8] sm:$0xff]
    %v119 = vld [vmem:[#allocation4 + $0x1c0] sm:$0xff]
    %v120 = vld [vmem:[#allocation4 + $0x1c8] sm:$0xff]
    %v121 = vld [vmem:[#allocation4 + $0x1d0] sm:$0xff]
    %v122 = vld [vmem:[#allocation4 + $0x1d8] sm:$0xff]
    %v123 = vld [vmem:[#allocation4 + $0x1e0] sm:$0xff]
    %v124 = vld [vmem:[#allocation4 + $0x1e8] sm:$0xff]
    %v125 = vld [vmem:[#allocation4 + $0x1f0] sm:$0xff]
    %v126 = vld [vmem:[#allocation4 + $0x1f8] sm:$0xff]
    %v127 = vld [vmem:[#allocation6] sm:$0xff]
    %v128 = vld [vmem:[#allocation6 + $0x8] sm:$0xff]
    %v129 = vld [vmem:[#allocation6 + $0x10] sm:$0xff]
    %v130 = vld [vmem:[#allocation6 + $0x18] sm:$0xff]
    %v131 = vld [vmem:[#allocation6 + $0x20] sm:$0xff]
    %v132 = vld [vmem:[#allocation6 + $0x28] sm:$0xff]
    %v133 = vld [vmem:[#allocation6 + $0x30] sm:$0xff]
    %v134 = vld [vmem:[#allocation6 + $0x38] sm:$0xff]
    %v135 = vld [vmem:[#allocation6 + $0x40] sm:$0xff]
    %v136 = vld [vmem:[#allocation6 + $0x48] sm:$0xff]
    %v137 = vld [vmem:[#allocation6 + $0x50] sm:$0xff]
    %v138 = vld [vmem:[#allocation6 + $0x58] sm:$0xff]
    %v139 = vld [vmem:[#allocation6 + $0x60] sm:$0xff]
    %v140 = vld [vmem:[#allocation6 + $0x68] sm:$0xff]
    %v141 = vld [vmem:[#allocation6 + $0x70] sm:$0xff]
    %v142 = vld [vmem:[#allocation6 + $0x78] sm:$0xff]
    %v143 = vld [vmem:[#allocation6 + $0x80] sm:$0xff]
    %v144 = vld [vmem:[#allocation6 + $0x88] sm:$0xff]
    %v145 = vld [vmem:[#allocation6 + $0x90] sm:$0xff]
    %v146 = vld [vmem:[#allocation6 + $0x98] sm:$0xff]
    %v147 = vld [vmem:[#allocation6 + $0xa0] sm:$0xff]
    %v148 = vld [vmem:[#allocation6 + $0xa8] sm:$0xff]
    %v149 = vld [vmem:[#allocation6 + $0xb0] sm:$0xff]
    %v150 = vld [vmem:[#allocation6 + $0xb8] sm:$0xff]
    %v151 = vld [vmem:[#allocation6 + $0xc0] sm:$0xff]
    %v152 = vld [vmem:[#allocation6 + $0xc8] sm:$0xff]
    %v153 = vld [vmem:[#allocation6 + $0xd0] sm:$0xff]
    %v154 = vld [vmem:[#allocation6 + $0xd8] sm:$0xff]
    %v155 = vld [vmem:[#allocation6 + $0xe0] sm:$0xff]
    %v156 = vld [vmem:[#allocation6 + $0xe8] sm:$0xff]
    %v157 = vld [vmem:[#allocation6 + $0xf0] sm:$0xff]
    %v158 = vld [vmem:[#allocation6 + $0xf8] sm:$0xff]
    %v159 = vld [vmem:[#allocation6 + $0x100] sm:$0xff]
    %v160 = vld [vmem:[#allocation6 + $0x108] sm:$0xff]
    %v161 = vld [vmem:[#allocation6 + $0x110] sm:$0xff]
    %v162 = vld [vmem:[#allocation6 + $0x118] sm:$0xff]
    %v163 = vld [vmem:[#allocation6 + $0x120] sm:$0xff]
    %v164 = vld [vmem:[#allocation6 + $0x128] sm:$0xff]
    %v165 = vld [vmem:[#allocation6 + $0x130] sm:$0xff]
    %v166 = vld [vmem:[#allocation6 + $0x138] sm:$0xff]
    %v167 = vld [vmem:[#allocation6 + $0x140] sm:$0xff]
    %v168 = vld [vmem:[#allocation6 + $0x148] sm:$0xff]
    %v169 = vld [vmem:[#allocation6 + $0x150] sm:$0xff]
    %v170 = vld [vmem:[#allocation6 + $0x158] sm:$0xff]
    %v171 = vld [vmem:[#allocation6 + $0x160] sm:$0xff]
    %v172 = vld [vmem:[#allocation6 + $0x168] sm:$0xff]
    %v173 = vld [vmem:[#allocation6 + $0x170] sm:$0xff]
    %v174 = vld [vmem:[#allocation6 + $0x178] sm:$0xff]
    %v175 = vld [vmem:[#allocation6 + $0x180] sm:$0xff]
    %v176 = vld [vmem:[#allocation6 + $0x188] sm:$0xff]
    %v177 = vld [vmem:[#allocation6 + $0x190] sm:$0xff]
    %v178 = vld [vmem:[#allocation6 + $0x198] sm:$0xff]
    %v179 = vld [vmem:[#allocation6 + $0x1a0] sm:$0xff]
    %v180 = vld [vmem:[#allocation6 + $0x1a8] sm:$0xff]
    %v181 = vld [vmem:[#allocation6 + $0x1b0] sm:$0xff]
    %v182 = vld [vmem:[#allocation6 + $0x1b8] sm:$0xff]
    %v183 = vld [vmem:[#allocation6 + $0x1c0] sm:$0xff]
    %v184 = vld [vmem:[#allocation6 + $0x1c8] sm:$0xff]
    %v185 = vld [vmem:[#allocation6 + $0x1d0] sm:$0xff]
    %v186 = vld [vmem:[#allocation6 + $0x1d8] sm:$0xff]
    %v187 = vld [vmem:[#allocation6 + $0x1e0] sm:$0xff]
    %v188 = vld [vmem:[#allocation6 + $0x1e8] sm:$0xff]
    %v189 = vld [vmem:[#allocation6 + $0x1f0] sm:$0xff]
    %v190 = vld [vmem:[#allocation6 + $0x1f8] sm:$0xff]
    %v191 = vld [vmem:[%s0] sm:$0xff]
    %v193 = vlaneseq
    %v194 = vshrl.u32 %v193, 7
    %v195 = vsub.s32 0, %v194
    %v196 = vrot.slane %v60, %v195
    %v197 = vlaneseq
    %v198 = vshrl.u32 %v197, 7
    %v199 = vsub.s32 1, %v198
    %v200 = vrot.slane %v60, %v199
    %v201 = vlaneseq
    %v202 = vshrl.u32 %v201, 7
    %v203 = vsub.s32 2, %v202
    %v204 = vrot.slane %v60, %v203
    %v205 = vlaneseq
    %v206 = vshrl.u32 %v205, 7
    %v207 = vsub.s32 3, %v206
    %v208 = vrot.slane %v60, %v207
    %213 = vmatprep.subr.mxu0 %v64
    %214 = vmatpush1.msra.mxu0 %v63
    %215 = vmatprep.subr.mxu0 %v68
    %216 = vmatpush1.msra.mxu0 %v67
    %217 = vmatprep.subr.mxu0 %v72
    %218 = vmatpush1.msra.mxu0 %v71
    %219 = vmatprep.subr.mxu0 %v76
    %220 = vmatpush1.msra.mxu0 %v75
    %221 = vmatprep.subr.mxu0 %v80
    %222 = vmatpush1.msra.mxu0 %v79
    %223 = vmatprep.subr.mxu0 %v84
    %224 = vmatpush1.msra.mxu0 %v83
    %225 = vmatprep.subr.mxu0 %v88
    %226 = vmatpush1.msra.mxu0 %v87
    %227 = vmatprep.subr.mxu0 %v92
    %228 = vmatpush1.msra.mxu0 %v91
    %229 = vmatprep.subr.mxu0 %v96
    %230 = vmatpush1.msra.mxu0 %v95
    %231 = vmatprep.subr.mxu0 %v100
    %232 = vmatpush1.msra.mxu0 %v99
    %233 = vmatprep.subr.mxu0 %v104
    %234 = vmatpush1.msra.mxu0 %v103
    %235 = vmatprep.subr.mxu0 %v108
    %236 = vmatpush1.msra.mxu0 %v107
    %237 = vmatprep.subr.mxu0 %v112
    %238 = vmatpush1.msra.mxu0 %v111
    %239 = vmatprep.subr.mxu0 %v116
    %240 = vmatpush1.msra.mxu0 %v115
    %241 = vmatprep.subr.mxu0 %v120
    %242 = vmatpush1.msra.mxu0 %v119
    %243 = vmatprep.subr.mxu0 %v124
    %244 = vmatpush1.msra.mxu0 %v123
    %245 = vmatprep.subr.mxu0 0.0
    %246 = vmatpush1.msra.mxu0 0.0
    %247 = vmatprep.subr.mxu0 0.0
    %248 = vmatpush1.msra.mxu0 0.0
    %249 = vmatprep.subr.mxu0 0.0
    %250 = vmatpush1.msra.mxu0 0.0
    %251 = vmatprep.subr.mxu0 0.0
    %252 = vmatpush1.msra.mxu0 0.0
    %253 = vmatprep.subr.mxu0 0.0
    %254 = vmatpush1.msra.mxu0 0.0
    %255 = vmatprep.subr.mxu0 0.0
    %256 = vmatpush1.msra.mxu0 0.0
    %257 = vmatprep.subr.mxu0 0.0
    %258 = vmatpush1.msra.mxu0 0.0
    %259 = vmatprep.subr.mxu0 0.0
    %260 = vmatpush1.msra.mxu0 0.0
    %261 = vmatprep.subr.mxu0 0.0
    %262 = vmatpush1.msra.mxu0 0.0
    %263 = vmatprep.subr.mxu0 0.0
    %264 = vmatpush1.msra.mxu0 0.0
    %265 = vmatprep.subr.mxu0 0.0
    %266 = vmatpush1.msra.mxu0 0.0
    %267 = vmatprep.subr.mxu0 0.0
    %268 = vmatpush1.msra.mxu0 0.0
    %269 = vmatprep.subr.mxu0 0.0
    %270 = vmatpush1.msra.mxu0 0.0
    %271 = vmatprep.subr.mxu0 0.0
    %272 = vmatpush1.msra.mxu0 0.0
    %273 = vmatprep.subr.mxu0 0.0
    %274 = vmatpush1.msra.mxu0 0.0
    %275 = vmatprep.subr.mxu0 0.0
    %276 = vmatpush1.msra.mxu0 0.0
    %277 = vmatprep.mubr.f32.mxu0 0.0
    %278 = vmatmul.mubr.f32.gmra.mrb[0].mxu0 %v191
    %v279 = vpop.f32.mrb[0].mxu0
    %v280 = vadd.f32 %v196, %v279
    %v281 = vpop.f32.mrb[0].mxu0
    %v282 = vadd.f32 %v200, %v281
    %283 = vdwg.mxu0
    %284 = vmatprep.subr.mxu0 %v66
    %285 = vmatpush1.msra.mxu0 %v65
    %286 = vmatprep.subr.mxu0 %v70
    %287 = vmatpush1.msra.mxu0 %v69
    %288 = vmatprep.subr.mxu0 %v74
    %289 = vmatpush1.msra.mxu0 %v73
    %290 = vmatprep.subr.mxu0 %v78
    %291 = vmatpush1.msra.mxu0 %v77
    %292 = vmatprep.subr.mxu0 %v82
    %293 = vmatpush1.msra.mxu0 %v81
    %294 = vmatprep.subr.mxu0 %v86
    %295 = vmatpush1.msra.mxu0 %v85
    %296 = vmatprep.subr.mxu0 %v90
    %297 = vmatpush1.msra.mxu0 %v89
    %298 = vmatprep.subr.mxu0 %v94
    %299 = vmatpush1.msra.mxu0 %v93
    %300 = vmatprep.subr.mxu0 %v98
    %301 = vmatpush1.msra.mxu0 %v97
    %302 = vmatprep.subr.mxu0 %v102
    %303 = vmatpush1.msra.mxu0 %v101
    %304 = vmatprep.subr.mxu0 %v106
    %305 = vmatpush1.msra.mxu0 %v105
    %306 = vmatprep.subr.mxu0 %v110
    %307 = vmatpush1.msra.mxu0 %v109
    %308 = vmatprep.subr.mxu0 %v114
    %309 = vmatpush1.msra.mxu0 %v113
    %310 = vmatprep.subr.mxu0 %v118
    %311 = vmatpush1.msra.mxu0 %v117
    %312 = vmatprep.subr.mxu0 %v122
    %313 = vmatpush1.msra.mxu0 %v121
    %314 = vmatprep.subr.mxu0 %v126
    %315 = vmatpush1.msra.mxu0 %v125
    %316 = vmatprep.subr.mxu0 0.0
    %317 = vmatpush1.msra.mxu0 0.0
    %318 = vmatprep.subr.mxu0 0.0
    %319 = vmatpush1.msra.mxu0 0.0
    %320 = vmatprep.subr.mxu0 0.0
    %321 = vmatpush1.msra.mxu0 0.0
    %322 = vmatprep.subr.mxu0 0.0
    %323 = vmatpush1.msra.mxu0 0.0
    %324 = vmatprep.subr.mxu0 0.0
    %325 = vmatpush1.msra.mxu0 0.0
    %326 = vmatprep.subr.mxu0 0.0
    %327 = vmatpush1.msra.mxu0 0.0
    %328 = vmatprep.subr.mxu0 0.0
    %329 = vmatpush1.msra.mxu0 0.0
    %330 = vmatprep.subr.mxu0 0.0
    %331 = vmatpush1.msra.mxu0 0.0
    %332 = vmatprep.subr.mxu0 0.0
    %333 = vmatpush1.msra.mxu0 0.0
    %334 = vmatprep.subr.mxu0 0.0
    %335 = vmatpush1.msra.mxu0 0.0
    %336 = vmatprep.subr.mxu0 0.0
    %337 = vmatpush1.msra.mxu0 0.0
    %338 = vmatprep.subr.mxu0 0.0
    %339 = vmatpush1.msra.mxu0 0.0
    %340 = vmatprep.subr.mxu0 0.0
    %341 = vmatpush1.msra.mxu0 0.0
    %342 = vmatprep.subr.mxu0 0.0
    %343 = vmatpush1.msra.mxu0 0.0
    %344 = vmatprep.subr.mxu0 0.0
    %345 = vmatpush1.msra.mxu0 0.0
    %346 = vmatprep.subr.mxu0 0.0
    %347 = vmatpush1.msra.mxu0 0.0
    %348 = vmatprep.mubr.f32.mxu0 0.0
    %349 = vmatmul.mubr.f32.gmra.mrb[0].mxu0 %v191
    %v350 = vpop.f32.mrb[0].mxu0
    %v351 = vadd.f32 %v204, %v350
    %v352 = vpop.f32.mrb[0].mxu0
    %v353 = vadd.f32 %v208, %v352
    %354 = vdwg.mxu0
    %355 = vst [vmem:[#allocation2] sm:$0xff] %v280
    %356 = vst [vmem:[#allocation2 + $0x8] sm:$0xff] %v282
    %357 = vst [vmem:[#allocation2 + $0x10] sm:$0xff] %v351
    %358 = vst [vmem:[#allocation2 + $0x18] sm:$0xff] %v353
    %v359 = vld [vmem:[#allocation2] sm:$0xff]
    %v360 = vld [vmem:[#allocation2 + $0x8] sm:$0xff]
    %v361 = vld [vmem:[#allocation2 + $0x10] sm:$0xff]
    %v362 = vld [vmem:[#allocation2 + $0x18] sm:$0xff]
    %363 = vmatprep.subr.mxu0 %v128
    %364 = vmatpush1.msra.mxu0 %v127
    %365 = vmatprep.subr.mxu0 %v132
    %366 = vmatpush1.msra.mxu0 %v131
    %367 = vmatprep.subr.mxu0 %v136
    %368 = vmatpush1.msra.mxu0 %v135
    %369 = vmatprep.subr.mxu0 %v140
    %370 = vmatpush1.msra.mxu0 %v139
    %371 = vmatprep.subr.mxu0 %v144
    %372 = vmatpush1.msra.mxu0 %v143
    %373 = vmatprep.subr.mxu0 %v148
    %374 = vmatpush1.msra.mxu0 %v147
    %375 = vmatprep.subr.mxu0 %v152
    %376 = vmatpush1.msra.mxu0 %v151
    %377 = vmatprep.subr.mxu0 %v156
    %378 = vmatpush1.msra.mxu0 %v155
    %379 = vmatprep.subr.mxu0 %v160
    %380 = vmatpush1.msra.mxu0 %v159
    %381 = vmatprep.subr.mxu0 %v164
    %382 = vmatpush1.msra.mxu0 %v163
    %383 = vmatprep.subr.mxu0 %v168
    %384 = vmatpush1.msra.mxu0 %v167
    %385 = vmatprep.subr.mxu0 %v172
    %386 = vmatpush1.msra.mxu0 %v171
    %387 = vmatprep.subr.mxu0 %v176
    %388 = vmatpush1.msra.mxu0 %v175
    %389 = vmatprep.subr.mxu0 %v180
    %390 = vmatpush1.msra.mxu0 %v179
    %391 = vmatprep.subr.mxu0 %v184
    %392 = vmatpush1.msra.mxu0 %v183
    %393 = vmatprep.subr.mxu0 %v188
    %394 = vmatpush1.msra.mxu0 %v187
    %395 = vmatprep.subr.mxu0 0.0
    %396 = vmatpush1.msra.mxu0 0.0
    %397 = vmatprep.subr.mxu0 0.0
    %398 = vmatpush1.msra.mxu0 0.0
    %399 = vmatprep.subr.mxu0 0.0
    %400 = vmatpush1.msra.mxu0 0.0
    %401 = vmatprep.subr.mxu0 0.0
    %402 = vmatpush1.msra.mxu0 0.0
    %403 = vmatprep.subr.mxu0 0.0
    %404 = vmatpush1.msra.mxu0 0.0
    %405 = vmatprep.subr.mxu0 0.0
    %406 = vmatpush1.msra.mxu0 0.0
    %407 = vmatprep.subr.mxu0 0.0
    %408 = vmatpush1.msra.mxu0 0.0
    %409 = vmatprep.subr.mxu0 0.0
    %410 = vmatpush1.msra.mxu0 0.0
    %411 = vmatprep.subr.mxu0 0.0
    %412 = vmatpush1.msra.mxu0 0.0
    %413 = vmatprep.subr.mxu0 0.0
    %414 = vmatpush1.msra.mxu0 0.0
    %415 = vmatprep.subr.mxu0 0.0
    %416 = vmatpush1.msra.mxu0 0.0
    %417 = vmatprep.subr.mxu0 0.0
    %418 = vmatpush1.msra.mxu0 0.0
    %419 = vmatprep.subr.mxu0 0.0
    %420 = vmatpush1.msra.mxu0 0.0
    %421 = vmatprep.subr.mxu0 0.0
    %422 = vmatpush1.msra.mxu0 0.0
    %423 = vmatprep.subr.mxu0 0.0
    %424 = vmatpush1.msra.mxu0 0.0
    %425 = vmatprep.subr.mxu0 0.0
    %426 = vmatpush1.msra.mxu0 0.0
    %427 = vmatprep.mubr.f32.mxu0 0.0
    %428 = vmatmul.mubr.f32.gmra.mrb[0].mxu0 %v61
    %v429 = vpop.f32.mrb[0].mxu0
    %v430 = vadd.f32 0.0, %v429
    %v431 = vpop.f32.mrb[0].mxu0
    %v432 = vadd.f32 0.0, %v431
    %433 = vdwg.mxu0
    %434 = vmatprep.subr.mxu0 %v130
    %435 = vmatpush1.msra.mxu0 %v129
    %436 = vmatprep.subr.mxu0 %v134
    %437 = vmatpush1.msra.mxu0 %v133
    %438 = vmatprep.subr.mxu0 %v138
    %439 = vmatpush1.msra.mxu0 %v137
    %440 = vmatprep.subr.mxu0 %v142
    %441 = vmatpush1.msra.mxu0 %v141
    %442 = vmatprep.subr.mxu0 %v146
    %443 = vmatpush1.msra.mxu0 %v145
    %444 = vmatprep.subr.mxu0 %v150
    %445 = vmatpush1.msra.mxu0 %v149
    %446 = vmatprep.subr.mxu0 %v154
    %447 = vmatpush1.msra.mxu0 %v153
    %448 = vmatprep.subr.mxu0 %v158
    %449 = vmatpush1.msra.mxu0 %v157
    %450 = vmatprep.subr.mxu0 %v162
    %451 = vmatpush1.msra.mxu0 %v161
    %452 = vmatprep.subr.mxu0 %v166
    %453 = vmatpush1.msra.mxu0 %v165
    %454 = vmatprep.subr.mxu0 %v170
    %455 = vmatpush1.msra.mxu0 %v169
    %456 = vmatprep.subr.mxu0 %v174
    %457 = vmatpush1.msra.mxu0 %v173
    %458 = vmatprep.subr.mxu0 %v178
    %459 = vmatpush1.msra.mxu0 %v177
    %460 = vmatprep.subr.mxu0 %v182
    %461 = vmatpush1.msra.mxu0 %v181
    %462 = vmatprep.subr.mxu0 %v186
    %463 = vmatpush1.msra.mxu0 %v185
    %464 = vmatprep.subr.mxu0 %v190
    %465 = vmatpush1.msra.mxu0 %v189
    %466 = vmatprep.subr.mxu0 0.0
    %467 = vmatpush1.msra.mxu0 0.0
    %468 = vmatprep.subr.mxu0 0.0
    %469 = vmatpush1.msra.mxu0 0.0
    %470 = vmatprep.subr.mxu0 0.0
    %471 = vmatpush1.msra.mxu0 0.0
    %472 = vmatprep.subr.mxu0 0.0
    %473 = vmatpush1.msra.mxu0 0.0
    %474 = vmatprep.subr.mxu0 0.0
    %475 = vmatpush1.msra.mxu0 0.0
    %476 = vmatprep.subr.mxu0 0.0
    %477 = vmatpush1.msra.mxu0 0.0
    %478 = vmatprep.subr.mxu0 0.0
    %479 = vmatpush1.msra.mxu0 0.0
    %480 = vmatprep.subr.mxu0 0.0
    %481 = vmatpush1.msra.mxu0 0.0
    %482 = vmatprep.subr.mxu0 0.0
    %483 = vmatpush1.msra.mxu0 0.0
    %484 = vmatprep.subr.mxu0 0.0
    %485 = vmatpush1.msra.mxu0 0.0
    %486 = vmatprep.subr.mxu0 0.0
    %487 = vmatpush1.msra.mxu0 0.0
    %488 = vmatprep.subr.mxu0 0.0
    %489 = vmatpush1.msra.mxu0 0.0
    %490 = vmatprep.subr.mxu0 0.0
    %491 = vmatpush1.msra.mxu0 0.0
    %492 = vmatprep.subr.mxu0 0.0
    %493 = vmatpush1.msra.mxu0 0.0
    %494 = vmatprep.subr.mxu0 0.0
    %495 = vmatpush1.msra.mxu0 0.0
    %496 = vmatprep.subr.mxu0 0.0
    %497 = vmatpush1.msra.mxu0 0.0
    %498 = vmatprep.mubr.f32.mxu0 0.0
    %499 = vmatmul.mubr.f32.gmra.mrb[0].mxu0 %v61
    %v500 = vpop.f32.mrb[0].mxu0
    %v501 = vadd.f32 0.0, %v500
    %v502 = vpop.f32.mrb[0].mxu0
    %v503 = vadd.f32 0.0, %v502
    %504 = vdwg.mxu0
    %v505 = vadd.f32 %v359, %v430
    %v506 = vadd.f32 %v360, %v432
    %v507 = vadd.f32 %v361, %v501
    %v508 = vadd.f32 %v362, %v503
    %v509 = vld [vmem:[%s0 + $0x8] sm:$0xff]
    %510 = vmatprep.subr.mxu0 %v64
    %511 = vmatpush1.msra.mxu0 %v63
    %512 = vmatprep.subr.mxu0 %v68
    %513 = vmatpush1.msra.mxu0 %v67
    %514 = vmatprep.subr.mxu0 %v72
    %515 = vmatpush1.msra.mxu0 %v71
    %516 = vmatprep.subr.mxu0 %v76
    %517 = vmatpush1.msra.mxu0 %v75
    %518 = vmatprep.subr.mxu0 %v80
    %519 = vmatpush1.msra.mxu0 %v79
    %520 = vmatprep.subr.mxu0 %v84
    %521 = vmatpush1.msra.mxu0 %v83
    %522 = vmatprep.subr.mxu0 %v88
    %523 = vmatpush1.msra.mxu0 %v87
    %524 = vmatprep.subr.mxu0 %v92
    %525 = vmatpush1.msra.mxu0 %v91
    %526 = vmatprep.subr.mxu0 %v96
    %527 = vmatpush1.msra.mxu0 %v95
    %528 = vmatprep.subr.mxu0 %v100
    %529 = vmatpush1.msra.mxu0 %v99
    %530 = vmatprep.subr.mxu0 %v104
    %531 = vmatpush1.msra.mxu0 %v103
    %532 = vmatprep.subr.mxu0 %v108
    %533 = vmatpush1.msra.mxu0 %v107
    %534 = vmatprep.subr.mxu0 %v112
    %535 = vmatpush1.msra.mxu0 %v111
    %536 = vmatprep.subr.mxu0 %v116
    %537 = vmatpush1.msra.mxu0 %v115
    %538 = vmatprep.subr.mxu0 %v120
    %539 = vmatpush1.msra.mxu0 %v119
    %540 = vmatprep.subr.mxu0 %v124
    %541 = vmatpush1.msra.mxu0 %v123
    %542 = vmatprep.subr.mxu0 0.0
    %543 = vmatpush1.msra.mxu0 0.0
    %544 = vmatprep.subr.mxu0 0.0
    %545 = vmatpush1.msra.mxu0 0.0
    %546 = vmatprep.subr.mxu0 0.0
    %547 = vmatpush1.msra.mxu0 0.0
    %548 = vmatprep.subr.mxu0 0.0
    %549 = vmatpush1.msra.mxu0 0.0
    %550 = vmatprep.subr.mxu0 0.0
    %551 = vmatpush1.msra.mxu0 0.0
    %552 = vmatprep.subr.mxu0 0.0
    %553 = vmatpush1.msra.mxu0 0.0
    %554 = vmatprep.subr.mxu0 0.0
    %555 = vmatpush1.msra.mxu0 0.0
    %556 = vmatprep.subr.mxu0 0.0
    %557 = vmatpush1.msra.mxu0 0.0
    %558 = vmatprep.subr.mxu0 0.0
    %559 = vmatpush1.msra.mxu0 0.0
    %560 = vmatprep.subr.mxu0 0.0
    %561 = vmatpush1.msra.mxu0 0.0
    %562 = vmatprep.subr.mxu0 0.0
    %563 = vmatpush1.msra.mxu0 0.0
    %564 = vmatprep.subr.mxu0 0.0
    %565 = vmatpush1.msra.mxu0 0.0
    %566 = vmatprep.subr.mxu0 0.0
    %567 = vmatpush1.msra.mxu0 0.0
    %568 = vmatprep.subr.mxu0 0.0
    %569 = vmatpush1.msra.mxu0 0.0
    %570 = vmatprep.subr.mxu0 0.0
    %571 = vmatpush1.msra.mxu0 0.0
    %572 = vmatprep.subr.mxu0 0.0
    %573 = vmatpush1.msra.mxu0 0.0
    %574 = vmatprep.mubr.f32.mxu0 0.0
    %575 = vmatmul.mubr.f32.gmra.mrb[0].mxu0 %v509
    %v576 = vpop.f32.mrb[0].mxu0
    %v577 = vadd.f32 %v196, %v576
    %v578 = vpop.f32.mrb[0].mxu0
    %v579 = vadd.f32 %v200, %v578
    %580 = vdwg.mxu0
    %581 = vmatprep.subr.mxu0 %v66
    %582 = vmatpush1.msra.mxu0 %v65
    %583 = vmatprep.subr.mxu0 %v70
    %584 = vmatpush1.msra.mxu0 %v69
    %585 = vmatprep.subr.mxu0 %v74
    %586 = vmatpush1.msra.mxu0 %v73
    %587 = vmatprep.subr.mxu0 %v78
    %588 = vmatpush1.msra.mxu0 %v77
    %589 = vmatprep.subr.mxu0 %v82
    %590 = vmatpush1.msra.mxu0 %v81
    %591 = vmatprep.subr.mxu0 %v86
    %592 = vmatpush1.msra.mxu0 %v85
    %593 = vmatprep.subr.mxu0 %v90
    %594 = vmatpush1.msra.mxu0 %v89
    %595 = vmatprep.subr.mxu0 %v94
    %596 = vmatpush1.msra.mxu0 %v93
    %597 = vmatprep.subr.mxu0 %v98
    %598 = vmatpush1.msra.mxu0 %v97
    %599 = vmatprep.subr.mxu0 %v102
    %600 = vmatpush1.msra.mxu0 %v101
    %601 = vmatprep.subr.mxu0 %v106
    %602 = vmatpush1.msra.mxu0 %v105
    %603 = vmatprep.subr.mxu0 %v110
    %604 = vmatpush1.msra.mxu0 %v109
    %605 = vmatprep.subr.mxu0 %v114
    %606 = vmatpush1.msra.mxu0 %v113
    %607 = vmatprep.subr.mxu0 %v118
    %608 = vmatpush1.msra.mxu0 %v117
    %609 = vmatprep.subr.mxu0 %v122
    %610 = vmatpush1.msra.mxu0 %v121
    %611 = vmatprep.subr.mxu0 %v126
    %612 = vmatpush1.msra.mxu0 %v125
    %613 = vmatprep.subr.mxu0 0.0
    %614 = vmatpush1.msra.mxu0 0.0
    %615 = vmatprep.subr.mxu0 0.0
    %616 = vmatpush1.msra.mxu0 0.0
    %617 = vmatprep.subr.mxu0 0.0
    %618 = vmatpush1.msra.mxu0 0.0
    %619 = vmatprep.subr.mxu0 0.0
    %620 = vmatpush1.msra.mxu0 0.0
    %621 = vmatprep.subr.mxu0 0.0
    %622 = vmatpush1.msra.mxu0 0.0
    %623 = vmatprep.subr.mxu0 0.0
    %624 = vmatpush1.msra.mxu0 0.0
    %625 = vmatprep.subr.mxu0 0.0
    %626 = vmatpush1.msra.mxu0 0.0
    %627 = vmatprep.subr.mxu0 0.0
    %628 = vmatpush1.msra.mxu0 0.0
    %629 = vmatprep.subr.mxu0 0.0
    %630 = vmatpush1.msra.mxu0 0.0
    %631 = vmatprep.subr.mxu0 0.0
    %632 = vmatpush1.msra.mxu0 0.0
    %633 = vmatprep.subr.mxu0 0.0
    %634 = vmatpush1.msra.mxu0 0.0
    %635 = vmatprep.subr.mxu0 0.0
    %636 = vmatpush1.msra.mxu0 0.0
    %637 = vmatprep.subr.mxu0 0.0
    %638 = vmatpush1.msra.mxu0 0.0
    %639 = vmatprep.subr.mxu0 0.0
    %640 = vmatpush1.msra.mxu0 0.0
    %641 = vmatprep.subr.mxu0 0.0
    %642 = vmatpush1.msra.mxu0 0.0
    %643 = vmatprep.subr.mxu0 0.0
    %644 = vmatpush1.msra.mxu0 0.0
    %645 = vmatprep.mubr.f32.mxu0 0.0
    %646 = vmatmul.mubr.f32.gmra.mrb[0].mxu0 %v509
    %v647 = vpop.f32.mrb[0].mxu0
    %v648 = vadd.f32 %v204, %v647
    %v649 = vpop.f32.mrb[0].mxu0
    %v650 = vadd.f32 %v208, %v649
    %651 = vdwg.mxu0
    %s652 = scalar_lea.vmem [#allocation2], 32
    %653 = vst [vmem:[%s652] sm:$0xff] %v577
    %654 = vst [vmem:[%s652 + $0x8] sm:$0xff] %v579
    %655 = vst [vmem:[%s652 + $0x10] sm:$0xff] %v648
    %656 = vst [vmem:[%s652 + $0x18] sm:$0xff] %v650
    %v657 = vmul.f32 %v505, 0.5
    %v658 = vtanh.pop %v657
    %v659 = vadd.f32 %v658, 1.0
    %v660 = vmul.f32 %v659, 0.5
    %v661 = vmul.f32 %v506, 0.5
    %v662 = vtanh.pop %v661
    %v663 = vadd.f32 %v662, 1.0
    %v664 = vmul.f32 %v663, 0.5
    %v665 = vtanh.pop %v507
    %v666 = vmul.f32 %v508, 0.5
    %v667 = vtanh.pop %v666
    %v668 = vadd.f32 %v667, 1.0
    %v669 = vmul.f32 %v668, 0.5
    %v670 = vmul.f32 %v664, %v62
    %v671 = vmul.f32 %v660, %v665
    %v672 = vadd.f32 %v670, %v671
    %v673 = vtanh.pop %v672
    %v674 = vmul.f32 %v669, %v673
    %675 = vst [vmem:[#allocation3] sm:$0xff] %v674
    %v676 = vld [vmem:[%s652] sm:$0xff]
    %v677 = vld [vmem:[%s652 + $0x8] sm:$0xff]
    %v678 = vld [vmem:[%s652 + $0x10] sm:$0xff]
    %v679 = vld [vmem:[%s652 + $0x18] sm:$0xff]
    %680 = vmatprep.subr.mxu0 %v128
    %681 = vmatpush1.msra.mxu0 %v127
    %682 = vmatprep.subr.mxu0 %v132
    %683 = vmatpush1.msra.mxu0 %v131
    %684 = vmatprep.subr.mxu0 %v136
    %685 = vmatpush1.msra.mxu0 %v135
    %686 = vmatprep.subr.mxu0 %v140
    %687 = vmatpush1.msra.mxu0 %v139
    %688 = vmatprep.subr.mxu0 %v144
    %689 = vmatpush1.msra.mxu0 %v143
    %690 = vmatprep.subr.mxu0 %v148
    %691 = vmatpush1.msra.mxu0 %v147
    %692 = vmatprep.subr.mxu0 %v152
    %693 = vmatpush1.msra.mxu0 %v151
    %694 = vmatprep.subr.mxu0 %v156
    %695 = vmatpush1.msra.mxu0 %v155
    %696 = vmatprep.subr.mxu0 %v160
    %697 = vmatpush1.msra.mxu0 %v159
    %698 = vmatprep.subr.mxu0 %v164
    %699 = vmatpush1.msra.mxu0 %v163
    %700 = vmatprep.subr.mxu0 %v168
    %701 = vmatpush1.msra.mxu0 %v167
    %702 = vmatprep.subr.mxu0 %v172
    %703 = vmatpush1.msra.mxu0 %v171
    %704 = vmatprep.subr.mxu0 %v176
    %705 = vmatpush1.msra.mxu0 %v175
    %706 = vmatprep.subr.mxu0 %v180
    %707 = vmatpush1.msra.mxu0 %v179
    %708 = vmatprep.subr.mxu0 %v184
    %709 = vmatpush1.msra.mxu0 %v183
    %710 = vmatprep.subr.mxu0 %v188
    %711 = vmatpush1.msra.mxu0 %v187
    %712 = vmatprep.subr.mxu0 0.0
    %713 = vmatpush1.msra.mxu0 0.0
    %714 = vmatprep.subr.mxu0 0.0
    %715 = vmatpush1.msra.mxu0 0.0
    %716 = vmatprep.subr.mxu0 0.0
    %717 = vmatpush1.msra.mxu0 0.0
    %718 = vmatprep.subr.mxu0 0.0
    %719 = vmatpush1.msra.mxu0 0.0
    %720 = vmatprep.subr.mxu0 0.0
    %721 = vmatpush1.msra.mxu0 0.0
    %722 = vmatprep.subr.mxu0 0.0
    %723 = vmatpush1.msra.mxu0 0.0
    %724 = vmatprep.subr.mxu0 0.0
    %725 = vmatpush1.msra.mxu0 0.0
    %726 = vmatprep.subr.mxu0 0.0
    %727 = vmatpush1.msra.mxu0 0.0
    %728 = vmatprep.subr.mxu0 0.0
    %729 = vmatpush1.msra.mxu0 0.0
    %730 = vmatprep.subr.mxu0 0.0
    %731 = vmatpush1.msra.mxu0 0.0
    %732 = vmatprep.subr.mxu0 0.0
    %733 = vmatpush1.msra.mxu0 0.0
    %734 = vmatprep.subr.mxu0 0.0
    %735 = vmatpush1.msra.mxu0 0.0
    %736 = vmatprep.subr.mxu0 0.0
    %737 = vmatpush1.msra.mxu0 0.0
    %738 = vmatprep.subr.mxu0 0.0
    %739 = vmatpush1.msra.mxu0 0.0
    %740 = vmatprep.subr.mxu0 0.0
    %741 = vmatpush1.msra.mxu0 0.0
    %742 = vmatprep.subr.mxu0 0.0
    %743 = vmatpush1.msra.mxu0 0.0
    %744 = vmatprep.mubr.f32.mxu0 0.0
    %745 = vmatmul.mubr.f32.gmra.mrb[0].mxu0 %v674
    %v746 = vpop.f32.mrb[0].mxu0
    %v747 = vadd.f32 0.0, %v746
    %v748 = vpop.f32.mrb[0].mxu0
    %v749 = vadd.f32 0.0, %v748
    %750 = vdwg.mxu0
    %751 = vmatprep.subr.mxu0 %v130
    %752 = vmatpush1.msra.mxu0 %v129
    %753 = vmatprep.subr.mxu0 %v134
    %754 = vmatpush1.msra.mxu0 %v133
    %755 = vmatprep.subr.mxu0 %v138
    %756 = vmatpush1.msra.mxu0 %v137
    %757 = vmatprep.subr.mxu0 %v142
    %758 = vmatpush1.msra.mxu0 %v141
    %759 = vmatprep.subr.mxu0 %v146
    %760 = vmatpush1.msra.mxu0 %v145
    %761 = vmatprep.subr.mxu0 %v150
    %762 = vmatpush1.msra.mxu0 %v149
    %763 = vmatprep.subr.mxu0 %v154
    %764 = vmatpush1.msra.mxu0 %v153
    %765 = vmatprep.subr.mxu0 %v158
    %766 = vmatpush1.msra.mxu0 %v157
    %767 = vmatprep.subr.mxu0 %v162
    %768 = vmatpush1.msra.mxu0 %v161
    %769 = vmatprep.subr.mxu0 %v166
    %770 = vmatpush1.msra.mxu0 %v165
    %771 = vmatprep.subr.mxu0 %v170
    %772 = vmatpush1.msra.mxu0 %v169
    %773 = vmatprep.subr.mxu0 %v174
    %774 = vmatpush1.msra.mxu0 %v173
    %775 = vmatprep.subr.mxu0 %v178
    %776 = vmatpush1.msra.mxu0 %v177
    %777 = vmatprep.subr.mxu0 %v182
    %778 = vmatpush1.msra.mxu0 %v181
    %779 = vmatprep.subr.mxu0 %v186
    %780 = vmatpush1.msra.mxu0 %v185
    %781 = vmatprep.subr.mxu0 %v190
    %782 = vmatpush1.msra.mxu0 %v189
    %783 = vmatprep.subr.mxu0 0.0
    %784 = vmatpush1.msra.mxu0 0.0
    %785 = vmatprep.subr.mxu0 0.0
    %786 = vmatpush1.msra.mxu0 0.0
    %787 = vmatprep.subr.mxu0 0.0
    %788 = vmatpush1.msra.mxu0 0.0
    %789 = vmatprep.subr.mxu0 0.0
    %790 = vmatpush1.msra.mxu0 0.0
    %791 = vmatprep.subr.mxu0 0.0
    %792 = vmatpush1.msra.mxu0 0.0
    %793 = vmatprep.subr.mxu0 0.0
    %794 = vmatpush1.msra.mxu0 0.0
    %795 = vmatprep.subr.mxu0 0.0
    %796 = vmatpush1.msra.mxu0 0.0
    %797 = vmatprep.subr.mxu0 0.0
    %798 = vmatpush1.msra.mxu0 0.0
    %799 = vmatprep.subr.mxu0 0.0
    %800 = vmatpush1.msra.mxu0 0.0
    %801 = vmatprep.subr.mxu0 0.0
    %802 = vmatpush1.msra.mxu0 0.0
    %803 = vmatprep.subr.mxu0 0.0
    %804 = vmatpush1.msra.mxu0 0.0
    %805 = vmatprep.subr.mxu0 0.0
    %806 = vmatpush1.msra.mxu0 0.0
    %807 = vmatprep.subr.mxu0 0.0
    %808 = vmatpush1.msra.mxu0 0.0
    %809 = vmatprep.subr.mxu0 0.0
    %810 = vmatpush1.msra.mxu0 0.0
    %811 = vmatprep.subr.mxu0 0.0
    %812 = vmatpush1.msra.mxu0 0.0
    %813 = vmatprep.subr.mxu0 0.0
    %814 = vmatpush1.msra.mxu0 0.0
    %815 = vmatprep.mubr.f32.mxu0 0.0
    %816 = vmatmul.mubr.f32.gmra.mrb[0].mxu0 %v674
    %v817 = vpop.f32.mrb[0].mxu0
    %v818 = vadd.f32 0.0, %v817
    %v819 = vpop.f32.mrb[0].mxu0
    %v820 = vadd.f32 0.0, %v819
    %821 = vdwg.mxu0
    %v822 = vadd.f32 %v676, %v747
    %v823 = vadd.f32 %v677, %v749
    %v824 = vadd.f32 %v678, %v818
    %v825 = vadd.f32 %v679, %v820
    %v826 = vld [vmem:[%s0 + $0x10] sm:$0xff]
    %827 = vmatprep.subr.mxu0 %v64
    %828 = vmatpush1.msra.mxu0 %v63
    %829 = vmatprep.subr.mxu0 %v68
    %830 = vmatpush1.msra.mxu0 %v67
    %831 = vmatprep.subr.mxu0 %v72
    %832 = vmatpush1.msra.mxu0 %v71
    %833 = vmatprep.subr.mxu0 %v76
    %834 = vmatpush1.msra.mxu0 %v75
    %835 = vmatprep.subr.mxu0 %v80
    %836 = vmatpush1.msra.mxu0 %v79
    %837 = vmatprep.subr.mxu0 %v84
    %838 = vmatpush1.msra.mxu0 %v83
    %839 = vmatprep.subr.mxu0 %v88
    %840 = vmatpush1.msra.mxu0 %v87
    %841 = vmatprep.subr.mxu0 %v92
    %842 = vmatpush1.msra.mxu0 %v91
    %843 = vmatprep.subr.mxu0 %v96
    %844 = vmatpush1.msra.mxu0 %v95
    %845 = vmatprep.subr.mxu0 %v100
    %846 = vmatpush1.msra.mxu0 %v99
    %847 = vmatprep.subr.mxu0 %v104
    %848 = vmatpush1.msra.mxu0 %v103
    %849 = vmatprep.subr.mxu0 %v108
    %850 = vmatpush1.msra.mxu0 %v107
    %851 = vmatprep.subr.mxu0 %v112
    %852 = vmatpush1.msra.mxu0 %v111
    %853 = vmatprep.subr.mxu0 %v116
    %854 = vmatpush1.msra.mxu0 %v115
    %855 = vmatprep.subr.mxu0 %v120
    %856 = vmatpush1.msra.mxu0 %v119
    %857 = vmatprep.subr.mxu0 %v124
    %858 = vmatpush1.msra.mxu0 %v123
    %859 = vmatprep.subr.mxu0 0.0
    %860 = vmatpush1.msra.mxu0 0.0
    %861 = vmatprep.subr.mxu0 0.0
    %862 = vmatpush1.msra.mxu0 0.0
    %863 = vmatprep.subr.mxu0 0.0
    %864 = vmatpush1.msra.mxu0 0.0
    %865 = vmatprep.subr.mxu0 0.0
    %866 = vmatpush1.msra.mxu0 0.0
    %867 = vmatprep.subr.mxu0 0.0
    %868 = vmatpush1.msra.mxu0 0.0
    %869 = vmatprep.subr.mxu0 0.0
    %870 = vmatpush1.msra.mxu0 0.0
    %871 = vmatprep.subr.mxu0 0.0
    %872 = vmatpush1.msra.mxu0 0.0
    %873 = vmatprep.subr.mxu0 0.0
    %874 = vmatpush1.msra.mxu0 0.0
    %875 = vmatprep.subr.mxu0 0.0
    %876 = vmatpush1.msra.mxu0 0.0
    %877 = vmatprep.subr.mxu0 0.0
    %878 = vmatpush1.msra.mxu0 0.0
    %879 = vmatprep.subr.mxu0 0.0
    %880 = vmatpush1.msra.mxu0 0.0
    %881 = vmatprep.subr.mxu0 0.0
    %882 = vmatpush1.msra.mxu0 0.0
    %883 = vmatprep.subr.mxu0 0.0
    %884 = vmatpush1.msra.mxu0 0.0
    %885 = vmatprep.subr.mxu0 0.0
    %886 = vmatpush1.msra.mxu0 0.0
    %887 = vmatprep.subr.mxu0 0.0
    %888 = vmatpush1.msra.mxu0 0.0
    %889 = vmatprep.subr.mxu0 0.0
    %890 = vmatpush1.msra.mxu0 0.0
    %891 = vmatprep.mubr.f32.mxu0 0.0
    %892 = vmatmul.mubr.f32.gmra.mrb[0].mxu0 %v826
    %v893 = vpop.f32.mrb[0].mxu0
    %v894 = vadd.f32 %v196, %v893
    %v895 = vpop.f32.mrb[0].mxu0
    %v896 = vadd.f32 %v200, %v895
    %897 = vdwg.mxu0
    %898 = vmatprep.subr.mxu0 %v66
    %899 = vmatpush1.msra.mxu0 %v65
    %900 = vmatprep.subr.mxu0 %v70
    %901 = vmatpush1.msra.mxu0 %v69
    %902 = vmatprep.subr.mxu0 %v74
    %903 = vmatpush1.msra.mxu0 %v73
    %904 = vmatprep.subr.mxu0 %v78
    %905 = vmatpush1.msra.mxu0 %v77
    %906 = vmatprep.subr.mxu0 %v82
    %907 = vmatpush1.msra.mxu0 %v81
    %908 = vmatprep.subr.mxu0 %v86
    %909 = vmatpush1.msra.mxu0 %v85
    %910 = vmatprep.subr.mxu0 %v90
    %911 = vmatpush1.msra.mxu0 %v89
    %912 = vmatprep.subr.mxu0 %v94
    %913 = vmatpush1.msra.mxu0 %v93
    %914 = vmatprep.subr.mxu0 %v98
    %915 = vmatpush1.msra.mxu0 %v97
    %916 = vmatprep.subr.mxu0 %v102
    %917 = vmatpush1.msra.mxu0 %v101
    %918 = vmatprep.subr.mxu0 %v106
    %919 = vmatpush1.msra.mxu0 %v105
    %920 = vmatprep.subr.mxu0 %v110
    %921 = vmatpush1.msra.mxu0 %v109
    %922 = vmatprep.subr.mxu0 %v114
    %923 = vmatpush1.msra.mxu0 %v113
    %924 = vmatprep.subr.mxu0 %v118
    %925 = vmatpush1.msra.mxu0 %v117
    %926 = vmatprep.subr.mxu0 %v122
    %927 = vmatpush1.msra.mxu0 %v121
    %928 = vmatprep.subr.mxu0 %v126
    %929 = vmatpush1.msra.mxu0 %v125
    %930 = vmatprep.subr.mxu0 0.0
    %931 = vmatpush1.msra.mxu0 0.0
    %932 = vmatprep.subr.mxu0 0.0
    %933 = vmatpush1.msra.mxu0 0.0
    %934 = vmatprep.subr.mxu0 0.0
    %935 = vmatpush1.msra.mxu0 0.0
    %936 = vmatprep.subr.mxu0 0.0
    %937 = vmatpush1.msra.mxu0 0.0
    %938 = vmatprep.subr.mxu0 0.0
    %939 = vmatpush1.msra.mxu0 0.0
    %940 = vmatprep.subr.mxu0 0.0
    %941 = vmatpush1.msra.mxu0 0.0
    %942 = vmatprep.subr.mxu0 0.0
    %943 = vmatpush1.msra.mxu0 0.0
    %944 = vmatprep.subr.mxu0 0.0
    %945 = vmatpush1.msra.mxu0 0.0
    %946 = vmatprep.subr.mxu0 0.0
    %947 = vmatpush1.msra.mxu0 0.0
    %948 = vmatprep.subr.mxu0 0.0
    %949 = vmatpush1.msra.mxu0 0.0
    %950 = vmatprep.subr.mxu0 0.0
    %951 = vmatpush1.msra.mxu0 0.0
    %952 = vmatprep.subr.mxu0 0.0
    %953 = vmatpush1.msra.mxu0 0.0
    %954 = vmatprep.subr.mxu0 0.0
    %955 = vmatpush1.msra.mxu0 0.0
    %956 = vmatprep.subr.mxu0 0.0
    %957 = vmatpush1.msra.mxu0 0.0
    %958 = vmatprep.subr.mxu0 0.0
    %959 = vmatpush1.msra.mxu0 0.0
    %960 = vmatprep.subr.mxu0 0.0
    %961 = vmatpush1.msra.mxu0 0.0
    %962 = vmatprep.mubr.f32.mxu0 0.0
    %963 = vmatmul.mubr.f32.gmra.mrb[0].mxu0 %v826
    %v964 = vpop.f32.mrb[0].mxu0
    %v965 = vadd.f32 %v204, %v964
    %v966 = vpop.f32.mrb[0].mxu0
    %v967 = vadd.f32 %v208, %v966
    %968 = vdwg.mxu0
    %969 = vst [vmem:[#allocation2] sm:$0xff] %v894
    %970 = vst [vmem:[#allocation2 + $0x8] sm:$0xff] %v896
    %971 = vst [vmem:[#allocation2 + $0x10] sm:$0xff] %v965
    %972 = vst [vmem:[#allocation2 + $0x18] sm:$0xff] %v967
    %v973 = vmul.f32 %v822, 0.5
    %v974 = vtanh.pop %v973
    %v975 = vadd.f32 %v974, 1.0
    %v976 = vmul.f32 %v975, 0.5
    %v977 = vmul.f32 %v823, 0.5
    %v978 = vtanh.pop %v977
    %v979 = vadd.f32 %v978, 1.0
    %v980 = vmul.f32 %v979, 0.5
    %v981 = vtanh.pop %v824
    %v982 = vmul.f32 %v825, 0.5
    %v983 = vtanh.pop %v982
    %v984 = vadd.f32 %v983, 1.0
    %v985 = vmul.f32 %v984, 0.5
    %v986 = vmul.f32 %v980, %v672
    %v987 = vmul.f32 %v976, %v981
    %v988 = vadd.f32 %v986, %v987
    %v989 = vtanh.pop %v988
    %v990 = vmul.f32 %v985, %v989
    %991 = vst [vmem:[#allocation3 + $0x8] sm:$0xff] %v990
    %v992 = vld [vmem:[#allocation2] sm:$0xff]
    %v993 = vld [vmem:[#allocation2 + $0x8] sm:$0xff]
    %v994 = vld [vmem:[#allocation2 + $0x10] sm:$0xff]
    %v995 = vld [vmem:[#allocation2 + $0x18] sm:$0xff]
    %996 = vmatprep.subr.mxu0 %v128
    %997 = vmatpush1.msra.mxu0 %v127
    %998 = vmatprep.subr.mxu0 %v132
    %999 = vmatpush1.msra.mxu0 %v131
    %1000 = vmatprep.subr.mxu0 %v136
    %1001 = vmatpush1.msra.mxu0 %v135
    %1002 = vmatprep.subr.mxu0 %v140
    %1003 = vmatpush1.msra.mxu0 %v139
    %1004 = vmatprep.subr.mxu0 %v144
    %1005 = vmatpush1.msra.mxu0 %v143
    %1006 = vmatprep.subr.mxu0 %v148
    %1007 = vmatpush1.msra.mxu0 %v147
    %1008 = vmatprep.subr.mxu0 %v152
    %1009 = vmatpush1.msra.mxu0 %v151
    %1010 = vmatprep.subr.mxu0 %v156
    %1011 = vmatpush1.msra.mxu0 %v155
    %1012 = vmatprep.subr.mxu0 %v160
    %1013 = vmatpush1.msra.mxu0 %v159
    %1014 = vmatprep.subr.mxu0 %v164
    %1015 = vmatpush1.msra.mxu0 %v163
    %1016 = vmatprep.subr.mxu0 %v168
    %1017 = vmatpush1.msra.mxu0 %v167
    %1018 = vmatprep.subr.mxu0 %v172
    %1019 = vmatpush1.msra.mxu0 %v171
    %1020 = vmatprep.subr.mxu0 %v176
    %1021 = vmatpush1.msra.mxu0 %v175
    %1022 = vmatprep.subr.mxu0 %v180
    %1023 = vmatpush1.msra.mxu0 %v179
    %1024 = vmatprep.subr.mxu0 %v184
    %1025 = vmatpush1.msra.mxu0 %v183
    %1026 = vmatprep.subr.mxu0 %v188
    %1027 = vmatpush1.msra.mxu0 %v187
    %1028 = vmatprep.subr.mxu0 0.0
    %1029 = vmatpush1.msra.mxu0 0.0
    %1030 = vmatprep.subr.mxu0 0.0
    %1031 = vmatpush1.msra.mxu0 0.0
    %1032 = vmatprep.subr.mxu0 0.0
    %1033 = vmatpush1.msra.mxu0 0.0
    %1034 = vmatprep.subr.mxu0 0.0
    %1035 = vmatpush1.msra.mxu0 0.0
    %1036 = vmatprep.subr.mxu0 0.0
    %1037 = vmatpush1.msra.mxu0 0.0
    %1038 = vmatprep.subr.mxu0 0.0
    %1039 = vmatpush1.msra.mxu0 0.0
    %1040 = vmatprep.subr.mxu0 0.0
    %1041 = vmatpush1.msra.mxu0 0.0
    %1042 = vmatprep.subr.mxu0 0.0
    %1043 = vmatpush1.msra.mxu0 0.0
    %1044 = vmatprep.subr.mxu0 0.0
    %1045 = vmatpush1.msra.mxu0 0.0
    %1046 = vmatprep.subr.mxu0 0.0
    %1047 = vmatpush1.msra.mxu0 0.0
    %1048 = vmatprep.subr.mxu0 0.0
    %1049 = vmatpush1.msra.mxu0 0.0
    %1050 = vmatprep.subr.mxu0 0.0
    %1051 = vmatpush1.msra.mxu0 0.0
    %1052 = vmatprep.subr.mxu0 0.0
    %1053 = vmatpush1.msra.mxu0 0.0
    %1054 = vmatprep.subr.mxu0 0.0
    %1055 = vmatpush1.msra.mxu0 0.0
    %1056 = vmatprep.subr.mxu0 0.0
    %1057 = vmatpush1.msra.mxu0 0.0
    %1058 = vmatprep.subr.mxu0 0.0
    %1059 = vmatpush1.msra.mxu0 0.0
    %1060 = vmatprep.mubr.f32.mxu0 0.0
    %1061 = vmatmul.mubr.f32.gmra.mrb[0].mxu0 %v990
    %v1062 = vpop.f32.mrb[0].mxu0
    %v1063 = vadd.f32 0.0, %v1062
    %v1064 = vpop.f32.mrb[0].mxu0
    %v1065 = vadd.f32 0.0, %v1064
    %1066 = vdwg.mxu0
    %1067 = vmatprep.subr.mxu0 %v130
    %1068 = vmatpush1.msra.mxu0 %v129
    %1069 = vmatprep.subr.mxu0 %v134
    %1070 = vmatpush1.msra.mxu0 %v133
    %1071 = vmatprep.subr.mxu0 %v138
    %1072 = vmatpush1.msra.mxu0 %v137
    %1073 = vmatprep.subr.mxu0 %v142
    %1074 = vmatpush1.msra.mxu0 %v141
    %1075 = vmatprep.subr.mxu0 %v146
    %1076 = vmatpush1.msra.mxu0 %v145
    %1077 = vmatprep.subr.mxu0 %v150
    %1078 = vmatpush1.msra.mxu0 %v149
    %1079 = vmatprep.subr.mxu0 %v154
    %1080 = vmatpush1.msra.mxu0 %v153
    %1081 = vmatprep.subr.mxu0 %v158
    %1082 = vmatpush1.msra.mxu0 %v157
    %1083 = vmatprep.subr.mxu0 %v162
    %1084 = vmatpush1.msra.mxu0 %v161
    %1085 = vmatprep.subr.mxu0 %v166
    %1086 = vmatpush1.msra.mxu0 %v165
    %1087 = vmatprep.subr.mxu0 %v170
    %1088 = vmatpush1.msra.mxu0 %v169
    %1089 = vmatprep.subr.mxu0 %v174
    %1090 = vmatpush1.msra.mxu0 %v173
    %1091 = vmatprep.subr.mxu0 %v178
    %1092 = vmatpush1.msra.mxu0 %v177
    %1093 = vmatprep.subr.mxu0 %v182
    %1094 = vmatpush1.msra.mxu0 %v181
    %1095 = vmatprep.subr.mxu0 %v186
    %1096 = vmatpush1.msra.mxu0 %v185
    %1097 = vmatprep.subr.mxu0 %v190
    %1098 = vmatpush1.msra.mxu0 %v189
    %1099 = vmatprep.subr.mxu0 0.0
    %1100 = vmatpush1.msra.mxu0 0.0
    %1101 = vmatprep.subr.mxu0 0.0
    %1102 = vmatpush1.msra.mxu0 0.0
    %1103 = vmatprep.subr.mxu0 0.0
    %1104 = vmatpush1.msra.mxu0 0.0
    %1105 = vmatprep.subr.mxu0 0.0
    %1106 = vmatpush1.msra.mxu0 0.0
    %1107 = vmatprep.subr.mxu0 0.0
    %1108 = vmatpush1.msra.mxu0 0.0
    %1109 = vmatprep.subr.mxu0 0.0
    %1110 = vmatpush1.msra.mxu0 0.0
    %1111 = vmatprep.subr.mxu0 0.0
    %1112 = vmatpush1.msra.mxu0 0.0
    %1113 = vmatprep.subr.mxu0 0.0
    %1114 = vmatpush1.msra.mxu0 0.0
    %1115 = vmatprep.subr.mxu0 0.0
    %1116 = vmatpush1.msra.mxu0 0.0
    %1117 = vmatprep.subr.mxu0 0.0
    %1118 = vmatpush1.msra.mxu0 0.0
    %1119 = vmatprep.subr.mxu0 0.0
    %1120 = vmatpush1.msra.mxu0 0.0
    %1121 = vmatprep.subr.mxu0 0.0
    %1122 = vmatpush1.msra.mxu0 0.0
    %1123 = vmatprep.subr.mxu0 0.0
    %1124 = vmatpush1.msra.mxu0 0.0
    %1125 = vmatprep.subr.mxu0 0.0
    %1126 = vmatpush1.msra.mxu0 0.0
    %1127 = vmatprep.subr.mxu0 0.0
    %1128 = vmatpush1.msra.mxu0 0.0
    %1129 = vmatprep.subr.mxu0 0.0
    %1130 = vmatpush1.msra.mxu0 0.0
    %1131 = vmatprep.mubr.f32.mxu0 0.0
    %1132 = vmatmul.mubr.f32.gmra.mrb[0].mxu0 %v990
    %v1133 = vpop.f32.mrb[0].mxu0
    %v1134 = vadd.f32 0.0, %v1133
    %v1135 = vpop.f32.mrb[0].mxu0
    %v1136 = vadd.f32 0.0, %v1135
    %1137 = vdwg.mxu0
    %v1138 = vadd.f32 %v992, %v1063
    %v1139 = vadd.f32 %v993, %v1065
    %v1140 = vadd.f32 %v994, %v1134
    %v1141 = vadd.f32 %v995, %v1136
    %v1142 = vld [vmem:[%s0 + $0x18] sm:$0xff]
    %1143 = vmatprep.subr.mxu0 %v64
    %1144 = vmatpush1.msra.mxu0 %v63
    %1145 = vmatprep.subr.mxu0 %v68
    %1146 = vmatpush1.msra.mxu0 %v67
    %1147 = vmatprep.subr.mxu0 %v72
    %1148 = vmatpush1.msra.mxu0 %v71
    %1149 = vmatprep.subr.mxu0 %v76
    %1150 = vmatpush1.msra.mxu0 %v75
    %1151 = vmatprep.subr.mxu0 %v80
    %1152 = vmatpush1.msra.mxu0 %v79
    %1153 = vmatprep.subr.mxu0 %v84
    %1154 = vmatpush1.msra.mxu0 %v83
    %1155 = vmatprep.subr.mxu0 %v88
    %1156 = vmatpush1.msra.mxu0 %v87
    %1157 = vmatprep.subr.mxu0 %v92
    %1158 = vmatpush1.msra.mxu0 %v91
    %1159 = vmatprep.subr.mxu0 %v96
    %1160 = vmatpush1.msra.mxu0 %v95
    %1161 = vmatprep.subr.mxu0 %v100
    %1162 = vmatpush1.msra.mxu0 %v99
    %1163 = vmatprep.subr.mxu0 %v104
    %1164 = vmatpush1.msra.mxu0 %v103
    %1165 = vmatprep.subr.mxu0 %v108
    %1166 = vmatpush1.msra.mxu0 %v107
    %1167 = vmatprep.subr.mxu0 %v112
    %1168 = vmatpush1.msra.mxu0 %v111
    %1169 = vmatprep.subr.mxu0 %v116
    %1170 = vmatpush1.msra.mxu0 %v115
    %1171 = vmatprep.subr.mxu0 %v120
    %1172 = vmatpush1.msra.mxu0 %v119
    %1173 = vmatprep.subr.mxu0 %v124
    %1174 = vmatpush1.msra.mxu0 %v123
    %1175 = vmatprep.subr.mxu0 0.0
    %1176 = vmatpush1.msra.mxu0 0.0
    %1177 = vmatprep.subr.mxu0 0.0
    %1178 = vmatpush1.msra.mxu0 0.0
    %1179 = vmatprep.subr.mxu0 0.0
    %1180 = vmatpush1.msra.mxu0 0.0
    %1181 = vmatprep.subr.mxu0 0.0
    %1182 = vmatpush1.msra.mxu0 0.0
    %1183 = vmatprep.subr.mxu0 0.0
    %1184 = vmatpush1.msra.mxu0 0.0
    %1185 = vmatprep.subr.mxu0 0.0
    %1186 = vmatpush1.msra.mxu0 0.0
    %1187 = vmatprep.subr.mxu0 0.0
    %1188 = vmatpush1.msra.mxu0 0.0
    %1189 = vmatprep.subr.mxu0 0.0
    %1190 = vmatpush1.msra.mxu0 0.0
    %1191 = vmatprep.subr.mxu0 0.0
    %1192 = vmatpush1.msra.mxu0 0.0
    %1193 = vmatprep.subr.mxu0 0.0
    %1194 = vmatpush1.msra.mxu0 0.0
    %1195 = vmatprep.subr.mxu0 0.0
    %1196 = vmatpush1.msra.mxu0 0.0
    %1197 = vmatprep.subr.mxu0 0.0
    %1198 = vmatpush1.msra.mxu0 0.0
    %1199 = vmatprep.subr.mxu0 0.0
    %1200 = vmatpush1.msra.mxu0 0.0
    %1201 = vmatprep.subr.mxu0 0.0
    %1202 = vmatpush1.msra.mxu0 0.0
    %1203 = vmatprep.subr.mxu0 0.0
    %1204 = vmatpush1.msra.mxu0 0.0
    %1205 = vmatprep.subr.mxu0 0.0
    %1206 = vmatpush1.msra.mxu0 0.0
    %1207 = vmatprep.mubr.f32.mxu0 0.0
    %1208 = vmatmul.mubr.f32.gmra.mrb[0].mxu0 %v1142
    %v1209 = vpop.f32.mrb[0].mxu0
    %v1210 = vadd.f32 %v196, %v1209
    %v1211 = vpop.f32.mrb[0].mxu0
    %v1212 = vadd.f32 %v200, %v1211
    %1213 = vdwg.mxu0
    %1214 = vmatprep.subr.mxu0 %v66
    %1215 = vmatpush1.msra.mxu0 %v65
    %1216 = vmatprep.subr.mxu0 %v70
    %1217 = vmatpush1.msra.mxu0 %v69
    %1218 = vmatprep.subr.mxu0 %v74
    %1219 = vmatpush1.msra.mxu0 %v73
    %1220 = vmatprep.subr.mxu0 %v78
    %1221 = vmatpush1.msra.mxu0 %v77
    %1222 = vmatprep.subr.mxu0 %v82
    %1223 = vmatpush1.msra.mxu0 %v81
    %1224 = vmatprep.subr.mxu0 %v86
    %1225 = vmatpush1.msra.mxu0 %v85
    %1226 = vmatprep.subr.mxu0 %v90
    %1227 = vmatpush1.msra.mxu0 %v89
    %1228 = vmatprep.subr.mxu0 %v94
    %1229 = vmatpush1.msra.mxu0 %v93
    %1230 = vmatprep.subr.mxu0 %v98
    %1231 = vmatpush1.msra.mxu0 %v97
    %1232 = vmatprep.subr.mxu0 %v102
    %1233 = vmatpush1.msra.mxu0 %v101
    %1234 = vmatprep.subr.mxu0 %v106
    %1235 = vmatpush1.msra.mxu0 %v105
    %1236 = vmatprep.subr.mxu0 %v110
    %1237 = vmatpush1.msra.mxu0 %v109
    %1238 = vmatprep.subr.mxu0 %v114
    %1239 = vmatpush1.msra.mxu0 %v113
    %1240 = vmatprep.subr.mxu0 %v118
    %1241 = vmatpush1.msra.mxu0 %v117
    %1242 = vmatprep.subr.mxu0 %v122
    %1243 = vmatpush1.msra.mxu0 %v121
    %1244 = vmatprep.subr.mxu0 %v126
    %1245 = vmatpush1.msra.mxu0 %v125
    %1246 = vmatprep.subr.mxu0 0.0
    %1247 = vmatpush1.msra.mxu0 0.0
    %1248 = vmatprep.subr.mxu0 0.0
    %1249 = vmatpush1.msra.mxu0 0.0
    %1250 = vmatprep.subr.mxu0 0.0
    %1251 = vmatpush1.msra.mxu0 0.0
    %1252 = vmatprep.subr.mxu0 0.0
    %1253 = vmatpush1.msra.mxu0 0.0
    %1254 = vmatprep.subr.mxu0 0.0
    %1255 = vmatpush1.msra.mxu0 0.0
    %1256 = vmatprep.subr.mxu0 0.0
    %1257 = vmatpush1.msra.mxu0 0.0
    %1258 = vmatprep.subr.mxu0 0.0
    %1259 = vmatpush1.msra.mxu0 0.0
    %1260 = vmatprep.subr.mxu0 0.0
    %1261 = vmatpush1.msra.mxu0 0.0
    %1262 = vmatprep.subr.mxu0 0.0
    %1263 = vmatpush1.msra.mxu0 0.0
    %1264 = vmatprep.subr.mxu0 0.0
    %1265 = vmatpush1.msra.mxu0 0.0
    %1266 = vmatprep.subr.mxu0 0.0
    %1267 = vmatpush1.msra.mxu0 0.0
    %1268 = vmatprep.subr.mxu0 0.0
    %1269 = vmatpush1.msra.mxu0 0.0
    %1270 = vmatprep.subr.mxu0 0.0
    %1271 = vmatpush1.msra.mxu0 0.0
    %1272 = vmatprep.subr.mxu0 0.0
    %1273 = vmatpush1.msra.mxu0 0.0
    %1274 = vmatprep.subr.mxu0 0.0
    %1275 = vmatpush1.msra.mxu0 0.0
    %1276 = vmatprep.subr.mxu0 0.0
    %1277 = vmatpush1.msra.mxu0 0.0
    %1278 = vmatprep.mubr.f32.mxu0 0.0
    %1279 = vmatmul.mubr.f32.gmra.mrb[0].mxu0 %v1142
    %v1280 = vpop.f32.mrb[0].mxu0
    %v1281 = vadd.f32 %v204, %v1280
    %v1282 = vpop.f32.mrb[0].mxu0
    %v1283 = vadd.f32 %v208, %v1282
    %1284 = vdwg.mxu0
    %1285 = vst [vmem:[%s652] sm:$0xff] %v1210
    %1286 = vst [vmem:[%s652 + $0x8] sm:$0xff] %v1212
    %1287 = vst [vmem:[%s652 + $0x10] sm:$0xff] %v1281
    %1288 = vst [vmem:[%s652 + $0x18] sm:$0xff] %v1283
    %v1289 = vmul.f32 %v1138, 0.5
    %v1290 = vtanh.pop %v1289
    %v1291 = vadd.f32 %v1290, 1.0
    %v1292 = vmul.f32 %v1291, 0.5
    %v1293 = vmul.f32 %v1139, 0.5
    %v1294 = vtanh.pop %v1293
    %v1295 = vadd.f32 %v1294, 1.0
    %v1296 = vmul.f32 %v1295, 0.5
    %v1297 = vtanh.pop %v1140
    %v1298 = vmul.f32 %v1141, 0.5
    %v1299 = vtanh.pop %v1298
    %v1300 = vadd.f32 %v1299, 1.0
    %v1301 = vmul.f32 %v1300, 0.5
    %v1302 = vmul.f32 %v1296, %v988
    %v1303 = vmul.f32 %v1292, %v1297
    %v1304 = vadd.f32 %v1302, %v1303
    %v1305 = vtanh.pop %v1304
    %v1306 = vmul.f32 %v1301, %v1305
    %1307 = vst [vmem:[#allocation3 + $0x10] sm:$0xff] %v1306
    %v1308 = vld [vmem:[%s652] sm:$0xff]
    %v1309 = vld [vmem:[%s652 + $0x8] sm:$0xff]
    %v1310 = vld [vmem:[%s652 + $0x10] sm:$0xff]
    %v1311 = vld [vmem:[%s652 + $0x18] sm:$0xff]
    %1312 = vmatprep.subr.mxu0 %v128
    %1313 = vmatpush1.msra.mxu0 %v127
    %1314 = vmatprep.subr.mxu0 %v132
    %1315 = vmatpush1.msra.mxu0 %v131
    %1316 = vmatprep.subr.mxu0 %v136
    %1317 = vmatpush1.msra.mxu0 %v135
    %1318 = vmatprep.subr.mxu0 %v140
    %1319 = vmatpush1.msra.mxu0 %v139
    %1320 = vmatprep.subr.mxu0 %v144
    %1321 = vmatpush1.msra.mxu0 %v143
    %1322 = vmatprep.subr.mxu0 %v148
    %1323 = vmatpush1.msra.mxu0 %v147
    %1324 = vmatprep.subr.mxu0 %v152
    %1325 = vmatpush1.msra.mxu0 %v151
    %1326 = vmatprep.subr.mxu0 %v156
    %1327 = vmatpush1.msra.mxu0 %v155
    %1328 = vmatprep.subr.mxu0 %v160
    %1329 = vmatpush1.msra.mxu0 %v159
    %1330 = vmatprep.subr.mxu0 %v164
    %1331 = vmatpush1.msra.mxu0 %v163
    %1332 = vmatprep.subr.mxu0 %v168
    %1333 = vmatpush1.msra.mxu0 %v167
    %1334 = vmatprep.subr.mxu0 %v172
    %1335 = vmatpush1.msra.mxu0 %v171
    %1336 = vmatprep.subr.mxu0 %v176
    %1337 = vmatpush1.msra.mxu0 %v175
    %1338 = vmatprep.subr.mxu0 %v180
    %1339 = vmatpush1.msra.mxu0 %v179
    %1340 = vmatprep.subr.mxu0 %v184
    %1341 = vmatpush1.msra.mxu0 %v183
    %1342 = vmatprep.subr.mxu0 %v188
    %1343 = vmatpush1.msra.mxu0 %v187
    %1344 = vmatprep.subr.mxu0 0.0
    %1345 = vmatpush1.msra.mxu0 0.0
    %1346 = vmatprep.subr.mxu0 0.0
    %1347 = vmatpush1.msra.mxu0 0.0
    %1348 = vmatprep.subr.mxu0 0.0
    %1349 = vmatpush1.msra.mxu0 0.0
    %1350 = vmatprep.subr.mxu0 0.0
    %1351 = vmatpush1.msra.mxu0 0.0
    %1352 = vmatprep.subr.mxu0 0.0
    %1353 = vmatpush1.msra.mxu0 0.0
    %1354 = vmatprep.subr.mxu0 0.0
    %1355 = vmatpush1.msra.mxu0 0.0
    %1356 = vmatprep.subr.mxu0 0.0
    %1357 = vmatpush1.msra.mxu0 0.0
    %1358 = vmatprep.subr.mxu0 0.0
    %1359 = vmatpush1.msra.mxu0 0.0
    %1360 = vmatprep.subr.mxu0 0.0
    %1361 = vmatpush1.msra.mxu0 0.0
    %1362 = vmatprep.subr.mxu0 0.0
    %1363 = vmatpush1.msra.mxu0 0.0
    %1364 = vmatprep.subr.mxu0 0.0
    %1365 = vmatpush1.msra.mxu0 0.0
    %1366 = vmatprep.subr.mxu0 0.0
    %1367 = vmatpush1.msra.mxu0 0.0
    %1368 = vmatprep.subr.mxu0 0.0
    %1369 = vmatpush1.msra.mxu0 0.0
    %1370 = vmatprep.subr.mxu0 0.0
    %1371 = vmatpush1.msra.mxu0 0.0
    %1372 = vmatprep.subr.mxu0 0.0
    %1373 = vmatpush1.msra.mxu0 0.0
    %1374 = vmatprep.subr.mxu0 0.0
    %1375 = vmatpush1.msra.mxu0 0.0
    %1376 = vmatprep.mubr.f32.mxu0 0.0
    %1377 = vmatmul.mubr.f32.gmra.mrb[0].mxu0 %v1306
    %v1378 = vpop.f32.mrb[0].mxu0
    %v1379 = vadd.f32 0.0, %v1378
    %v1380 = vpop.f32.mrb[0].mxu0
    %v1381 = vadd.f32 0.0, %v1380
    %1382 = vdwg.mxu0
    %1383 = vmatprep.subr.mxu0 %v130
    %1384 = vmatpush1.msra.mxu0 %v129
    %1385 = vmatprep.subr.mxu0 %v134
    %1386 = vmatpush1.msra.mxu0 %v133
    %1387 = vmatprep.subr.mxu0 %v138
    %1388 = vmatpush1.msra.mxu0 %v137
    %1389 = vmatprep.subr.mxu0 %v142
    %1390 = vmatpush1.msra.mxu0 %v141
    %1391 = vmatprep.subr.mxu0 %v146
    %1392 = vmatpush1.msra.mxu0 %v145
    %1393 = vmatprep.subr.mxu0 %v150
    %1394 = vmatpush1.msra.mxu0 %v149
    %1395 = vmatprep.subr.mxu0 %v154
    %1396 = vmatpush1.msra.mxu0 %v153
    %1397 = vmatprep.subr.mxu0 %v158
    %1398 = vmatpush1.msra.mxu0 %v157
    %1399 = vmatprep.subr.mxu0 %v162
    %1400 = vmatpush1.msra.mxu0 %v161
    %1401 = vmatprep.subr.mxu0 %v166
    %1402 = vmatpush1.msra.mxu0 %v165
    %1403 = vmatprep.subr.mxu0 %v170
    %1404 = vmatpush1.msra.mxu0 %v169
    %1405 = vmatprep.subr.mxu0 %v174
    %1406 = vmatpush1.msra.mxu0 %v173
    %1407 = vmatprep.subr.mxu0 %v178
    %1408 = vmatpush1.msra.mxu0 %v177
    %1409 = vmatprep.subr.mxu0 %v182
    %1410 = vmatpush1.msra.mxu0 %v181
    %1411 = vmatprep.subr.mxu0 %v186
    %1412 = vmatpush1.msra.mxu0 %v185
    %1413 = vmatprep.subr.mxu0 %v190
    %1414 = vmatpush1.msra.mxu0 %v189
    %1415 = vmatprep.subr.mxu0 0.0
    %1416 = vmatpush1.msra.mxu0 0.0
    %1417 = vmatprep.subr.mxu0 0.0
    %1418 = vmatpush1.msra.mxu0 0.0
    %1419 = vmatprep.subr.mxu0 0.0
    %1420 = vmatpush1.msra.mxu0 0.0
    %1421 = vmatprep.subr.mxu0 0.0
    %1422 = vmatpush1.msra.mxu0 0.0
    %1423 = vmatprep.subr.mxu0 0.0
    %1424 = vmatpush1.msra.mxu0 0.0
    %1425 = vmatprep.subr.mxu0 0.0
    %1426 = vmatpush1.msra.mxu0 0.0
    %1427 = vmatprep.subr.mxu0 0.0
    %1428 = vmatpush1.msra.mxu0 0.0
    %1429 = vmatprep.subr.mxu0 0.0
    %1430 = vmatpush1.msra.mxu0 0.0
    %1431 = vmatprep.subr.mxu0 0.0
    %1432 = vmatpush1.msra.mxu0 0.0
    %1433 = vmatprep.subr.mxu0 0.0
    %1434 = vmatpush1.msra.mxu0 0.0
    %1435 = vmatprep.subr.mxu0 0.0
    %1436 = vmatpush1.msra.mxu0 0.0
    %1437 = vmatprep.subr.mxu0 0.0
    %1438 = vmatpush1.msra.mxu0 0.0
    %1439 = vmatprep.subr.mxu0 0.0
    %1440 = vmatpush1.msra.mxu0 0.0
    %1441 = vmatprep.subr.mxu0 0.0
    %1442 = vmatpush1.msra.mxu0 0.0
    %1443 = vmatprep.subr.mxu0 0.0
    %1444 = vmatpush1.msra.mxu0 0.0
    %1445 = vmatprep.subr.mxu0 0.0
    %1446 = vmatpush1.msra.mxu0 0.0
    %1447 = vmatprep.mubr.f32.mxu0 0.0
    %1448 = vmatmul.mubr.f32.gmra.mrb[0].mxu0 %v1306
    %v1449 = vpop.f32.mrb[0].mxu0
    %v1450 = vadd.f32 0.0, %v1449
    %v1451 = vpop.f32.mrb[0].mxu0
    %v1452 = vadd.f32 0.0, %v1451
    %1453 = vdwg.mxu0
    %v1454 = vadd.f32 %v1308, %v1379
    %v1455 = vadd.f32 %v1309, %v1381
    %v1456 = vadd.f32 %v1310, %v1450
    %v1457 = vadd.f32 %v1311, %v1452
    %v1458 = vld [vmem:[%s0 + $0x20] sm:$0xff]
    %1459 = vmatprep.subr.mxu0 %v64
    %1460 = vmatpush1.msra.mxu0 %v63
    %1461 = vmatprep.subr.mxu0 %v68
    %1462 = vmatpush1.msra.mxu0 %v67
    %1463 = vmatprep.subr.mxu0 %v72
    %1464 = vmatpush1.msra.mxu0 %v71
    %1465 = vmatprep.subr.mxu0 %v76
    %1466 = vmatpush1.msra.mxu0 %v75
    %1467 = vmatprep.subr.mxu0 %v80
    %1468 = vmatpush1.msra.mxu0 %v79
    %1469 = vmatprep.subr.mxu0 %v84
    %1470 = vmatpush1.msra.mxu0 %v83
    %1471 = vmatprep.subr.mxu0 %v88
    %1472 = vmatpush1.msra.mxu0 %v87
    %1473 = vmatprep.subr.mxu0 %v92
    %1474 = vmatpush1.msra.mxu0 %v91
    %1475 = vmatprep.subr.mxu0 %v96
    %1476 = vmatpush1.msra.mxu0 %v95
    %1477 = vmatprep.subr.mxu0 %v100
    %1478 = vmatpush1.msra.mxu0 %v99
    %1479 = vmatprep.subr.mxu0 %v104
    %1480 = vmatpush1.msra.mxu0 %v103
    %1481 = vmatprep.subr.mxu0 %v108
    %1482 = vmatpush1.msra.mxu0 %v107
    %1483 = vmatprep.subr.mxu0 %v112
    %1484 = vmatpush1.msra.mxu0 %v111
    %1485 = vmatprep.subr.mxu0 %v116
    %1486 = vmatpush1.msra.mxu0 %v115
    %1487 = vmatprep.subr.mxu0 %v120
    %1488 = vmatpush1.msra.mxu0 %v119
    %1489 = vmatprep.subr.mxu0 %v124
    %1490 = vmatpush1.msra.mxu0 %v123
    %1491 = vmatprep.subr.mxu0 0.0
    %1492 = vmatpush1.msra.mxu0 0.0
    %1493 = vmatprep.subr.mxu0 0.0
    %1494 = vmatpush1.msra.mxu0 0.0
    %1495 = vmatprep.subr.mxu0 0.0
    %1496 = vmatpush1.msra.mxu0 0.0
    %1497 = vmatprep.subr.mxu0 0.0
    %1498 = vmatpush1.msra.mxu0 0.0
    %1499 = vmatprep.subr.mxu0 0.0
    %1500 = vmatpush1.msra.mxu0 0.0
    %1501 = vmatprep.subr.mxu0 0.0
    %1502 = vmatpush1.msra.mxu0 0.0
    %1503 = vmatprep.subr.mxu0 0.0
    %1504 = vmatpush1.msra.mxu0 0.0
    %1505 = vmatprep.subr.mxu0 0.0
    %1506 = vmatpush1.msra.mxu0 0.0
    %1507 = vmatprep.subr.mxu0 0.0
    %1508 = vmatpush1.msra.mxu0 0.0
    %1509 = vmatprep.subr.mxu0 0.0
    %1510 = vmatpush1.msra.mxu0 0.0
    %1511 = vmatprep.subr.mxu0 0.0
    %1512 = vmatpush1.msra.mxu0 0.0
    %1513 = vmatprep.subr.mxu0 0.0
    %1514 = vmatpush1.msra.mxu0 0.0
    %1515 = vmatprep.subr.mxu0 0.0
    %1516 = vmatpush1.msra.mxu0 0.0
    %1517 = vmatprep.subr.mxu0 0.0
    %1518 = vmatpush1.msra.mxu0 0.0
    %1519 = vmatprep.subr.mxu0 0.0
    %1520 = vmatpush1.msra.mxu0 0.0
    %1521 = vmatprep.subr.mxu0 0.0
    %1522 = vmatpush1.msra.mxu0 0.0
    %1523 = vmatprep.mubr.f32.mxu0 0.0
    %1524 = vmatmul.mubr.f32.gmra.mrb[0].mxu0 %v1458
    %v1525 = vpop.f32.mrb[0].mxu0
    %v1526 = vadd.f32 %v196, %v1525
    %v1527 = vpop.f32.mrb[0].mxu0
    %v1528 = vadd.f32 %v200, %v1527
    %1529 = vdwg.mxu0
    %1530 = vmatprep.subr.mxu0 %v66
    %1531 = vmatpush1.msra.mxu0 %v65
    %1532 = vmatprep.subr.mxu0 %v70
    %1533 = vmatpush1.msra.mxu0 %v69
    %1534 = vmatprep.subr.mxu0 %v74
    %1535 = vmatpush1.msra.mxu0 %v73
    %1536 = vmatprep.subr.mxu0 %v78
    %1537 = vmatpush1.msra.mxu0 %v77
    %1538 = vmatprep.subr.mxu0 %v82
    %1539 = vmatpush1.msra.mxu0 %v81
    %1540 = vmatprep.subr.mxu0 %v86
    %1541 = vmatpush1.msra.mxu0 %v85
    %1542 = vmatprep.subr.mxu0 %v90
    %1543 = vmatpush1.msra.mxu0 %v89
    %1544 = vmatprep.subr.mxu0 %v94
    %1545 = vmatpush1.msra.mxu0 %v93
    %1546 = vmatprep.subr.mxu0 %v98
    %1547 = vmatpush1.msra.mxu0 %v97
    %1548 = vmatprep.subr.mxu0 %v102
    %1549 = vmatpush1.msra.mxu0 %v101
    %1550 = vmatprep.subr.mxu0 %v106
    %1551 = vmatpush1.msra.mxu0 %v105
    %1552 = vmatprep.subr.mxu0 %v110
    %1553 = vmatpush1.msra.mxu0 %v109
    %1554 = vmatprep.subr.mxu0 %v114
    %1555 = vmatpush1.msra.mxu0 %v113
    %1556 = vmatprep.subr.mxu0 %v118
    %1557 = vmatpush1.msra.mxu0 %v117
    %1558 = vmatprep.subr.mxu0 %v122
    %1559 = vmatpush1.msra.mxu0 %v121
    %1560 = vmatprep.subr.mxu0 %v126
    %1561 = vmatpush1.msra.mxu0 %v125
    %1562 = vmatprep.subr.mxu0 0.0
    %1563 = vmatpush1.msra.mxu0 0.0
    %1564 = vmatprep.subr.mxu0 0.0
    %1565 = vmatpush1.msra.mxu0 0.0
    %1566 = vmatprep.subr.mxu0 0.0
    %1567 = vmatpush1.msra.mxu0 0.0
    %1568 = vmatprep.subr.mxu0 0.0
    %1569 = vmatpush1.msra.mxu0 0.0
    %1570 = vmatprep.subr.mxu0 0.0
    %1571 = vmatpush1.msra.mxu0 0.0
    %1572 = vmatprep.subr.mxu0 0.0
    %1573 = vmatpush1.msra.mxu0 0.0
    %1574 = vmatprep.subr.mxu0 0.0
    %1575 = vmatpush1.msra.mxu0 0.0
    %1576 = vmatprep.subr.mxu0 0.0
    %1577 = vmatpush1.msra.mxu0 0.0
    %1578 = vmatprep.subr.mxu0 0.0
    %1579 = vmatpush1.msra.mxu0 0.0
    %1580 = vmatprep.subr.mxu0 0.0
    %1581 = vmatpush1.msra.mxu0 0.0
    %1582 = vmatprep.subr.mxu0 0.0
    %1583 = vmatpush1.msra.mxu0 0.0
    %1584 = vmatprep.subr.mxu0 0.0
    %1585 = vmatpush1.msra.mxu0 0.0
    %1586 = vmatprep.subr.mxu0 0.0
    %1587 = vmatpush1.msra.mxu0 0.0
    %1588 = vmatprep.subr.mxu0 0.0
    %1589 = vmatpush1.msra.mxu0 0.0
    %1590 = vmatprep.subr.mxu0 0.0
    %1591 = vmatpush1.msra.mxu0 0.0
    %1592 = vmatprep.subr.mxu0 0.0
    %1593 = vmatpush1.msra.mxu0 0.0
    %1594 = vmatprep.mubr.f32.mxu0 0.0
    %1595 = vmatmul.mubr.f32.gmra.mrb[0].mxu0 %v1458
    %v1596 = vpop.f32.mrb[0].mxu0
    %v1597 = vadd.f32 %v204, %v1596
    %v1598 = vpop.f32.mrb[0].mxu0
    %v1599 = vadd.f32 %v208, %v1598
    %1600 = vdwg.mxu0
    %1601 = vst [vmem:[#allocation2] sm:$0xff] %v1526
    %1602 = vst [vmem:[#allocation2 + $0x8] sm:$0xff] %v1528
    %1603 = vst [vmem:[#allocation2 + $0x10] sm:$0xff] %v1597
    %1604 = vst [vmem:[#allocation2 + $0x18] sm:$0xff] %v1599
    %v1605 = vmul.f32 %v1454, 0.5
    %v1606 = vtanh.pop %v1605
    %v1607 = vadd.f32 %v1606, 1.0
    %v1608 = vmul.f32 %v1607, 0.5
    %v1609 = vmul.f32 %v1455, 0.5
    %v1610 = vtanh.pop %v1609
    %v1611 = vadd.f32 %v1610, 1.0
    %v1612 = vmul.f32 %v1611, 0.5
    %v1613 = vtanh.pop %v1456
    %v1614 = vmul.f32 %v1457, 0.5
    %v1615 = vtanh.pop %v1614
    %v1616 = vadd.f32 %v1615, 1.0
    %v1617 = vmul.f32 %v1616, 0.5
    %v1618 = vmul.f32 %v1612, %v1304
    %v1619 = vmul.f32 %v1608, %v1613
    %v1620 = vadd.f32 %v1618, %v1619
    %v1621 = vtanh.pop %v1620
    %v1622 = vmul.f32 %v1617, %v1621
    %1623 = vst [vmem:[#allocation3 + $0x18] sm:$0xff] %v1622
    %v1624 = vld [vmem:[#allocation2] sm:$0xff]
    %v1625 = vld [vmem:[#allocation2 + $0x8] sm:$0xff]
    %v1626 = vld [vmem:[#allocation2 + $0x10] sm:$0xff]
    %v1627 = vld [vmem:[#allocation2 + $0x18] sm:$0xff]
    %1628 = vmatprep.subr.mxu0 %v128
    %1629 = vmatpush1.msra.mxu0 %v127
    %1630 = vmatprep.subr.mxu0 %v132
    %1631 = vmatpush1.msra.mxu0 %v131
    %1632 = vmatprep.subr.mxu0 %v136
    %1633 = vmatpush1.msra.mxu0 %v135
    %1634 = vmatprep.subr.mxu0 %v140
    %1635 = vmatpush1.msra.mxu0 %v139
    %1636 = vmatprep.subr.mxu0 %v144
    %1637 = vmatpush1.msra.mxu0 %v143
    %1638 = vmatprep.subr.mxu0 %v148
    %1639 = vmatpush1.msra.mxu0 %v147
    %1640 = vmatprep.subr.mxu0 %v152
    %1641 = vmatpush1.msra.mxu0 %v151
    %1642 = vmatprep.subr.mxu0 %v156
    %1643 = vmatpush1.msra.mxu0 %v155
    %1644 = vmatprep.subr.mxu0 %v160
    %1645 = vmatpush1.msra.mxu0 %v159
    %1646 = vmatprep.subr.mxu0 %v164
    %1647 = vmatpush1.msra.mxu0 %v163
    %1648 = vmatprep.subr.mxu0 %v168
    %1649 = vmatpush1.msra.mxu0 %v167
    %1650 = vmatprep.subr.mxu0 %v172
    %1651 = vmatpush1.msra.mxu0 %v171
    %1652 = vmatprep.subr.mxu0 %v176
    %1653 = vmatpush1.msra.mxu0 %v175
    %1654 = vmatprep.subr.mxu0 %v180
    %1655 = vmatpush1.msra.mxu0 %v179
    %1656 = vmatprep.subr.mxu0 %v184
    %1657 = vmatpush1.msra.mxu0 %v183
    %1658 = vmatprep.subr.mxu0 %v188
    %1659 = vmatpush1.msra.mxu0 %v187
    %1660 = vmatprep.subr.mxu0 0.0
    %1661 = vmatpush1.msra.mxu0 0.0
    %1662 = vmatprep.subr.mxu0 0.0
    %1663 = vmatpush1.msra.mxu0 0.0
    %1664 = vmatprep.subr.mxu0 0.0
    %1665 = vmatpush1.msra.mxu0 0.0
    %1666 = vmatprep.subr.mxu0 0.0
    %1667 = vmatpush1.msra.mxu0 0.0
    %1668 = vmatprep.subr.mxu0 0.0
    %1669 = vmatpush1.msra.mxu0 0.0
    %1670 = vmatprep.subr.mxu0 0.0
    %1671 = vmatpush1.msra.mxu0 0.0
    %1672 = vmatprep.subr.mxu0 0.0
    %1673 = vmatpush1.msra.mxu0 0.0
    %1674 = vmatprep.subr.mxu0 0.0
    %1675 = vmatpush1.msra.mxu0 0.0
    %1676 = vmatprep.subr.mxu0 0.0
    %1677 = vmatpush1.msra.mxu0 0.0
    %1678 = vmatprep.subr.mxu0 0.0
    %1679 = vmatpush1.msra.mxu0 0.0
    %1680 = vmatprep.subr.mxu0 0.0
    %1681 = vmatpush1.msra.mxu0 0.0
    %1682 = vmatprep.subr.mxu0 0.0
    %1683 = vmatpush1.msra.mxu0 0.0
    %1684 = vmatprep.subr.mxu0 0.0
    %1685 = vmatpush1.msra.mxu0 0.0
    %1686 = vmatprep.subr.mxu0 0.0
    %1687 = vmatpush1.msra.mxu0 0.0
    %1688 = vmatprep.subr.mxu0 0.0
    %1689 = vmatpush1.msra.mxu0 0.0
    %1690 = vmatprep.subr.mxu0 0.0
    %1691 = vmatpush1.msra.mxu0 0.0
    %1692 = vmatprep.mubr.f32.mxu0 0.0
    %1693 = vmatmul.mubr.f32.gmra.mrb[0].mxu0 %v1622
    %v1694 = vpop.f32.mrb[0].mxu0
    %v1695 = vadd.f32 0.0, %v1694
    %v1696 = vpop.f32.mrb[0].mxu0
    %v1697 = vadd.f32 0.0, %v1696
    %1698 = vdwg.mxu0
    %1699 = vmatprep.subr.mxu0 %v130
    %1700 = vmatpush1.msra.mxu0 %v129
    %1701 = vmatprep.subr.mxu0 %v134
    %1702 = vmatpush1.msra.mxu0 %v133
    %1703 = vmatprep.subr.mxu0 %v138
    %1704 = vmatpush1.msra.mxu0 %v137
    %1705 = vmatprep.subr.mxu0 %v142
    %1706 = vmatpush1.msra.mxu0 %v141
    %1707 = vmatprep.subr.mxu0 %v146
    %1708 = vmatpush1.msra.mxu0 %v145
    %1709 = vmatprep.subr.mxu0 %v150
    %1710 = vmatpush1.msra.mxu0 %v149
    %1711 = vmatprep.subr.mxu0 %v154
    %1712 = vmatpush1.msra.mxu0 %v153
    %1713 = vmatprep.subr.mxu0 %v158
    %1714 = vmatpush1.msra.mxu0 %v157
    %1715 = vmatprep.subr.mxu0 %v162
    %1716 = vmatpush1.msra.mxu0 %v161
    %1717 = vmatprep.subr.mxu0 %v166
    %1718 = vmatpush1.msra.mxu0 %v165
    %1719 = vmatprep.subr.mxu0 %v170
    %1720 = vmatpush1.msra.mxu0 %v169
    %1721 = vmatprep.subr.mxu0 %v174
    %1722 = vmatpush1.msra.mxu0 %v173
    %1723 = vmatprep.subr.mxu0 %v178
    %1724 = vmatpush1.msra.mxu0 %v177
    %1725 = vmatprep.subr.mxu0 %v182
    %1726 = vmatpush1.msra.mxu0 %v181
    %1727 = vmatprep.subr.mxu0 %v186
    %1728 = vmatpush1.msra.mxu0 %v185
    %1729 = vmatprep.subr.mxu0 %v190
    %1730 = vmatpush1.msra.mxu0 %v189
    %1731 = vmatprep.subr.mxu0 0.0
    %1732 = vmatpush1.msra.mxu0 0.0
    %1733 = vmatprep.subr.mxu0 0.0
    %1734 = vmatpush1.msra.mxu0 0.0
    %1735 = vmatprep.subr.mxu0 0.0
    %1736 = vmatpush1.msra.mxu0 0.0
    %1737 = vmatprep.subr.mxu0 0.0
    %1738 = vmatpush1.msra.mxu0 0.0
    %1739 = vmatprep.subr.mxu0 0.0
    %1740 = vmatpush1.msra.mxu0 0.0
    %1741 = vmatprep.subr.mxu0 0.0
    %1742 = vmatpush1.msra.mxu0 0.0
    %1743 = vmatprep.subr.mxu0 0.0
    %1744 = vmatpush1.msra.mxu0 0.0
    %1745 = vmatprep.subr.mxu0 0.0
    %1746 = vmatpush1.msra.mxu0 0.0
    %1747 = vmatprep.subr.mxu0 0.0
    %1748 = vmatpush1.msra.mxu0 0.0
    %1749 = vmatprep.subr.mxu0 0.0
    %1750 = vmatpush1.msra.mxu0 0.0
    %1751 = vmatprep.subr.mxu0 0.0
    %1752 = vmatpush1.msra.mxu0 0.0
    %1753 = vmatprep.subr.mxu0 0.0
    %1754 = vmatpush1.msra.mxu0 0.0
    %1755 = vmatprep.subr.mxu0 0.0
    %1756 = vmatpush1.msra.mxu0 0.0
    %1757 = vmatprep.subr.mxu0 0.0
    %1758 = vmatpush1.msra.mxu0 0.0
    %1759 = vmatprep.subr.mxu0 0.0
    %1760 = vmatpush1.msra.mxu0 0.0
    %1761 = vmatprep.subr.mxu0 0.0
    %1762 = vmatpush1.msra.mxu0 0.0
    %1763 = vmatprep.mubr.f32.mxu0 0.0
    %1764 = vmatmul.mubr.f32.gmra.mrb[0].mxu0 %v1622
    %v1765 = vpop.f32.mrb[0].mxu0
    %v1766 = vadd.f32 0.0, %v1765
    %v1767 = vpop.f32.mrb[0].mxu0
    %v1768 = vadd.f32 0.0, %v1767
    %1769 = vdwg.mxu0
    %v1770 = vadd.f32 %v1624, %v1695
    %v1771 = vadd.f32 %v1625, %v1697
    %v1772 = vadd.f32 %v1626, %v1766
    %v1773 = vadd.f32 %v1627, %v1768
    %v1774 = vld [vmem:[%s0 + $0x28] sm:$0xff]
    %1775 = vmatprep.subr.mxu0 %v64
    %1776 = vmatpush1.msra.mxu0 %v63
    %1777 = vmatprep.subr.mxu0 %v68
    %1778 = vmatpush1.msra.mxu0 %v67
    %1779 = vmatprep.subr.mxu0 %v72
    %1780 = vmatpush1.msra.mxu0 %v71
    %1781 = vmatprep.subr.mxu0 %v76
    %1782 = vmatpush1.msra.mxu0 %v75
    %1783 = vmatprep.subr.mxu0 %v80
    %1784 = vmatpush1.msra.mxu0 %v79
    %1785 = vmatprep.subr.mxu0 %v84
    %1786 = vmatpush1.msra.mxu0 %v83
    %1787 = vmatprep.subr.mxu0 %v88
    %1788 = vmatpush1.msra.mxu0 %v87
    %1789 = vmatprep.subr.mxu0 %v92
    %1790 = vmatpush1.msra.mxu0 %v91
    %1791 = vmatprep.subr.mxu0 %v96
    %1792 = vmatpush1.msra.mxu0 %v95
    %1793 = vmatprep.subr.mxu0 %v100
    %1794 = vmatpush1.msra.mxu0 %v99
    %1795 = vmatprep.subr.mxu0 %v104
    %1796 = vmatpush1.msra.mxu0 %v103
    %1797 = vmatprep.subr.mxu0 %v108
    %1798 = vmatpush1.msra.mxu0 %v107
    %1799 = vmatprep.subr.mxu0 %v112
    %1800 = vmatpush1.msra.mxu0 %v111
    %1801 = vmatprep.subr.mxu0 %v116
    %1802 = vmatpush1.msra.mxu0 %v115
    %1803 = vmatprep.subr.mxu0 %v120
    %1804 = vmatpush1.msra.mxu0 %v119
    %1805 = vmatprep.subr.mxu0 %v124
    %1806 = vmatpush1.msra.mxu0 %v123
    %1807 = vmatprep.subr.mxu0 0.0
    %1808 = vmatpush1.msra.mxu0 0.0
    %1809 = vmatprep.subr.mxu0 0.0
    %1810 = vmatpush1.msra.mxu0 0.0
    %1811 = vmatprep.subr.mxu0 0.0
    %1812 = vmatpush1.msra.mxu0 0.0
    %1813 = vmatprep.subr.mxu0 0.0
    %1814 = vmatpush1.msra.mxu0 0.0
    %1815 = vmatprep.subr.mxu0 0.0
    %1816 = vmatpush1.msra.mxu0 0.0
    %1817 = vmatprep.subr.mxu0 0.0
    %1818 = vmatpush1.msra.mxu0 0.0
    %1819 = vmatprep.subr.mxu0 0.0
    %1820 = vmatpush1.msra.mxu0 0.0
    %1821 = vmatprep.subr.mxu0 0.0
    %1822 = vmatpush1.msra.mxu0 0.0
    %1823 = vmatprep.subr.mxu0 0.0
    %1824 = vmatpush1.msra.mxu0 0.0
    %1825 = vmatprep.subr.mxu0 0.0
    %1826 = vmatpush1.msra.mxu0 0.0
    %1827 = vmatprep.subr.mxu0 0.0
    %1828 = vmatpush1.msra.mxu0 0.0
    %1829 = vmatprep.subr.mxu0 0.0
    %1830 = vmatpush1.msra.mxu0 0.0
    %1831 = vmatprep.subr.mxu0 0.0
    %1832 = vmatpush1.msra.mxu0 0.0
    %1833 = vmatprep.subr.mxu0 0.0
    %1834 = vmatpush1.msra.mxu0 0.0
    %1835 = vmatprep.subr.mxu0 0.0
    %1836 = vmatpush1.msra.mxu0 0.0
    %1837 = vmatprep.subr.mxu0 0.0
    %1838 = vmatpush1.msra.mxu0 0.0
    %1839 = vmatprep.mubr.f32.mxu0 0.0
    %1840 = vmatmul.mubr.f32.gmra.mrb[0].mxu0 %v1774
    %v1841 = vpop.f32.mrb[0].mxu0
    %v1842 = vadd.f32 %v196, %v1841
    %v1843 = vpop.f32.mrb[0].mxu0
    %v1844 = vadd.f32 %v200, %v1843
    %1845 = vdwg.mxu0
    %1846 = vmatprep.subr.mxu0 %v66
    %1847 = vmatpush1.msra.mxu0 %v65
    %1848 = vmatprep.subr.mxu0 %v70
    %1849 = vmatpush1.msra.mxu0 %v69
    %1850 = vmatprep.subr.mxu0 %v74
    %1851 = vmatpush1.msra.mxu0 %v73
    %1852 = vmatprep.subr.mxu0 %v78
    %1853 = vmatpush1.msra.mxu0 %v77
    %1854 = vmatprep.subr.mxu0 %v82
    %1855 = vmatpush1.msra.mxu0 %v81
    %1856 = vmatprep.subr.mxu0 %v86
    %1857 = vmatpush1.msra.mxu0 %v85
    %1858 = vmatprep.subr.mxu0 %v90
    %1859 = vmatpush1.msra.mxu0 %v89
    %1860 = vmatprep.subr.mxu0 %v94
    %1861 = vmatpush1.msra.mxu0 %v93
    %1862 = vmatprep.subr.mxu0 %v98
    %1863 = vmatpush1.msra.mxu0 %v97
    %1864 = vmatprep.subr.mxu0 %v102
    %1865 = vmatpush1.msra.mxu0 %v101
    %1866 = vmatprep.subr.mxu0 %v106
    %1867 = vmatpush1.msra.mxu0 %v105
    %1868 = vmatprep.subr.mxu0 %v110
    %1869 = vmatpush1.msra.mxu0 %v109
    %1870 = vmatprep.subr.mxu0 %v114
    %1871 = vmatpush1.msra.mxu0 %v113
    %1872 = vmatprep.subr.mxu0 %v118
    %1873 = vmatpush1.msra.mxu0 %v117
    %1874 = vmatprep.subr.mxu0 %v122
    %1875 = vmatpush1.msra.mxu0 %v121
    %1876 = vmatprep.subr.mxu0 %v126
    %1877 = vmatpush1.msra.mxu0 %v125
    %1878 = vmatprep.subr.mxu0 0.0
    %1879 = vmatpush1.msra.mxu0 0.0
    %1880 = vmatprep.subr.mxu0 0.0
    %1881 = vmatpush1.msra.mxu0 0.0
    %1882 = vmatprep.subr.mxu0 0.0
    %1883 = vmatpush1.msra.mxu0 0.0
    %1884 = vmatprep.subr.mxu0 0.0
    %1885 = vmatpush1.msra.mxu0 0.0
    %1886 = vmatprep.subr.mxu0 0.0
    %1887 = vmatpush1.msra.mxu0 0.0
    %1888 = vmatprep.subr.mxu0 0.0
    %1889 = vmatpush1.msra.mxu0 0.0
    %1890 = vmatprep.subr.mxu0 0.0
    %1891 = vmatpush1.msra.mxu0 0.0
    %1892 = vmatprep.subr.mxu0 0.0
    %1893 = vmatpush1.msra.mxu0 0.0
    %1894 = vmatprep.subr.mxu0 0.0
    %1895 = vmatpush1.msra.mxu0 0.0
    %1896 = vmatprep.subr.mxu0 0.0
    %1897 = vmatpush1.msra.mxu0 0.0
    %1898 = vmatprep.subr.mxu0 0.0
    %1899 = vmatpush1.msra.mxu0 0.0
    %1900 = vmatprep.subr.mxu0 0.0
    %1901 = vmatpush1.msra.mxu0 0.0
    %1902 = vmatprep.subr.mxu0 0.0
    %1903 = vmatpush1.msra.mxu0 0.0
    %1904 = vmatprep.subr.mxu0 0.0
    %1905 = vmatpush1.msra.mxu0 0.0
    %1906 = vmatprep.subr.mxu0 0.0
    %1907 = vmatpush1.msra.mxu0 0.0
    %1908 = vmatprep.subr.mxu0 0.0
    %1909 = vmatpush1.msra.mxu0 0.0
    %1910 = vmatprep.mubr.f32.mxu0 0.0
    %1911 = vmatmul.mubr.f32.gmra.mrb[0].mxu0 %v1774
    %v1912 = vpop.f32.mrb[0].mxu0
    %v1913 = vadd.f32 %v204, %v1912
    %v1914 = vpop.f32.mrb[0].mxu0
    %v1915 = vadd.f32 %v208, %v1914
    %1916 = vdwg.mxu0
    %1917 = vst [vmem:[%s652] sm:$0xff] %v1842
    %1918 = vst [vmem:[%s652 + $0x8] sm:$0xff] %v1844
    %1919 = vst [vmem:[%s652 + $0x10] sm:$0xff] %v1913
    %1920 = vst [vmem:[%s652 + $0x18] sm:$0xff] %v1915
    %v1921 = vmul.f32 %v1770, 0.5
    %v1922 = vtanh.pop %v1921
    %v1923 = vadd.f32 %v1922, 1.0
    %v1924 = vmul.f32 %v1923, 0.5
    %v1925 = vmul.f32 %v1771, 0.5
    %v1926 = vtanh.pop %v1925
    %v1927 = vadd.f32 %v1926, 1.0
    %v1928 = vmul.f32 %v1927, 0.5
    %v1929 = vtanh.pop %v1772
    %v1930 = vmul.f32 %v1773, 0.5
    %v1931 = vtanh.pop %v1930
    %v1932 = vadd.f32 %v1931, 1.0
    %v1933 = vmul.f32 %v1932, 0.5
    %v1934 = vmul.f32 %v1928, %v1620
    %v1935 = vmul.f32 %v1924, %v1929
    %v1936 = vadd.f32 %v1934, %v1935
    %v1937 = vtanh.pop %v1936
    %v1938 = vmul.f32 %v1933, %v1937
    %1939 = vst [vmem:[#allocation3 + $0x20] sm:$0xff] %v1938
    %v1940 = vld [vmem:[%s652] sm:$0xff]
    %v1941 = vld [vmem:[%s652 + $0x8] sm:$0xff]
    %v1942 = vld [vmem:[%s652 + $0x10] sm:$0xff]
    %v1943 = vld [vmem:[%s652 + $0x18] sm:$0xff]
    %1944 = vmatprep.subr.mxu0 %v128
    %1945 = vmatpush1.msra.mxu0 %v127
    %1946 = vmatprep.subr.mxu0 %v132
    %1947 = vmatpush1.msra.mxu0 %v131
    %1948 = vmatprep.subr.mxu0 %v136
    %1949 = vmatpush1.msra.mxu0 %v135
    %1950 = vmatprep.subr.mxu0 %v140
    %1951 = vmatpush1.msra.mxu0 %v139
    %1952 = vmatprep.subr.mxu0 %v144
    %1953 = vmatpush1.msra.mxu0 %v143
    %1954 = vmatprep.subr.mxu0 %v148
    %1955 = vmatpush1.msra.mxu0 %v147
    %1956 = vmatprep.subr.mxu0 %v152
    %1957 = vmatpush1.msra.mxu0 %v151
    %1958 = vmatprep.subr.mxu0 %v156
    %1959 = vmatpush1.msra.mxu0 %v155
    %1960 = vmatprep.subr.mxu0 %v160
    %1961 = vmatpush1.msra.mxu0 %v159
    %1962 = vmatprep.subr.mxu0 %v164
    %1963 = vmatpush1.msra.mxu0 %v163
    %1964 = vmatprep.subr.mxu0 %v168
    %1965 = vmatpush1.msra.mxu0 %v167
    %1966 = vmatprep.subr.mxu0 %v172
    %1967 = vmatpush1.msra.mxu0 %v171
    %1968 = vmatprep.subr.mxu0 %v176
    %1969 = vmatpush1.msra.mxu0 %v175
    %1970 = vmatprep.subr.mxu0 %v180
    %1971 = vmatpush1.msra.mxu0 %v179
    %1972 = vmatprep.subr.mxu0 %v184
    %1973 = vmatpush1.msra.mxu0 %v183
    %1974 = vmatprep.subr.mxu0 %v188
    %1975 = vmatpush1.msra.mxu0 %v187
    %1976 = vmatprep.subr.mxu0 0.0
    %1977 = vmatpush1.msra.mxu0 0.0
    %1978 = vmatprep.subr.mxu0 0.0
    %1979 = vmatpush1.msra.mxu0 0.0
    %1980 = vmatprep.subr.mxu0 0.0
    %1981 = vmatpush1.msra.mxu0 0.0
    %1982 = vmatprep.subr.mxu0 0.0
    %1983 = vmatpush1.msra.mxu0 0.0
    %1984 = vmatprep.subr.mxu0 0.0
    %1985 = vmatpush1.msra.mxu0 0.0
    %1986 = vmatprep.subr.mxu0 0.0
    %1987 = vmatpush1.msra.mxu0 0.0
    %1988 = vmatprep.subr.mxu0 0.0
    %1989 = vmatpush1.msra.mxu0 0.0
    %1990 = vmatprep.subr.mxu0 0.0
    %1991 = vmatpush1.msra.mxu0 0.0
    %1992 = vmatprep.subr.mxu0 0.0
    %1993 = vmatpush1.msra.mxu0 0.0
    %1994 = vmatprep.subr.mxu0 0.0
    %1995 = vmatpush1.msra.mxu0 0.0
    %1996 = vmatprep.subr.mxu0 0.0
    %1997 = vmatpush1.msra.mxu0 0.0
    %1998 = vmatprep.subr.mxu0 0.0
    %1999 = vmatpush1.msra.mxu0 0.0
    %2000 = vmatprep.subr.mxu0 0.0
    %2001 = vmatpush1.msra.mxu0 0.0
    %2002 = vmatprep.subr.mxu0 0.0
    %2003 = vmatpush1.msra.mxu0 0.0
    %2004 = vmatprep.subr.mxu0 0.0
    %2005 = vmatpush1.msra.mxu0 0.0
    %2006 = vmatprep.subr.mxu0 0.0
    %2007 = vmatpush1.msra.mxu0 0.0
    %2008 = vmatprep.mubr.f32.mxu0 0.0
    %2009 = vmatmul.mubr.f32.gmra.mrb[0].mxu0 %v1938
    %v2010 = vpop.f32.mrb[0].mxu0
    %v2011 = vadd.f32 0.0, %v2010
    %v2012 = vpop.f32.mrb[0].mxu0
    %v2013 = vadd.f32 0.0, %v2012
    %2014 = vdwg.mxu0
    %2015 = vmatprep.subr.mxu0 %v130
    %2016 = vmatpush1.msra.mxu0 %v129
    %2017 = vmatprep.subr.mxu0 %v134
    %2018 = vmatpush1.msra.mxu0 %v133
    %2019 = vmatprep.subr.mxu0 %v138
    %2020 = vmatpush1.msra.mxu0 %v137
    %2021 = vmatprep.subr.mxu0 %v142
    %2022 = vmatpush1.msra.mxu0 %v141
    %2023 = vmatprep.subr.mxu0 %v146
    %2024 = vmatpush1.msra.mxu0 %v145
    %2025 = vmatprep.subr.mxu0 %v150
    %2026 = vmatpush1.msra.mxu0 %v149
    %2027 = vmatprep.subr.mxu0 %v154
    %2028 = vmatpush1.msra.mxu0 %v153
    %2029 = vmatprep.subr.mxu0 %v158
    %2030 = vmatpush1.msra.mxu0 %v157
    %2031 = vmatprep.subr.mxu0 %v162
    %2032 = vmatpush1.msra.mxu0 %v161
    %2033 = vmatprep.subr.mxu0 %v166
    %2034 = vmatpush1.msra.mxu0 %v165
    %2035 = vmatprep.subr.mxu0 %v170
    %2036 = vmatpush1.msra.mxu0 %v169
    %2037 = vmatprep.subr.mxu0 %v174
    %2038 = vmatpush1.msra.mxu0 %v173
    %2039 = vmatprep.subr.mxu0 %v178
    %2040 = vmatpush1.msra.mxu0 %v177
    %2041 = vmatprep.subr.mxu0 %v182
    %2042 = vmatpush1.msra.mxu0 %v181
    %2043 = vmatprep.subr.mxu0 %v186
    %2044 = vmatpush1.msra.mxu0 %v185
    %2045 = vmatprep.subr.mxu0 %v190
    %2046 = vmatpush1.msra.mxu0 %v189
    %2047 = vmatprep.subr.mxu0 0.0
    %2048 = vmatpush1.msra.mxu0 0.0
    %2049 = vmatprep.subr.mxu0 0.0
    %2050 = vmatpush1.msra.mxu0 0.0
    %2051 = vmatprep.subr.mxu0 0.0
    %2052 = vmatpush1.msra.mxu0 0.0
    %2053 = vmatprep.subr.mxu0 0.0
    %2054 = vmatpush1.msra.mxu0 0.0
    %2055 = vmatprep.subr.mxu0 0.0
    %2056 = vmatpush1.msra.mxu0 0.0
    %2057 = vmatprep.subr.mxu0 0.0
    %2058 = vmatpush1.msra.mxu0 0.0
    %2059 = vmatprep.subr.mxu0 0.0
    %2060 = vmatpush1.msra.mxu0 0.0
    %2061 = vmatprep.subr.mxu0 0.0
    %2062 = vmatpush1.msra.mxu0 0.0
    %2063 = vmatprep.subr.mxu0 0.0
    %2064 = vmatpush1.msra.mxu0 0.0
    %2065 = vmatprep.subr.mxu0 0.0
    %2066 = vmatpush1.msra.mxu0 0.0
    %2067 = vmatprep.subr.mxu0 0.0
    %2068 = vmatpush1.msra.mxu0 0.0
    %2069 = vmatprep.subr.mxu0 0.0
    %2070 = vmatpush1.msra.mxu0 0.0
    %2071 = vmatprep.subr.mxu0 0.0
    %2072 = vmatpush1.msra.mxu0 0.0
    %2073 = vmatprep.subr.mxu0 0.0
    %2074 = vmatpush1.msra.mxu0 0.0
    %2075 = vmatprep.subr.mxu0 0.0
    %2076 = vmatpush1.msra.mxu0 0.0
    %2077 = vmatprep.subr.mxu0 0.0
    %2078 = vmatpush1.msra.mxu0 0.0
    %2079 = vmatprep.mubr.f32.mxu0 0.0
    %2080 = vmatmul.mubr.f32.gmra.mrb[0].mxu0 %v1938
    %v2081 = vpop.f32.mrb[0].mxu0
    %v2082 = vadd.f32 0.0, %v2081
    %v2083 = vpop.f32.mrb[0].mxu0
    %v2084 = vadd.f32 0.0, %v2083
    %2085 = vdwg.mxu0
    %v2086 = vadd.f32 %v1940, %v2011
    %v2087 = vadd.f32 %v1941, %v2013
    %v2088 = vadd.f32 %v1942, %v2082
    %v2089 = vadd.f32 %v1943, %v2084
    %v2090 = vld [vmem:[%s0 + $0x30] sm:$0xff]
    %2091 = vmatprep.subr.mxu0 %v64
    %2092 = vmatpush1.msra.mxu0 %v63
    %2093 = vmatprep.subr.mxu0 %v68
    %2094 = vmatpush1.msra.mxu0 %v67
    %2095 = vmatprep.subr.mxu0 %v72
    %2096 = vmatpush1.msra.mxu0 %v71
    %2097 = vmatprep.subr.mxu0 %v76
    %2098 = vmatpush1.msra.mxu0 %v75
    %2099 = vmatprep.subr.mxu0 %v80
    %2100 = vmatpush1.msra.mxu0 %v79
    %2101 = vmatprep.subr.mxu0 %v84
    %2102 = vmatpush1.msra.mxu0 %v83
    %2103 = vmatprep.subr.mxu0 %v88
    %2104 = vmatpush1.msra.mxu0 %v87
    %2105 = vmatprep.subr.mxu0 %v92
    %2106 = vmatpush1.msra.mxu0 %v91
    %2107 = vmatprep.subr.mxu0 %v96
    %2108 = vmatpush1.msra.mxu0 %v95
    %2109 = vmatprep.subr.mxu0 %v100
    %2110 = vmatpush1.msra.mxu0 %v99
    %2111 = vmatprep.subr.mxu0 %v104
    %2112 = vmatpush1.msra.mxu0 %v103
    %2113 = vmatprep.subr.mxu0 %v108
    %2114 = vmatpush1.msra.mxu0 %v107
    %2115 = vmatprep.subr.mxu0 %v112
    %2116 = vmatpush1.msra.mxu0 %v111
    %2117 = vmatprep.subr.mxu0 %v116
    %2118 = vmatpush1.msra.mxu0 %v115
    %2119 = vmatprep.subr.mxu0 %v120
    %2120 = vmatpush1.msra.mxu0 %v119
    %2121 = vmatprep.subr.mxu0 %v124
    %2122 = vmatpush1.msra.mxu0 %v123
    %2123 = vmatprep.subr.mxu0 0.0
    %2124 = vmatpush1.msra.mxu0 0.0
    %2125 = vmatprep.subr.mxu0 0.0
    %2126 = vmatpush1.msra.mxu0 0.0
    %2127 = vmatprep.subr.mxu0 0.0
    %2128 = vmatpush1.msra.mxu0 0.0
    %2129 = vmatprep.subr.mxu0 0.0
    %2130 = vmatpush1.msra.mxu0 0.0
    %2131 = vmatprep.subr.mxu0 0.0
    %2132 = vmatpush1.msra.mxu0 0.0
    %2133 = vmatprep.subr.mxu0 0.0
    %2134 = vmatpush1.msra.mxu0 0.0
    %2135 = vmatprep.subr.mxu0 0.0
    %2136 = vmatpush1.msra.mxu0 0.0
    %2137 = vmatprep.subr.mxu0 0.0
    %2138 = vmatpush1.msra.mxu0 0.0
    %2139 = vmatprep.subr.mxu0 0.0
    %2140 = vmatpush1.msra.mxu0 0.0
    %2141 = vmatprep.subr.mxu0 0.0
    %2142 = vmatpush1.msra.mxu0 0.0
    %2143 = vmatprep.subr.mxu0 0.0
    %2144 = vmatpush1.msra.mxu0 0.0
    %2145 = vmatprep.subr.mxu0 0.0
    %2146 = vmatpush1.msra.mxu0 0.0
    %2147 = vmatprep.subr.mxu0 0.0
    %2148 = vmatpush1.msra.mxu0 0.0
    %2149 = vmatprep.subr.mxu0 0.0
    %2150 = vmatpush1.msra.mxu0 0.0
    %2151 = vmatprep.subr.mxu0 0.0
    %2152 = vmatpush1.msra.mxu0 0.0
    %2153 = vmatprep.subr.mxu0 0.0
    %2154 = vmatpush1.msra.mxu0 0.0
    %2155 = vmatprep.mubr.f32.mxu0 0.0
    %2156 = vmatmul.mubr.f32.gmra.mrb[0].mxu0 %v2090
    %v2157 = vpop.f32.mrb[0].mxu0
    %v2158 = vadd.f32 %v196, %v2157
    %v2159 = vpop.f32.mrb[0].mxu0
    %v2160 = vadd.f32 %v200, %v2159
    %2161 = vdwg.mxu0
    %2162 = vmatprep.subr.mxu0 %v66
    %2163 = vmatpush1.msra.mxu0 %v65
    %2164 = vmatprep.subr.mxu0 %v70
    %2165 = vmatpush1.msra.mxu0 %v69
    %2166 = vmatprep.subr.mxu0 %v74
    %2167 = vmatpush1.msra.mxu0 %v73
    %2168 = vmatprep.subr.mxu0 %v78
    %2169 = vmatpush1.msra.mxu0 %v77
    %2170 = vmatprep.subr.mxu0 %v82
    %2171 = vmatpush1.msra.mxu0 %v81
    %2172 = vmatprep.subr.mxu0 %v86
    %2173 = vmatpush1.msra.mxu0 %v85
    %2174 = vmatprep.subr.mxu0 %v90
    %2175 = vmatpush1.msra.mxu0 %v89
    %2176 = vmatprep.subr.mxu0 %v94
    %2177 = vmatpush1.msra.mxu0 %v93
    %2178 = vmatprep.subr.mxu0 %v98
    %2179 = vmatpush1.msra.mxu0 %v97
    %2180 = vmatprep.subr.mxu0 %v102
    %2181 = vmatpush1.msra.mxu0 %v101
    %2182 = vmatprep.subr.mxu0 %v106
    %2183 = vmatpush1.msra.mxu0 %v105
    %2184 = vmatprep.subr.mxu0 %v110
    %2185 = vmatpush1.msra.mxu0 %v109
    %2186 = vmatprep.subr.mxu0 %v114
    %2187 = vmatpush1.msra.mxu0 %v113
    %2188 = vmatprep.subr.mxu0 %v118
    %2189 = vmatpush1.msra.mxu0 %v117
    %2190 = vmatprep.subr.mxu0 %v122
    %2191 = vmatpush1.msra.mxu0 %v121
    %2192 = vmatprep.subr.mxu0 %v126
    %2193 = vmatpush1.msra.mxu0 %v125
    %2194 = vmatprep.subr.mxu0 0.0
    %2195 = vmatpush1.msra.mxu0 0.0
    %2196 = vmatprep.subr.mxu0 0.0
    %2197 = vmatpush1.msra.mxu0 0.0
    %2198 = vmatprep.subr.mxu0 0.0
    %2199 = vmatpush1.msra.mxu0 0.0
    %2200 = vmatprep.subr.mxu0 0.0
    %2201 = vmatpush1.msra.mxu0 0.0
    %2202 = vmatprep.subr.mxu0 0.0
    %2203 = vmatpush1.msra.mxu0 0.0
    %2204 = vmatprep.subr.mxu0 0.0
    %2205 = vmatpush1.msra.mxu0 0.0
    %2206 = vmatprep.subr.mxu0 0.0
    %2207 = vmatpush1.msra.mxu0 0.0
    %2208 = vmatprep.subr.mxu0 0.0
    %2209 = vmatpush1.msra.mxu0 0.0
    %2210 = vmatprep.subr.mxu0 0.0
    %2211 = vmatpush1.msra.mxu0 0.0
    %2212 = vmatprep.subr.mxu0 0.0
    %2213 = vmatpush1.msra.mxu0 0.0
    %2214 = vmatprep.subr.mxu0 0.0
    %2215 = vmatpush1.msra.mxu0 0.0
    %2216 = vmatprep.subr.mxu0 0.0
    %2217 = vmatpush1.msra.mxu0 0.0
    %2218 = vmatprep.subr.mxu0 0.0
    %2219 = vmatpush1.msra.mxu0 0.0
    %2220 = vmatprep.subr.mxu0 0.0
    %2221 = vmatpush1.msra.mxu0 0.0
    %2222 = vmatprep.subr.mxu0 0.0
    %2223 = vmatpush1.msra.mxu0 0.0
    %2224 = vmatprep.subr.mxu0 0.0
    %2225 = vmatpush1.msra.mxu0 0.0
    %2226 = vmatprep.mubr.f32.mxu0 0.0
    %2227 = vmatmul.mubr.f32.gmra.mrb[0].mxu0 %v2090
    %v2228 = vpop.f32.mrb[0].mxu0
    %v2229 = vadd.f32 %v204, %v2228
    %v2230 = vpop.f32.mrb[0].mxu0
    %v2231 = vadd.f32 %v208, %v2230
    %2232 = vdwg.mxu0
    %2233 = vst [vmem:[#allocation2] sm:$0xff] %v2158
    %2234 = vst [vmem:[#allocation2 + $0x8] sm:$0xff] %v2160
    %2235 = vst [vmem:[#allocation2 + $0x10] sm:$0xff] %v2229
    %2236 = vst [vmem:[#allocation2 + $0x18] sm:$0xff] %v2231
    %v2237 = vmul.f32 %v2086, 0.5
    %v2238 = vtanh.pop %v2237
    %v2239 = vadd.f32 %v2238, 1.0
    %v2240 = vmul.f32 %v2239, 0.5
    %v2241 = vmul.f32 %v2087, 0.5
    %v2242 = vtanh.pop %v2241
    %v2243 = vadd.f32 %v2242, 1.0
    %v2244 = vmul.f32 %v2243, 0.5
    %v2245 = vtanh.pop %v2088
    %v2246 = vmul.f32 %v2089, 0.5
    %v2247 = vtanh.pop %v2246
    %v2248 = vadd.f32 %v2247, 1.0
    %v2249 = vmul.f32 %v2248, 0.5
    %v2250 = vmul.f32 %v2244, %v1936
    %v2251 = vmul.f32 %v2240, %v2245
    %v2252 = vadd.f32 %v2250, %v2251
    %v2253 = vtanh.pop %v2252
    %v2254 = vmul.f32 %v2249, %v2253
    %2255 = vst [vmem:[#allocation3 + $0x28] sm:$0xff] %v2254
    %v2256 = vld [vmem:[#allocation2] sm:$0xff]
    %v2257 = vld [vmem:[#allocation2 + $0x8] sm:$0xff]
    %v2258 = vld [vmem:[#allocation2 + $0x10] sm:$0xff]
    %v2259 = vld [vmem:[#allocation2 + $0x18] sm:$0xff]
    %2260 = vmatprep.subr.mxu0 %v128
    %2261 = vmatpush1.msra.mxu0 %v127
    %2262 = vmatprep.subr.mxu0 %v132
    %2263 = vmatpush1.msra.mxu0 %v131
    %2264 = vmatprep.subr.mxu0 %v136
    %2265 = vmatpush1.msra.mxu0 %v135
    %2266 = vmatprep.subr.mxu0 %v140
    %2267 = vmatpush1.msra.mxu0 %v139
    %2268 = vmatprep.subr.mxu0 %v144
    %2269 = vmatpush1.msra.mxu0 %v143
    %2270 = vmatprep.subr.mxu0 %v148
    %2271 = vmatpush1.msra.mxu0 %v147
    %2272 = vmatprep.subr.mxu0 %v152
    %2273 = vmatpush1.msra.mxu0 %v151
    %2274 = vmatprep.subr.mxu0 %v156
    %2275 = vmatpush1.msra.mxu0 %v155
    %2276 = vmatprep.subr.mxu0 %v160
    %2277 = vmatpush1.msra.mxu0 %v159
    %2278 = vmatprep.subr.mxu0 %v164
    %2279 = vmatpush1.msra.mxu0 %v163
    %2280 = vmatprep.subr.mxu0 %v168
    %2281 = vmatpush1.msra.mxu0 %v167
    %2282 = vmatprep.subr.mxu0 %v172
    %2283 = vmatpush1.msra.mxu0 %v171
    %2284 = vmatprep.subr.mxu0 %v176
    %2285 = vmatpush1.msra.mxu0 %v175
    %2286 = vmatprep.subr.mxu0 %v180
    %2287 = vmatpush1.msra.mxu0 %v179
    %2288 = vmatprep.subr.mxu0 %v184
    %2289 = vmatpush1.msra.mxu0 %v183
    %2290 = vmatprep.subr.mxu0 %v188
    %2291 = vmatpush1.msra.mxu0 %v187
    %2292 = vmatprep.subr.mxu0 0.0
    %2293 = vmatpush1.msra.mxu0 0.0
    %2294 = vmatprep.subr.mxu0 0.0
    %2295 = vmatpush1.msra.mxu0 0.0
    %2296 = vmatprep.subr.mxu0 0.0
    %2297 = vmatpush1.msra.mxu0 0.0
    %2298 = vmatprep.subr.mxu0 0.0
    %2299 = vmatpush1.msra.mxu0 0.0
    %2300 = vmatprep.subr.mxu0 0.0
    %2301 = vmatpush1.msra.mxu0 0.0
    %2302 = vmatprep.subr.mxu0 0.0
    %2303 = vmatpush1.msra.mxu0 0.0
    %2304 = vmatprep.subr.mxu0 0.0
    %2305 = vmatpush1.msra.mxu0 0.0
    %2306 = vmatprep.subr.mxu0 0.0
    %2307 = vmatpush1.msra.mxu0 0.0
    %2308 = vmatprep.subr.mxu0 0.0
    %2309 = vmatpush1.msra.mxu0 0.0
    %2310 = vmatprep.subr.mxu0 0.0
    %2311 = vmatpush1.msra.mxu0 0.0
    %2312 = vmatprep.subr.mxu0 0.0
    %2313 = vmatpush1.msra.mxu0 0.0
    %2314 = vmatprep.subr.mxu0 0.0
    %2315 = vmatpush1.msra.mxu0 0.0
    %2316 = vmatprep.subr.mxu0 0.0
    %2317 = vmatpush1.msra.mxu0 0.0
    %2318 = vmatprep.subr.mxu0 0.0
    %2319 = vmatpush1.msra.mxu0 0.0
    %2320 = vmatprep.subr.mxu0 0.0
    %2321 = vmatpush1.msra.mxu0 0.0
    %2322 = vmatprep.subr.mxu0 0.0
    %2323 = vmatpush1.msra.mxu0 0.0
    %2324 = vmatprep.mubr.f32.mxu0 0.0
    %2325 = vmatmul.mubr.f32.gmra.mrb[0].mxu0 %v2254
    %v2326 = vpop.f32.mrb[0].mxu0
    %v2327 = vadd.f32 0.0, %v2326
    %v2328 = vpop.f32.mrb[0].mxu0
    %v2329 = vadd.f32 0.0, %v2328
    %2330 = vdwg.mxu0
    %2331 = vmatprep.subr.mxu0 %v130
    %2332 = vmatpush1.msra.mxu0 %v129
    %2333 = vmatprep.subr.mxu0 %v134
    %2334 = vmatpush1.msra.mxu0 %v133
    %2335 = vmatprep.subr.mxu0 %v138
    %2336 = vmatpush1.msra.mxu0 %v137
    %2337 = vmatprep.subr.mxu0 %v142
    %2338 = vmatpush1.msra.mxu0 %v141
    %2339 = vmatprep.subr.mxu0 %v146
    %2340 = vmatpush1.msra.mxu0 %v145
    %2341 = vmatprep.subr.mxu0 %v150
    %2342 = vmatpush1.msra.mxu0 %v149
    %2343 = vmatprep.subr.mxu0 %v154
    %2344 = vmatpush1.msra.mxu0 %v153
    %2345 = vmatprep.subr.mxu0 %v158
    %2346 = vmatpush1.msra.mxu0 %v157
    %2347 = vmatprep.subr.mxu0 %v162
    %2348 = vmatpush1.msra.mxu0 %v161
    %2349 = vmatprep.subr.mxu0 %v166
    %2350 = vmatpush1.msra.mxu0 %v165
    %2351 = vmatprep.subr.mxu0 %v170
    %2352 = vmatpush1.msra.mxu0 %v169
    %2353 = vmatprep.subr.mxu0 %v174
    %2354 = vmatpush1.msra.mxu0 %v173
    %2355 = vmatprep.subr.mxu0 %v178
    %2356 = vmatpush1.msra.mxu0 %v177
    %2357 = vmatprep.subr.mxu0 %v182
    %2358 = vmatpush1.msra.mxu0 %v181
    %2359 = vmatprep.subr.mxu0 %v186
    %2360 = vmatpush1.msra.mxu0 %v185
    %2361 = vmatprep.subr.mxu0 %v190
    %2362 = vmatpush1.msra.mxu0 %v189
    %2363 = vmatprep.subr.mxu0 0.0
    %2364 = vmatpush1.msra.mxu0 0.0
    %2365 = vmatprep.subr.mxu0 0.0
    %2366 = vmatpush1.msra.mxu0 0.0
    %2367 = vmatprep.subr.mxu0 0.0
    %2368 = vmatpush1.msra.mxu0 0.0
    %2369 = vmatprep.subr.mxu0 0.0
    %2370 = vmatpush1.msra.mxu0 0.0
    %2371 = vmatprep.subr.mxu0 0.0
    %2372 = vmatpush1.msra.mxu0 0.0
    %2373 = vmatprep.subr.mxu0 0.0
    %2374 = vmatpush1.msra.mxu0 0.0
    %2375 = vmatprep.subr.mxu0 0.0
    %2376 = vmatpush1.msra.mxu0 0.0
    %2377 = vmatprep.subr.mxu0 0.0
    %2378 = vmatpush1.msra.mxu0 0.0
    %2379 = vmatprep.subr.mxu0 0.0
    %2380 = vmatpush1.msra.mxu0 0.0
    %2381 = vmatprep.subr.mxu0 0.0
    %2382 = vmatpush1.msra.mxu0 0.0
    %2383 = vmatprep.subr.mxu0 0.0
    %2384 = vmatpush1.msra.mxu0 0.0
    %2385 = vmatprep.subr.mxu0 0.0
    %2386 = vmatpush1.msra.mxu0 0.0
    %2387 = vmatprep.subr.mxu0 0.0
    %2388 = vmatpush1.msra.mxu0 0.0
    %2389 = vmatprep.subr.mxu0 0.0
    %2390 = vmatpush1.msra.mxu0 0.0
    %2391 = vmatprep.subr.mxu0 0.0
    %2392 = vmatpush1.msra.mxu0 0.0
    %2393 = vmatprep.subr.mxu0 0.0
    %2394 = vmatpush1.msra.mxu0 0.0
    %2395 = vmatprep.mubr.f32.mxu0 0.0
    %2396 = vmatmul.mubr.f32.gmra.mrb[0].mxu0 %v2254
    %v2397 = vpop.f32.mrb[0].mxu0
    %v2398 = vadd.f32 0.0, %v2397
    %v2399 = vpop.f32.mrb[0].mxu0
    %v2400 = vadd.f32 0.0, %v2399
    %2401 = vdwg.mxu0
    %v2402 = vadd.f32 %v2256, %v2327
    %v2403 = vadd.f32 %v2257, %v2329
    %v2404 = vadd.f32 %v2258, %v2398
    %v2405 = vadd.f32 %v2259, %v2400
    %v2406 = vld [vmem:[%s0 + $0x38] sm:$0xff]
    %2407 = vmatprep.subr.mxu0 %v64
    %2408 = vmatpush1.msra.mxu0 %v63
    %2409 = vmatprep.subr.mxu0 %v68
    %2410 = vmatpush1.msra.mxu0 %v67
    %2411 = vmatprep.subr.mxu0 %v72
    %2412 = vmatpush1.msra.mxu0 %v71
    %2413 = vmatprep.subr.mxu0 %v76
    %2414 = vmatpush1.msra.mxu0 %v75
    %2415 = vmatprep.subr.mxu0 %v80
    %2416 = vmatpush1.msra.mxu0 %v79
    %2417 = vmatprep.subr.mxu0 %v84
    %2418 = vmatpush1.msra.mxu0 %v83
    %2419 = vmatprep.subr.mxu0 %v88
    %2420 = vmatpush1.msra.mxu0 %v87
    %2421 = vmatprep.subr.mxu0 %v92
    %2422 = vmatpush1.msra.mxu0 %v91
    %2423 = vmatprep.subr.mxu0 %v96
    %2424 = vmatpush1.msra.mxu0 %v95
    %2425 = vmatprep.subr.mxu0 %v100
    %2426 = vmatpush1.msra.mxu0 %v99
    %2427 = vmatprep.subr.mxu0 %v104
    %2428 = vmatpush1.msra.mxu0 %v103
    %2429 = vmatprep.subr.mxu0 %v108
    %2430 = vmatpush1.msra.mxu0 %v107
    %2431 = vmatprep.subr.mxu0 %v112
    %2432 = vmatpush1.msra.mxu0 %v111
    %2433 = vmatprep.subr.mxu0 %v116
    %2434 = vmatpush1.msra.mxu0 %v115
    %2435 = vmatprep.subr.mxu0 %v120
    %2436 = vmatpush1.msra.mxu0 %v119
    %2437 = vmatprep.subr.mxu0 %v124
    %2438 = vmatpush1.msra.mxu0 %v123
    %2439 = vmatprep.subr.mxu0 0.0
    %2440 = vmatpush1.msra.mxu0 0.0
    %2441 = vmatprep.subr.mxu0 0.0
    %2442 = vmatpush1.msra.mxu0 0.0
    %2443 = vmatprep.subr.mxu0 0.0
    %2444 = vmatpush1.msra.mxu0 0.0
    %2445 = vmatprep.subr.mxu0 0.0
    %2446 = vmatpush1.msra.mxu0 0.0
    %2447 = vmatprep.subr.mxu0 0.0
    %2448 = vmatpush1.msra.mxu0 0.0
    %2449 = vmatprep.subr.mxu0 0.0
    %2450 = vmatpush1.msra.mxu0 0.0
    %2451 = vmatprep.subr.mxu0 0.0
    %2452 = vmatpush1.msra.mxu0 0.0
    %2453 = vmatprep.subr.mxu0 0.0
    %2454 = vmatpush1.msra.mxu0 0.0
    %2455 = vmatprep.subr.mxu0 0.0
    %2456 = vmatpush1.msra.mxu0 0.0
    %2457 = vmatprep.subr.mxu0 0.0
    %2458 = vmatpush1.msra.mxu0 0.0
    %2459 = vmatprep.subr.mxu0 0.0
    %2460 = vmatpush1.msra.mxu0 0.0
    %2461 = vmatprep.subr.mxu0 0.0
    %2462 = vmatpush1.msra.mxu0 0.0
    %2463 = vmatprep.subr.mxu0 0.0
    %2464 = vmatpush1.msra.mxu0 0.0
    %2465 = vmatprep.subr.mxu0 0.0
    %2466 = vmatpush1.msra.mxu0 0.0
    %2467 = vmatprep.subr.mxu0 0.0
    %2468 = vmatpush1.msra.mxu0 0.0
    %2469 = vmatprep.subr.mxu0 0.0
    %2470 = vmatpush1.msra.mxu0 0.0
    %2471 = vmatprep.mubr.f32.mxu0 0.0
    %2472 = vmatmul.mubr.f32.gmra.mrb[0].mxu0 %v2406
    %v2473 = vpop.f32.mrb[0].mxu0
    %v2474 = vadd.f32 %v196, %v2473
    %v2475 = vpop.f32.mrb[0].mxu0
    %v2476 = vadd.f32 %v200, %v2475
    %2477 = vdwg.mxu0
    %2478 = vmatprep.subr.mxu0 %v66
    %2479 = vmatpush1.msra.mxu0 %v65
    %2480 = vmatprep.subr.mxu0 %v70
    %2481 = vmatpush1.msra.mxu0 %v69
    %2482 = vmatprep.subr.mxu0 %v74
    %2483 = vmatpush1.msra.mxu0 %v73
    %2484 = vmatprep.subr.mxu0 %v78
    %2485 = vmatpush1.msra.mxu0 %v77
    %2486 = vmatprep.subr.mxu0 %v82
    %2487 = vmatpush1.msra.mxu0 %v81
    %2488 = vmatprep.subr.mxu0 %v86
    %2489 = vmatpush1.msra.mxu0 %v85
    %2490 = vmatprep.subr.mxu0 %v90
    %2491 = vmatpush1.msra.mxu0 %v89
    %2492 = vmatprep.subr.mxu0 %v94
    %2493 = vmatpush1.msra.mxu0 %v93
    %2494 = vmatprep.subr.mxu0 %v98
    %2495 = vmatpush1.msra.mxu0 %v97
    %2496 = vmatprep.subr.mxu0 %v102
    %2497 = vmatpush1.msra.mxu0 %v101
    %2498 = vmatprep.subr.mxu0 %v106
    %2499 = vmatpush1.msra.mxu0 %v105
    %2500 = vmatprep.subr.mxu0 %v110
    %2501 = vmatpush1.msra.mxu0 %v109
    %2502 = vmatprep.subr.mxu0 %v114
    %2503 = vmatpush1.msra.mxu0 %v113
    %2504 = vmatprep.subr.mxu0 %v118
    %2505 = vmatpush1.msra.mxu0 %v117
    %2506 = vmatprep.subr.mxu0 %v122
    %2507 = vmatpush1.msra.mxu0 %v121
    %2508 = vmatprep.subr.mxu0 %v126
    %2509 = vmatpush1.msra.mxu0 %v125
    %2510 = vmatprep.subr.mxu0 0.0
    %2511 = vmatpush1.msra.mxu0 0.0
    %2512 = vmatprep.subr.mxu0 0.0
    %2513 = vmatpush1.msra.mxu0 0.0
    %2514 = vmatprep.subr.mxu0 0.0
    %2515 = vmatpush1.msra.mxu0 0.0
    %2516 = vmatprep.subr.mxu0 0.0
    %2517 = vmatpush1.msra.mxu0 0.0
    %2518 = vmatprep.subr.mxu0 0.0
    %2519 = vmatpush1.msra.mxu0 0.0
    %2520 = vmatprep.subr.mxu0 0.0
    %2521 = vmatpush1.msra.mxu0 0.0
    %2522 = vmatprep.subr.mxu0 0.0
    %2523 = vmatpush1.msra.mxu0 0.0
    %2524 = vmatprep.subr.mxu0 0.0
    %2525 = vmatpush1.msra.mxu0 0.0
    %2526 = vmatprep.subr.mxu0 0.0
    %2527 = vmatpush1.msra.mxu0 0.0
    %2528 = vmatprep.subr.mxu0 0.0
    %2529 = vmatpush1.msra.mxu0 0.0
    %2530 = vmatprep.subr.mxu0 0.0
    %2531 = vmatpush1.msra.mxu0 0.0
    %2532 = vmatprep.subr.mxu0 0.0
    %2533 = vmatpush1.msra.mxu0 0.0
    %2534 = vmatprep.subr.mxu0 0.0
    %2535 = vmatpush1.msra.mxu0 0.0
    %2536 = vmatprep.subr.mxu0 0.0
    %2537 = vmatpush1.msra.mxu0 0.0
    %2538 = vmatprep.subr.mxu0 0.0
    %2539 = vmatpush1.msra.mxu0 0.0
    %2540 = vmatprep.subr.mxu0 0.0
    %2541 = vmatpush1.msra.mxu0 0.0
    %2542 = vmatprep.mubr.f32.mxu0 0.0
    %2543 = vmatmul.mubr.f32.gmra.mrb[0].mxu0 %v2406
    %v2544 = vpop.f32.mrb[0].mxu0
    %v2545 = vadd.f32 %v204, %v2544
    %v2546 = vpop.f32.mrb[0].mxu0
    %v2547 = vadd.f32 %v208, %v2546
    %2548 = vdwg.mxu0
    %2549 = vst [vmem:[%s652] sm:$0xff] %v2474
    %2550 = vst [vmem:[%s652 + $0x8] sm:$0xff] %v2476
    %2551 = vst [vmem:[%s652 + $0x10] sm:$0xff] %v2545
    %2552 = vst [vmem:[%s652 + $0x18] sm:$0xff] %v2547
    %v2553 = vmul.f32 %v2402, 0.5
    %v2554 = vtanh.pop %v2553
    %v2555 = vadd.f32 %v2554, 1.0
    %v2556 = vmul.f32 %v2555, 0.5
    %v2557 = vmul.f32 %v2403, 0.5
    %v2558 = vtanh.pop %v2557
    %v2559 = vadd.f32 %v2558, 1.0
    %v2560 = vmul.f32 %v2559, 0.5
    %v2561 = vtanh.pop %v2404
    %v2562 = vmul.f32 %v2405, 0.5
    %v2563 = vtanh.pop %v2562
    %v2564 = vadd.f32 %v2563, 1.0
    %v2565 = vmul.f32 %v2564, 0.5
    %v2566 = vmul.f32 %v2560, %v2252
    %v2567 = vmul.f32 %v2556, %v2561
    %v2568 = vadd.f32 %v2566, %v2567
    %v2569 = vtanh.pop %v2568
    %v2570 = vmul.f32 %v2565, %v2569
    %2571 = vst [vmem:[#allocation3 + $0x30] sm:$0xff] %v2570
    %v2572 = vld [vmem:[%s652] sm:$0xff]
    %v2573 = vld [vmem:[%s652 + $0x8] sm:$0xff]
    %v2574 = vld [vmem:[%s652 + $0x10] sm:$0xff]
    %v2575 = vld [vmem:[%s652 + $0x18] sm:$0xff]
    %2576 = vmatprep.subr.mxu0 %v128
    %2577 = vmatpush1.msra.mxu0 %v127
    %2578 = vmatprep.subr.mxu0 %v132
    %2579 = vmatpush1.msra.mxu0 %v131
    %2580 = vmatprep.subr.mxu0 %v136
    %2581 = vmatpush1.msra.mxu0 %v135
    %2582 = vmatprep.subr.mxu0 %v140
    %2583 = vmatpush1.msra.mxu0 %v139
    %2584 = vmatprep.subr.mxu0 %v144
    %2585 = vmatpush1.msra.mxu0 %v143
    %2586 = vmatprep.subr.mxu0 %v148
    %2587 = vmatpush1.msra.mxu0 %v147
    %2588 = vmatprep.subr.mxu0 %v152
    %2589 = vmatpush1.msra.mxu0 %v151
    %2590 = vmatprep.subr.mxu0 %v156
    %2591 = vmatpush1.msra.mxu0 %v155
    %2592 = vmatprep.subr.mxu0 %v160
    %2593 = vmatpush1.msra.mxu0 %v159
    %2594 = vmatprep.subr.mxu0 %v164
    %2595 = vmatpush1.msra.mxu0 %v163
    %2596 = vmatprep.subr.mxu0 %v168
    %2597 = vmatpush1.msra.mxu0 %v167
    %2598 = vmatprep.subr.mxu0 %v172
    %2599 = vmatpush1.msra.mxu0 %v171
    %2600 = vmatprep.subr.mxu0 %v176
    %2601 = vmatpush1.msra.mxu0 %v175
    %2602 = vmatprep.subr.mxu0 %v180
    %2603 = vmatpush1.msra.mxu0 %v179
    %2604 = vmatprep.subr.mxu0 %v184
    %2605 = vmatpush1.msra.mxu0 %v183
    %2606 = vmatprep.subr.mxu0 %v188
    %2607 = vmatpush1.msra.mxu0 %v187
    %2608 = vmatprep.subr.mxu0 0.0
    %2609 = vmatpush1.msra.mxu0 0.0
    %2610 = vmatprep.subr.mxu0 0.0
    %2611 = vmatpush1.msra.mxu0 0.0
    %2612 = vmatprep.subr.mxu0 0.0
    %2613 = vmatpush1.msra.mxu0 0.0
    %2614 = vmatprep.subr.mxu0 0.0
    %2615 = vmatpush1.msra.mxu0 0.0
    %2616 = vmatprep.subr.mxu0 0.0
    %2617 = vmatpush1.msra.mxu0 0.0
    %2618 = vmatprep.subr.mxu0 0.0
    %2619 = vmatpush1.msra.mxu0 0.0
    %2620 = vmatprep.subr.mxu0 0.0
    %2621 = vmatpush1.msra.mxu0 0.0
    %2622 = vmatprep.subr.mxu0 0.0
    %2623 = vmatpush1.msra.mxu0 0.0
    %2624 = vmatprep.subr.mxu0 0.0
    %2625 = vmatpush1.msra.mxu0 0.0
    %2626 = vmatprep.subr.mxu0 0.0
    %2627 = vmatpush1.msra.mxu0 0.0
    %2628 = vmatprep.subr.mxu0 0.0
    %2629 = vmatpush1.msra.mxu0 0.0
    %2630 = vmatprep.subr.mxu0 0.0
    %2631 = vmatpush1.msra.mxu0 0.0
    %2632 = vmatprep.subr.mxu0 0.0
    %2633 = vmatpush1.msra.mxu0 0.0
    %2634 = vmatprep.subr.mxu0 0.0
    %2635 = vmatpush1.msra.mxu0 0.0
    %2636 = vmatprep.subr.mxu0 0.0
    %2637 = vmatpush1.msra.mxu0 0.0
    %2638 = vmatprep.subr.mxu0 0.0
    %2639 = vmatpush1.msra.mxu0 0.0
    %2640 = vmatprep.mubr.f32.mxu0 0.0
    %2641 = vmatmul.mubr.f32.gmra.mrb[0].mxu0 %v2570
    %v2642 = vpop.f32.mrb[0].mxu0
    %v2643 = vadd.f32 0.0, %v2642
    %v2644 = vpop.f32.mrb[0].mxu0
    %v2645 = vadd.f32 0.0, %v2644
    %2646 = vdwg.mxu0
    %2647 = vmatprep.subr.mxu0 %v130
    %2648 = vmatpush1.msra.mxu0 %v129
    %2649 = vmatprep.subr.mxu0 %v134
    %2650 = vmatpush1.msra.mxu0 %v133
    %2651 = vmatprep.subr.mxu0 %v138
    %2652 = vmatpush1.msra.mxu0 %v137
    %2653 = vmatprep.subr.mxu0 %v142
    %2654 = vmatpush1.msra.mxu0 %v141
    %2655 = vmatprep.subr.mxu0 %v146
    %2656 = vmatpush1.msra.mxu0 %v145
    %2657 = vmatprep.subr.mxu0 %v150
    %2658 = vmatpush1.msra.mxu0 %v149
    %2659 = vmatprep.subr.mxu0 %v154
    %2660 = vmatpush1.msra.mxu0 %v153
    %2661 = vmatprep.subr.mxu0 %v158
    %2662 = vmatpush1.msra.mxu0 %v157
    %2663 = vmatprep.subr.mxu0 %v162
    %2664 = vmatpush1.msra.mxu0 %v161
    %2665 = vmatprep.subr.mxu0 %v166
    %2666 = vmatpush1.msra.mxu0 %v165
    %2667 = vmatprep.subr.mxu0 %v170
    %2668 = vmatpush1.msra.mxu0 %v169
    %2669 = vmatprep.subr.mxu0 %v174
    %2670 = vmatpush1.msra.mxu0 %v173
    %2671 = vmatprep.subr.mxu0 %v178
    %2672 = vmatpush1.msra.mxu0 %v177
    %2673 = vmatprep.subr.mxu0 %v182
    %2674 = vmatpush1.msra.mxu0 %v181
    %2675 = vmatprep.subr.mxu0 %v186
    %2676 = vmatpush1.msra.mxu0 %v185
    %2677 = vmatprep.subr.mxu0 %v190
    %2678 = vmatpush1.msra.mxu0 %v189
    %2679 = vmatprep.subr.mxu0 0.0
    %2680 = vmatpush1.msra.mxu0 0.0
    %2681 = vmatprep.subr.mxu0 0.0
    %2682 = vmatpush1.msra.mxu0 0.0
    %2683 = vmatprep.subr.mxu0 0.0
    %2684 = vmatpush1.msra.mxu0 0.0
    %2685 = vmatprep.subr.mxu0 0.0
    %2686 = vmatpush1.msra.mxu0 0.0
    %2687 = vmatprep.subr.mxu0 0.0
    %2688 = vmatpush1.msra.mxu0 0.0
    %2689 = vmatprep.subr.mxu0 0.0
    %2690 = vmatpush1.msra.mxu0 0.0
    %2691 = vmatprep.subr.mxu0 0.0
    %2692 = vmatpush1.msra.mxu0 0.0
    %2693 = vmatprep.subr.mxu0 0.0
    %2694 = vmatpush1.msra.mxu0 0.0
    %2695 = vmatprep.subr.mxu0 0.0
    %2696 = vmatpush1.msra.mxu0 0.0
    %2697 = vmatprep.subr.mxu0 0.0
    %2698 = vmatpush1.msra.mxu0 0.0
    %2699 = vmatprep.subr.mxu0 0.0
    %2700 = vmatpush1.msra.mxu0 0.0
    %2701 = vmatprep.subr.mxu0 0.0
    %2702 = vmatpush1.msra.mxu0 0.0
    %2703 = vmatprep.subr.mxu0 0.0
    %2704 = vmatpush1.msra.mxu0 0.0
    %2705 = vmatprep.subr.mxu0 0.0
    %2706 = vmatpush1.msra.mxu0 0.0
    %2707 = vmatprep.subr.mxu0 0.0
    %2708 = vmatpush1.msra.mxu0 0.0
    %2709 = vmatprep.subr.mxu0 0.0
    %2710 = vmatpush1.msra.mxu0 0.0
    %2711 = vmatprep.mubr.f32.mxu0 0.0
    %2712 = vmatmul.mubr.f32.gmra.mrb[0].mxu0 %v2570
    %v2713 = vpop.f32.mrb[0].mxu0
    %v2714 = vadd.f32 0.0, %v2713
    %v2715 = vpop.f32.mrb[0].mxu0
    %v2716 = vadd.f32 0.0, %v2715
    %2717 = vdwg.mxu0
    %v2718 = vadd.f32 %v2572, %v2643
    %v2719 = vadd.f32 %v2573, %v2645
    %v2720 = vadd.f32 %v2574, %v2714
    %v2721 = vadd.f32 %v2575, %v2716
    %v2722 = vmul.f32 %v2718, 0.5
    %v2723 = vtanh.pop %v2722
    %v2724 = vadd.f32 %v2723, 1.0
    %v2725 = vmul.f32 %v2724, 0.5
    %v2726 = vmul.f32 %v2719, 0.5
    %v2727 = vtanh.pop %v2726
    %v2728 = vadd.f32 %v2727, 1.0
    %v2729 = vmul.f32 %v2728, 0.5
    %v2730 = vtanh.pop %v2720
    %v2731 = vmul.f32 %v2721, 0.5
    %v2732 = vtanh.pop %v2731
    %v2733 = vadd.f32 %v2732, 1.0
    %v2734 = vmul.f32 %v2733, 0.5
    %v2735 = vmul.f32 %v2729, %v2568
    %v2736 = vmul.f32 %v2725, %v2730
    %v2737 = vadd.f32 %v2735, %v2736
    %v2738 = vtanh.pop %v2737
    %v2739 = vmul.f32 %v2734, %v2738
    %2740 = vst [vmem:[#allocation3 + $0x38] sm:$0xff] %v2739
    %2741 = vst [vmem:[%s9] sm:$0xff] %v2739
    %2742 = vst [vmem:[%s10] sm:$0xff] %v2737
    %v2743 = vld [vmem:[#allocation3] sm:$0xff]
    %v2744 = vld [vmem:[#allocation3 + $0x8] sm:$0xff]
    %v2745 = vld [vmem:[#allocation3 + $0x10] sm:$0xff]
    %v2746 = vld [vmem:[#allocation3 + $0x18] sm:$0xff]
    %v2747 = vld [vmem:[#allocation3 + $0x20] sm:$0xff]
    %v2748 = vld [vmem:[#allocation3 + $0x28] sm:$0xff]
    %v2749 = vld [vmem:[#allocation3 + $0x30] sm:$0xff]
    %v2750 = vld [vmem:[#allocation3 + $0x38] sm:$0xff]
    %v2751 = vld [vmem:[%s6] sm:$0xff]
    %v2752 = vld [vmem:[%s6 + $0x8] sm:$0xff]
    %v2753 = vld [vmem:[%s6 + $0x10] sm:$0xff]
    %v2754 = vld [vmem:[%s6 + $0x18] sm:$0xff]
    %v2755 = vld [vmem:[%s6 + $0x20] sm:$0xff]
    %v2756 = vld [vmem:[%s6 + $0x28] sm:$0xff]
    %v2757 = vld [vmem:[%s6 + $0x30] sm:$0xff]
    %v2758 = vld [vmem:[%s6 + $0x38] sm:$0xff]
    %v2759 = vld [vmem:[%s6 + $0x40] sm:$0xff]
    %v2760 = vld [vmem:[%s6 + $0x48] sm:$0xff]
    %v2761 = vld [vmem:[%s6 + $0x50] sm:$0xff]
    %v2762 = vld [vmem:[%s6 + $0x58] sm:$0xff]
    %v2763 = vld [vmem:[%s6 + $0x60] sm:$0xff]
    %v2764 = vld [vmem:[%s6 + $0x68] sm:$0xff]
    %v2765 = vld [vmem:[%s6 + $0x70] sm:$0xff]
    %v2766 = vld [vmem:[%s6 + $0x78] sm:$0xff]
    %v2767 = vld [vmem:[%s7] sm:$0x1]
    %v2769 = vlaneseq
    %v2770 = vshrl.u32 %v2769, 7
    %v2771 = vsub.s32 0, %v2770
    %v2772 = vrot.slane %v2767, %v2771
    %2774 = vmatprep.subr.mxu0 0.0
    %2775 = vmatpush1.msra.mxu0 %v2751
    %2776 = vmatprep.subr.mxu0 0.0
    %2777 = vmatpush1.msra.mxu0 %v2752
    %2778 = vmatprep.subr.mxu0 0.0
    %2779 = vmatpush1.msra.mxu0 %v2753
    %2780 = vmatprep.subr.mxu0 0.0
    %2781 = vmatpush1.msra.mxu0 %v2754
    %2782 = vmatprep.subr.mxu0 0.0
    %2783 = vmatpush1.msra.mxu0 %v2755
    %2784 = vmatprep.subr.mxu0 0.0
    %2785 = vmatpush1.msra.mxu0 %v2756
    %2786 = vmatprep.subr.mxu0 0.0
    %2787 = vmatpush1.msra.mxu0 %v2757
    %2788 = vmatprep.subr.mxu0 0.0
    %2789 = vmatpush1.msra.mxu0 %v2758
    %2790 = vmatprep.subr.mxu0 0.0
    %2791 = vmatpush1.msra.mxu0 %v2759
    %2792 = vmatprep.subr.mxu0 0.0
    %2793 = vmatpush1.msra.mxu0 %v2760
    %2794 = vmatprep.subr.mxu0 0.0
    %2795 = vmatpush1.msra.mxu0 %v2761
    %2796 = vmatprep.subr.mxu0 0.0
    %2797 = vmatpush1.msra.mxu0 %v2762
    %2798 = vmatprep.subr.mxu0 0.0
    %2799 = vmatpush1.msra.mxu0 %v2763
    %2800 = vmatprep.subr.mxu0 0.0
    %2801 = vmatpush1.msra.mxu0 %v2764
    %2802 = vmatprep.subr.mxu0 0.0
    %2803 = vmatpush1.msra.mxu0 %v2765
    %2804 = vmatprep.subr.mxu0 0.0
    %2805 = vmatpush1.msra.mxu0 %v2766
    %2806 = vmatprep.subr.mxu0 0.0
    %2807 = vmatpush1.msra.mxu0 0.0
    %2808 = vmatprep.subr.mxu0 0.0
    %2809 = vmatpush1.msra.mxu0 0.0
    %2810 = vmatprep.subr.mxu0 0.0
    %2811 = vmatpush1.msra.mxu0 0.0
    %2812 = vmatprep.subr.mxu0 0.0
    %2813 = vmatpush1.msra.mxu0 0.0
    %2814 = vmatprep.subr.mxu0 0.0
    %2815 = vmatpush1.msra.mxu0 0.0
    %2816 = vmatprep.subr.mxu0 0.0
    %2817 = vmatpush1.msra.mxu0 0.0
    %2818 = vmatprep.subr.mxu0 0.0
    %2819 = vmatpush1.msra.mxu0 0.0
    %2820 = vmatprep.subr.mxu0 0.0
    %2821 = vmatpush1.msra.mxu0 0.0
    %2822 = vmatprep.subr.mxu0 0.0
    %2823 = vmatpush1.msra.mxu0 0.0
    %2824 = vmatprep.subr.mxu0 0.0
    %2825 = vmatpush1.msra.mxu0 0.0
    %2826 = vmatprep.subr.mxu0 0.0
    %2827 = vmatpush1.msra.mxu0 0.0
    %2828 = vmatprep.subr.mxu0 0.0
    %2829 = vmatpush1.msra.mxu0 0.0
    %2830 = vmatprep.subr.mxu0 0.0
    %2831 = vmatpush1.msra.mxu0 0.0
    %2832 = vmatprep.subr.mxu0 0.0
    %2833 = vmatpush1.msra.mxu0 0.0
    %2834 = vmatprep.subr.mxu0 0.0
    %2835 = vmatpush1.msra.mxu0 0.0
    %2836 = vmatprep.subr.mxu0 0.0
    %2837 = vmatpush1.msra.mxu0 0.0
    %2838 = vmatprep.mubr.f32.mxu0 0.0
    %2839 = vmatmul.mubr.f32.gmra.mrb[0].mxu0 %v2743
    %v2840 = vpop.f32.mrb[0].mxu0
    %v2841 = vadd.f32 %v2772, %v2840
    %v2842 = vpop.f32.mrb[0].mxu0
    %2843 = vmatprep.mubr.f32.mxu0 0.0
    %2844 = vmatmul.mubr.f32.gmra.mrb[0].mxu0 %v2744
    %v2845 = vpop.f32.mrb[0].mxu0
    %v2846 = vadd.f32 %v2772, %v2845
    %v2847 = vpop.f32.mrb[0].mxu0
    %2848 = vmatprep.mubr.f32.mxu0 0.0
    %2849 = vmatmul.mubr.f32.gmra.mrb[0].mxu0 %v2745
    %v2850 = vpop.f32.mrb[0].mxu0
    %v2851 = vadd.f32 %v2772, %v2850
    %v2852 = vpop.f32.mrb[0].mxu0
    %2853 = vmatprep.mubr.f32.mxu0 0.0
    %2854 = vmatmul.mubr.f32.gmra.mrb[0].mxu0 %v2746
    %v2855 = vpop.f32.mrb[0].mxu0
    %v2856 = vadd.f32 %v2772, %v2855
    %v2857 = vpop.f32.mrb[0].mxu0
    %2858 = vmatprep.mubr.f32.mxu0 0.0
    %2859 = vmatmul.mubr.f32.gmra.mrb[0].mxu0 %v2747
    %v2860 = vpop.f32.mrb[0].mxu0
    %v2861 = vadd.f32 %v2772, %v2860
    %v2862 = vpop.f32.mrb[0].mxu0
    %2863 = vmatprep.mubr.f32.mxu0 0.0
    %2864 = vmatmul.mubr.f32.gmra.mrb[0].mxu0 %v2748
    %v2865 = vpop.f32.mrb[0].mxu0
    %v2866 = vadd.f32 %v2772, %v2865
    %v2867 = vpop.f32.mrb[0].mxu0
    %2868 = vmatprep.mubr.f32.mxu0 0.0
    %2869 = vmatmul.mubr.f32.gmra.mrb[0].mxu0 %v2749
    %v2870 = vpop.f32.mrb[0].mxu0
    %v2871 = vadd.f32 %v2772, %v2870
    %v2872 = vpop.f32.mrb[0].mxu0
    %2873 = vmatprep.mubr.f32.mxu0 0.0
    %2874 = vmatmul.mubr.f32.gmra.mrb[0].mxu0 %v2750
    %v2875 = vpop.f32.mrb[0].mxu0
    %v2876 = vadd.f32 %v2772, %v2875
    %v2877 = vpop.f32.mrb[0].mxu0
    %2878 = vdwg.mxu0
    %2879 = vst [vmem:[%s8] sm:$0xff] %v2841
    %2880 = vst [vmem:[%s8 + $0x8] sm:$0xff] %v2846
    %2881 = vst [vmem:[%s8 + $0x10] sm:$0xff] %v2851
    %2882 = vst [vmem:[%s8 + $0x18] sm:$0xff] %v2856
    %2883 = vst [vmem:[%s8 + $0x20] sm:$0xff] %v2861
    %2884 = vst [vmem:[%s8 + $0x28] sm:$0xff] %v2866
    %2885 = vst [vmem:[%s8 + $0x30] sm:$0xff] %v2871
    %2886 = vst [vmem:[%s8 + $0x38] sm:$0xff] %v2876
    // Predicated region
    $region42: #{decoder_forward.1} parent=1 // pred_check
      _
    $region43: #{decoder_forward.1} parent=1 // pred_check_branch
      %2888 = sbr.rel (0) target = $region45
    $region44: #{decoder_forward.1} parent=1 // pred_region
      _
    $region45: #{decoder_forward.1} parent=1 // pred_fallthru
      _
    // Predicated region
    $region46: #{decoder_forward.1} parent=1 // pred_check
      _
    $region47: #{decoder_forward.1} parent=1 // pred_check_branch
      %2890 = sbr.rel (0) target = $region49
    $region48: #{decoder_forward.1} parent=1 // pred_region
      _
    $region49: #{decoder_forward.1} parent=1 // pred_fallthru
      _
    // Predicated region
    $region50: #{decoder_forward.1} parent=1 // pred_check
      _
    $region51: #{decoder_forward.1} parent=1 // pred_check_branch
      %2892 = sbr.rel (0) target = $region53
    $region52: #{decoder_forward.1} parent=1 // pred_region
      _
    $region53: #{decoder_forward.1} parent=1 // pred_fallthru
      _
    // Predicated region
    $region54: #{decoder_forward.1} parent=1 // pred_check
      _
    $region55: #{decoder_forward.1} parent=1 // pred_check_branch
      %2894 = sbr.rel (0) target = $region57
    $region56: #{decoder_forward.1} parent=1 // pred_region
      _
    $region57: #{decoder_forward.1} parent=1 // pred_fallthru
      _
    // Predicated region
    $region58: #{decoder_forward.1} parent=1 // pred_check
      _
    $region59: #{decoder_forward.1} parent=1 // pred_check_branch
      %2896 = sbr.rel (0) target = $region61
    $region60: #{decoder_forward.1} parent=1 // pred_region
      _
    $region61: #{decoder_forward.1} parent=1 // pred_fallthru
      _
    // Predicated region
    $region62: #{decoder_forward.1} parent=1 // pred_check
      _
    $region63: #{decoder_forward.1} parent=1 // pred_check_branch
      %2898 = sbr.rel (0) target = $region65
    $region64: #{decoder_forward.1} parent=1 // pred_region
      _
    $region65: #{decoder_forward.1} parent=1 // pred_fallthru
      _
    %2899 = vsyncpa [#allocation5], 1
    %2900 = vsyncpa [#allocation7], 1

</llo_original>
